<compile_context>
chip_gen: v6e
topology: v6e:2x2x1
jax: 0.10.0
libtpu: 0.0.40
codegen_flags: <defaults>
</compile_context>

<pallas_src>
import math

import jax
import jax.numpy as jnp
from jax.experimental import pallas as pl
from jax.experimental.pallas import tpu as pltpu

# Layer widths of my_linear: 10 -> 20 -> 40 -> ... -> 640 -> ... -> 5 -> 1
DIMS = [10, 20, 40, 80, 160, 320, 640, 320, 160, 80, 40, 20, 10, 5, 1]
N_LAYERS = len(DIMS) - 1  # 14 linear layers


def _round_up(x, m):
    return (x + m - 1) // m * m


# Lane-padded layer widths (multiples of 128).
PDIMS = [_round_up(d, 128) for d in DIMS]

# Weights are grouped by padded output width so no layer carries 640-wide dead lanes.
COL_BUCKETS = (128, 384, 640)


def _bucket_of(i):
    n = PDIMS[i + 1]
    for c in COL_BUCKETS:
        if n <= c:
            return c
    raise AssertionError("unexpected layer width")


GROUP_LAYERS = {c: tuple(i for i in range(N_LAYERS) if _bucket_of(i) == c)
                for c in COL_BUCKETS}
GROUP_OFFS, GROUP_ROWS = {}, {}
for _c in COL_BUCKETS:
    _offs, _off = {}, 0
    for _i in GROUP_LAYERS[_c]:
        _offs[_i] = _off
        _off += PDIMS[_i]            # every PDIMS is a multiple of 128 -> tile-aligned rows
    GROUP_OFFS[_c], GROUP_ROWS[_c] = _offs, max(_off, 8)

BIAS_ROWS = _round_up(N_LAYERS, 8)                       # 16
BIAS_COLS = max(PDIMS[i + 1] for i in range(N_LAYERS))   # 640

MAX_TILE_B = 2048   # rows per grid step (per review: 2048 is safe on all of v5e/v6e/v7x)


def _vmem_limit_bytes():
    """Per-generation scoped-VMEM limit (v5e/v6e: 128 MiB physical, v7x: 64 MiB)."""
    try:
        cap = pltpu.get_tpu_info().vmem_capacity_bytes
    except Exception:  # pragma: no cover - conservative fallback
        cap = 64 * 1024 * 1024
    return 64 * 1024 * 1024 if cap >= 100 * 1024 * 1024 else 48 * 1024 * 1024


def _choose_tile_b(batch, max_tile=MAX_TILE_B):
    """Pick the batch tile: >=2 grid steps whenever possible (v7x megacore) and
    minimal ragged-batch padding (padded rows are real wasted MXU time)."""
    b8 = max(_round_up(batch, 8), 8)
    if b8 <= 8:
        return 8                                   # tiny batch: one small step
    if b8 <= 2 * max_tile:
        # Split into two (near-)equal tiles: both v7x TCs busy, ~zero pad waste.
        return _round_up((b8 + 1) // 2, 8)
    # Large batch: pick the candidate that minimizes pad waste + per-step overhead
    # (one grid step costs roughly as much MXU time as ~96 padded rows here).
    step_cost_rows = 96
    best_t, best_cost = None, None
    for t in (256, 512, 1024, 2048):
        if t > max_tile:
            continue
        b_pad = _round_up(b8, t)
        cost = (b_pad - b8) + step_cost_rows * (b_pad // t)
        if best_cost is None or cost < best_cost:
            best_t, best_cost = t, cost
    return best_t if best_t is not None else max_tile


def mlp_kernel(x_ref, w128_ref, w384_ref, w640_ref, b_ref, o_ref, xw_ref):
    """One batch tile through all 14 layers; packed params stay resident in VMEM."""
    w_refs = {128: w128_ref, 384: w384_ref, 640: w640_ref}

    # Widen the (tile_b, 10) input to the 128-lane padded width inside the kernel.
    # The pad lanes are explicitly zeroed (never rely on stale VMEM: NaN * 0 = NaN).
    xw_ref[...] = jnp.zeros_like(xw_ref)
    xw_ref[:, 0:DIMS[0]] = x_ref[...]
    h = xw_ref[...].astype(jnp.bfloat16)            # (tile_b, 128) bf16

    for i in range(N_LAYERS):
        k_in, n_out = PDIMS[i], PDIMS[i + 1]
        c = _bucket_of(i)
        r = GROUP_OFFS[c][i]
        w = w_refs[c][r:r + k_in, 0:n_out]           # bf16, tile-aligned view
        acc = jnp.dot(h, w, preferred_element_type=jnp.float32)   # MXU, f32 accumulate
        acc = acc + b_ref[i:i + 1, 0:n_out]           # f32 bias add (VPU, v5e-safe)
        if i < N_LAYERS - 1:
            # Fused ReLU + down-cast: next layer's MXU input is bf16.
            h = jnp.maximum(acc, 0.0).astype(jnp.bfloat16)
        else:
            h = acc                                   # final layer stays f32
    # TODO(synk): output stays a (tile_b, 1) masked store; a lane-dense (tile_b//128, 128)
    # re-pack was reviewed as a negligible, low-priority win.
    o_ref[...] = h[:, 0:1]


def pack_params(weights, biases):
    """Pack 14 (in, out) weights into 3 bf16 buffers (by padded out-width) + 1 f32 bias buf."""
    bufs = {}
    for c in COL_BUCKETS:
        buf = jnp.zeros((GROUP_ROWS[c], c), jnp.float32)
        for i in GROUP_LAYERS[c]:
            r = GROUP_OFFS[c][i]
            buf = buf.at[r:r + DIMS[i], :DIMS[i + 1]].set(weights[i])
        bufs[c] = buf.astype(jnp.bfloat16)            # all layers feed the MXU in bf16
    bp = jnp.zeros((BIAS_ROWS, BIAS_COLS), jnp.float32)
    for i in range(N_LAYERS):
        bp = bp.at[i, :DIMS[i + 1]].set(biases[i])
    return bufs[128], bufs[384], bufs[640], bp


def my_linear_forward(x, packed_params, *, max_tile_b=MAX_TILE_B):
    """x: (B, 10) f32 -> (B, 1) f32."""
    w128, w384, w640, bp = packed_params
    B = x.shape[0]
    assert x.shape[1] == DIMS[0]
    tile_b = _choose_tile_b(B, max_tile_b)
    b_pad = _round_up(max(B, 1), tile_b)
    # Only pad the ragged batch rows; the 10 -> 128 lane widening happens in-kernel.
    xp = x if b_pad == B else jnp.zeros((b_pad, DIMS[0]), x.dtype).at[:B].set(x)

    resident = dict(pipeline_mode=pl.Buffered(1))     # constant index_map: single-buffer
    out = pl.pallas_call(
        mlp_kernel,
        out_shape=jax.ShapeDtypeStruct((b_pad, 1), jnp.float32),
        grid_spec=pltpu.PrefetchScalarGridSpec(
            num_scalar_prefetch=0,
            grid=(b_pad // tile_b,),
            in_specs=[
                pl.BlockSpec((tile_b, DIMS[0]), lambda i: (i, 0)),   # batch-tiled x (no lane pad)
                pl.BlockSpec(w128.shape, lambda i: (0, 0), **resident),
                pl.BlockSpec(w384.shape, lambda i: (0, 0), **resident),
                pl.BlockSpec(w640.shape, lambda i: (0, 0), **resident),
                pl.BlockSpec(bp.shape, lambda i: (0, 0), **resident),
            ],
            out_specs=pl.BlockSpec((tile_b, 1), lambda i: (i, 0)),
            scratch_shapes=[pltpu.VMEM((tile_b, PDIMS[0]), jnp.float32)],  # widened-x slab
        ),
        compiler_params=pltpu.CompilerParams(
            dimension_semantics=("parallel",),        # shard batch tiles across v7x's 2 TCs
            vmem_limit_bytes=_vmem_limit_bytes(),
        ),
    )(xp, w128, w384, w640, bp)
    return out[:B]


def init_params(key):
    """Deterministic init mimicking torch.nn.Linear defaults U(-1/sqrt(fan_in), +)."""
    weights, biases = [], []
    for i in range(N_LAYERS):
        key, kw, kb = jax.random.split(key, 3)
        bound = 1.0 / math.sqrt(DIMS[i])
        w = jax.random.uniform(kw, (DIMS[i], DIMS[i + 1]),
                               minval=-bound, maxval=bound, dtype=jnp.float32)
        b = jax.random.uniform(kb, (DIMS[i + 1],),
                               minval=-bound, maxval=bound, dtype=jnp.float32)
        weights.append(w)
        biases.append(b)
    return weights, biases


def reference_forward_f32(x, weights, biases):
    """Pure-JAX f32 reference of the PyTorch forward."""
    h = x
    for i in range(N_LAYERS):
        h = jnp.dot(h, weights[i], precision=jax.lax.Precision.HIGHEST,
                    preferred_element_type=jnp.float32) + biases[i]
        if i < N_LAYERS - 1:
            h = jnp.maximum(h, 0.0)
    return h


def reference_forward_matched(x, weights, biases):
    """Pure-JAX reference with the kernel's bf16-inputs / f32-accumulate policy."""
    h = x.astype(jnp.bfloat16)
    for i in range(N_LAYERS):
        acc = jnp.dot(h, weights[i].astype(jnp.bfloat16),
                      preferred_element_type=jnp.float32) + biases[i]
        if i < N_LAYERS - 1:
            h = jnp.maximum(acc, 0.0).astype(jnp.bfloat16)
        else:
            h = acc
    return h


if __name__ == "__main__":
    key = jax.random.PRNGKey(0)
    key, kx = jax.random.split(key)

    weights, biases = init_params(key)
    packed = pack_params(weights, biases)

    # Small-batch smoke test (single grid step).
    batch = 4
    x = jax.random.normal(kx, (batch, DIMS[0]), dtype=jnp.float32)
    out = jax.block_until_ready(my_linear_forward(x, packed))
    assert out.shape == (batch, 1)

    ref_m = reference_forward_matched(x, weights, biases)
    ref_f = reference_forward_f32(x, weights, biases)
    assert jnp.allclose(out, ref_m, atol=2e-3, rtol=2e-2), \
        "mismatch vs precision-matched reference"
    # bf16 MXU inputs drift slightly from pure-f32 torch numbers; loose sanity bound only.
    scale = float(jnp.maximum(jnp.max(jnp.abs(ref_f)), 1.0))
    assert float(jnp.max(jnp.abs(out - ref_f))) <= 0.15 * scale, "mismatch vs f32 reference"

    # Ragged batch exercising a multi-step grid (2 steps of 72 rows).
    key, kx2 = jax.random.split(key)
    x2 = jax.random.normal(kx2, (137, DIMS[0]), dtype=jnp.float32)
    out2 = jax.block_until_ready(my_linear_forward(x2, packed))
    ref2 = reference_forward_matched(x2, weights, biases)
    assert out2.shape == (137, 1)
    assert jnp.allclose(out2, ref2, atol=2e-3, rtol=2e-2)

    print("KERNEL_OK")
</pallas_src>

<mosaic_0001>
module attributes {stable_mosaic.version = 11 : i64} {
  func.func @mlp_kernel(%arg0: i32, %arg1: memref<8x10xf32, #tpu.memory_space<vmem>>, %arg2: memref<1280x128xbf16, #tpu.memory_space<vmem>>, %arg3: memref<1408x384xbf16, #tpu.memory_space<vmem>>, %arg4: memref<384x640xbf16, #tpu.memory_space<vmem>>, %arg5: memref<16x640xf32, #tpu.memory_space<vmem>>, %arg6: memref<8x1xf32, #tpu.memory_space<vmem>>, %arg7: memref<8x128xf32, #tpu.memory_space<vmem>>) attributes {dimension_semantics = [#tpu.dimension_semantics<parallel>], iteration_bounds = array<i64: 1>, scalar_prefetch = 0 : i64, scratch_operands = 1 : i64, tpu.core_type = #tpu.core_type<tc>, window_params = [{transform_indices = @transform_0, window_bounds = array<i64: 8, 10>}, {pipeline_mode = #tpu.pipeline_mode<synchronous>, transform_indices = @transform_1, window_bounds = array<i64: 1280, 128>}, {pipeline_mode = #tpu.pipeline_mode<synchronous>, transform_indices = @transform_2, window_bounds = array<i64: 1408, 384>}, {pipeline_mode = #tpu.pipeline_mode<synchronous>, transform_indices = @transform_3, window_bounds = array<i64: 384, 640>}, {pipeline_mode = #tpu.pipeline_mode<synchronous>, transform_indices = @transform_4, window_bounds = array<i64: 16, 640>}, {transform_indices = @transform_5, window_bounds = array<i64: 8, 1>}]} {
    %cst = arith.constant 0.000000e+00 : f32
    %0 = vector.broadcast %cst : f32 to vector<8x128xf32>
    %c0 = arith.constant 0 : index
    %c0_0 = arith.constant 0 : index
    %1 = vector.load %arg7[%c0, %c0_0] : memref<8x128xf32, #tpu.memory_space<vmem>>, vector<8x128xf32>
    tpu.vector_store %arg7[%c0, %c0_0], %0 {strides = array<i32>} : memref<8x128xf32, #tpu.memory_space<vmem>>, vector<8x128xf32>,
    %c0_1 = arith.constant 0 : index
    %c0_2 = arith.constant 0 : index
    %2 = vector.load %arg1[%c0_1, %c0_2] : memref<8x10xf32, #tpu.memory_space<vmem>>, vector<8x10xf32>
    %c0_3 = arith.constant 0 : index
    %c0_4 = arith.constant 0 : index
    %3 = vector.load %arg7[%c0_3, %c0_4] : memref<8x128xf32, #tpu.memory_space<vmem>>, vector<8x10xf32>
    tpu.vector_store %arg7[%c0_3, %c0_4], %2 {strides = array<i32>} : memref<8x128xf32, #tpu.memory_space<vmem>>, vector<8x10xf32>,
    %c0_5 = arith.constant 0 : index
    %c0_6 = arith.constant 0 : index
    %4 = vector.load %arg7[%c0_5, %c0_6] : memref<8x128xf32, #tpu.memory_space<vmem>>, vector<8x128xf32>
    %5 = arith.truncf %4 : vector<8x128xf32> to vector<8x128xbf16>
    %c0_7 = arith.constant 0 : index
    %c0_8 = arith.constant 0 : index
    %6 = vector.load %arg2[%c0_7, %c0_8] : memref<1280x128xbf16, #tpu.memory_space<vmem>>, vector<128x128xbf16>
    %cst_9 = arith.constant dense<0.000000e+00> : vector<8x128xf32>
    %7 = tpu.matmul %5, %6, %cst_9 {dimension_numbers = #tpu.dot_dimension_numbers<[1], [0], [0], [1], [0, 0, 1, 1], [], []>} : vector<8x128xbf16>, vector<128x128xbf16>, vector<8x128xf32> -> vector<8x128xf32>
    %c0_10 = arith.constant 0 : index
    %c0_11 = arith.constant 0 : index
    %8 = vector.load %arg5[%c0_10, %c0_11] : memref<16x640xf32, #tpu.memory_space<vmem>>, vector<1x128xf32>
    %9 = vector.broadcast %8 : vector<1x128xf32> to vector<8x128xf32>
    %10 = arith.addf %7, %9 : vector<8x128xf32>
    %cst_12 = arith.constant 0.000000e+00 : f32
    %11 = vector.broadcast %cst_12 : f32 to vector<8x128xf32>
    %12 = arith.maximumf %10, %11 : vector<8x128xf32>
    %13 = arith.truncf %12 : vector<8x128xf32> to vector<8x128xbf16>
    %c128 = arith.constant 128 : index
    %c0_13 = arith.constant 0 : index
    %14 = vector.load %arg2[%c128, %c0_13] : memref<1280x128xbf16, #tpu.memory_space<vmem>>, vector<128x128xbf16>
    %cst_14 = arith.constant dense<0.000000e+00> : vector<8x128xf32>
    %15 = tpu.matmul %13, %14, %cst_14 {dimension_numbers = #tpu.dot_dimension_numbers<[1], [0], [0], [1], [0, 0, 1, 1], [], []>} : vector<8x128xbf16>, vector<128x128xbf16>, vector<8x128xf32> -> vector<8x128xf32>
    %c1 = arith.constant 1 : index
    %c0_15 = arith.constant 0 : index
    %16 = vector.load %arg5[%c1, %c0_15] : memref<16x640xf32, #tpu.memory_space<vmem>>, vector<1x128xf32>
    %17 = vector.broadcast %16 : vector<1x128xf32> to vector<8x128xf32>
    %18 = arith.addf %15, %17 : vector<8x128xf32>
    %cst_16 = arith.constant 0.000000e+00 : f32
    %19 = vector.broadcast %cst_16 : f32 to vector<8x128xf32>
    %20 = arith.maximumf %18, %19 : vector<8x128xf32>
    %21 = arith.truncf %20 : vector<8x128xf32> to vector<8x128xbf16>
    %c256 = arith.constant 256 : index
    %c0_17 = arith.constant 0 : index
    %22 = vector.load %arg2[%c256, %c0_17] : memref<1280x128xbf16, #tpu.memory_space<vmem>>, vector<128x128xbf16>
    %cst_18 = arith.constant dense<0.000000e+00> : vector<8x128xf32>
    %23 = tpu.matmul %21, %22, %cst_18 {dimension_numbers = #tpu.dot_dimension_numbers<[1], [0], [0], [1], [0, 0, 1, 1], [], []>} : vector<8x128xbf16>, vector<128x128xbf16>, vector<8x128xf32> -> vector<8x128xf32>
    %c2 = arith.constant 2 : index
    %c0_19 = arith.constant 0 : index
    %24 = vector.load %arg5[%c2, %c0_19] : memref<16x640xf32, #tpu.memory_space<vmem>>, vector<1x128xf32>
    %25 = vector.broadcast %24 : vector<1x128xf32> to vector<8x128xf32>
    %26 = arith.addf %23, %25 : vector<8x128xf32>
    %cst_20 = arith.constant 0.000000e+00 : f32
    %27 = vector.broadcast %cst_20 : f32 to vector<8x128xf32>
    %28 = arith.maximumf %26, %27 : vector<8x128xf32>
    %29 = arith.truncf %28 : vector<8x128xf32> to vector<8x128xbf16>
    %c0_21 = arith.constant 0 : index
    %c0_22 = arith.constant 0 : index
    %30 = vector.load %arg3[%c0_21, %c0_22] : memref<1408x384xbf16, #tpu.memory_space<vmem>>, vector<128x256xbf16>
    %cst_23 = arith.constant dense<0.000000e+00> : vector<8x256xf32>
    %31 = tpu.matmul %29, %30, %cst_23 {dimension_numbers = #tpu.dot_dimension_numbers<[1], [0], [0], [1], [0, 0, 1, 1], [], []>} : vector<8x128xbf16>, vector<128x256xbf16>, vector<8x256xf32> -> vector<8x256xf32>
    %c3 = arith.constant 3 : index
    %c0_24 = arith.constant 0 : index
    %32 = vector.load %arg5[%c3, %c0_24] : memref<16x640xf32, #tpu.memory_space<vmem>>, vector<1x256xf32>
    %33 = vector.broadcast %32 : vector<1x256xf32> to vector<8x256xf32>
    %34 = arith.addf %31, %33 : vector<8x256xf32>
    %cst_25 = arith.constant 0.000000e+00 : f32
    %35 = vector.broadcast %cst_25 : f32 to vector<8x256xf32>
    %36 = arith.maximumf %34, %35 : vector<8x256xf32>
    %37 = arith.truncf %36 : vector<8x256xf32> to vector<8x256xbf16>
    %c128_26 = arith.constant 128 : index
    %c0_27 = arith.constant 0 : index
    %38 = vector.load %arg3[%c128_26, %c0_27] : memref<1408x384xbf16, #tpu.memory_space<vmem>>, vector<256x384xbf16>
    %cst_28 = arith.constant dense<0.000000e+00> : vector<8x384xf32>
    %39 = tpu.matmul %37, %38, %cst_28 {dimension_numbers = #tpu.dot_dimension_numbers<[1], [0], [0], [1], [0, 0, 1, 1], [], []>} : vector<8x256xbf16>, vector<256x384xbf16>, vector<8x384xf32> -> vector<8x384xf32>
    %c4 = arith.constant 4 : index
    %c0_29 = arith.constant 0 : index
    %40 = vector.load %arg5[%c4, %c0_29] : memref<16x640xf32, #tpu.memory_space<vmem>>, vector<1x384xf32>
    %41 = vector.broadcast %40 : vector<1x384xf32> to vector<8x384xf32>
    %42 = arith.addf %39, %41 : vector<8x384xf32>
    %cst_30 = arith.constant 0.000000e+00 : f32
    %43 = vector.broadcast %cst_30 : f32 to vector<8x384xf32>
    %44 = arith.maximumf %42, %43 : vector<8x384xf32>
    %45 = arith.truncf %44 : vector<8x384xf32> to vector<8x384xbf16>
    %c0_31 = arith.constant 0 : index
    %c0_32 = arith.constant 0 : index
    %46 = vector.load %arg4[%c0_31, %c0_32] : memref<384x640xbf16, #tpu.memory_space<vmem>>, vector<384x640xbf16>
    %cst_33 = arith.constant dense<0.000000e+00> : vector<8x640xf32>
    %47 = tpu.matmul %45, %46, %cst_33 {dimension_numbers = #tpu.dot_dimension_numbers<[1], [0], [0], [1], [0, 0, 1, 1], [], []>} : vector<8x384xbf16>, vector<384x640xbf16>, vector<8x640xf32> -> vector<8x640xf32>
    %c5 = arith.constant 5 : index
    %c0_34 = arith.constant 0 : index
    %48 = vector.load %arg5[%c5, %c0_34] : memref<16x640xf32, #tpu.memory_space<vmem>>, vector<1x640xf32>
    %49 = vector.broadcast %48 : vector<1x640xf32> to vector<8x640xf32>
    %50 = arith.addf %47, %49 : vector<8x640xf32>
    %cst_35 = arith.constant 0.000000e+00 : f32
    %51 = vector.broadcast %cst_35 : f32 to vector<8x640xf32>
    %52 = arith.maximumf %50, %51 : vector<8x640xf32>
    %53 = arith.truncf %52 : vector<8x640xf32> to vector<8x640xbf16>
    %c384 = arith.constant 384 : index
    %c0_36 = arith.constant 0 : index
    %54 = vector.load %arg3[%c384, %c0_36] : memref<1408x384xbf16, #tpu.memory_space<vmem>>, vector<640x384xbf16>
    %cst_37 = arith.constant dense<0.000000e+00> : vector<8x384xf32>
    %55 = tpu.matmul %53, %54, %cst_37 {dimension_numbers = #tpu.dot_dimension_numbers<[1], [0], [0], [1], [0, 0, 1, 1], [], []>} : vector<8x640xbf16>, vector<640x384xbf16>, vector<8x384xf32> -> vector<8x384xf32>
    %c6 = arith.constant 6 : index
    %c0_38 = arith.constant 0 : index
    %56 = vector.load %arg5[%c6, %c0_38] : memref<16x640xf32, #tpu.memory_space<vmem>>, vector<1x384xf32>
    %57 = vector.broadcast %56 : vector<1x384xf32> to vector<8x384xf32>
    %58 = arith.addf %55, %57 : vector<8x384xf32>
    %cst_39 = arith.constant 0.000000e+00 : f32
    %59 = vector.broadcast %cst_39 : f32 to vector<8x384xf32>
    %60 = arith.maximumf %58, %59 : vector<8x384xf32>
    %61 = arith.truncf %60 : vector<8x384xf32> to vector<8x384xbf16>
    %c1024 = arith.constant 1024 : index
    %c0_40 = arith.constant 0 : index
    %62 = vector.load %arg3[%c1024, %c0_40] : memref<1408x384xbf16, #tpu.memory_space<vmem>>, vector<384x256xbf16>
    %cst_41 = arith.constant dense<0.000000e+00> : vector<8x256xf32>
    %63 = tpu.matmul %61, %62, %cst_41 {dimension_numbers = #tpu.dot_dimension_numbers<[1], [0], [0], [1], [0, 0, 1, 1], [], []>} : vector<8x384xbf16>, vector<384x256xbf16>, vector<8x256xf32> -> vector<8x256xf32>
    %c7 = arith.constant 7 : index
    %c0_42 = arith.constant 0 : index
    %64 = vector.load %arg5[%c7, %c0_42] : memref<16x640xf32, #tpu.memory_space<vmem>>, vector<1x256xf32>
    %65 = vector.broadcast %64 : vector<1x256xf32> to vector<8x256xf32>
    %66 = arith.addf %63, %65 : vector<8x256xf32>
    %cst_43 = arith.constant 0.000000e+00 : f32
    %67 = vector.broadcast %cst_43 : f32 to vector<8x256xf32>
    %68 = arith.maximumf %66, %67 : vector<8x256xf32>
    %69 = arith.truncf %68 : vector<8x256xf32> to vector<8x256xbf16>
    %c384_44 = arith.constant 384 : index
    %c0_45 = arith.constant 0 : index
    %70 = vector.load %arg2[%c384_44, %c0_45] : memref<1280x128xbf16, #tpu.memory_space<vmem>>, vector<256x128xbf16>
    %cst_46 = arith.constant dense<0.000000e+00> : vector<8x128xf32>
    %71 = tpu.matmul %69, %70, %cst_46 {dimension_numbers = #tpu.dot_dimension_numbers<[1], [0], [0], [1], [0, 0, 1, 1], [], []>} : vector<8x256xbf16>, vector<256x128xbf16>, vector<8x128xf32> -> vector<8x128xf32>
    %c8 = arith.constant 8 : index
    %c0_47 = arith.constant 0 : index
    %72 = vector.load %arg5[%c8, %c0_47] : memref<16x640xf32, #tpu.memory_space<vmem>>, vector<1x128xf32>
    %73 = vector.broadcast %72 : vector<1x128xf32> to vector<8x128xf32>
    %74 = arith.addf %71, %73 : vector<8x128xf32>
    %cst_48 = arith.constant 0.000000e+00 : f32
    %75 = vector.broadcast %cst_48 : f32 to vector<8x128xf32>
    %76 = arith.maximumf %74, %75 : vector<8x128xf32>
    %77 = arith.truncf %76 : vector<8x128xf32> to vector<8x128xbf16>
    %c640 = arith.constant 640 : index
    %c0_49 = arith.constant 0 : index
    %78 = vector.load %arg2[%c640, %c0_49] : memref<1280x128xbf16, #tpu.memory_space<vmem>>, vector<128x128xbf16>
    %cst_50 = arith.constant dense<0.000000e+00> : vector<8x128xf32>
    %79 = tpu.matmul %77, %78, %cst_50 {dimension_numbers = #tpu.dot_dimension_numbers<[1], [0], [0], [1], [0, 0, 1, 1], [], []>} : vector<8x128xbf16>, vector<128x128xbf16>, vector<8x128xf32> -> vector<8x128xf32>
    %c9 = arith.constant 9 : index
    %c0_51 = arith.constant 0 : index
    %80 = vector.load %arg5[%c9, %c0_51] : memref<16x640xf32, #tpu.memory_space<vmem>>, vector<1x128xf32>
    %81 = vector.broadcast %80 : vector<1x128xf32> to vector<8x128xf32>
    %82 = arith.addf %79, %81 : vector<8x128xf32>
    %cst_52 = arith.constant 0.000000e+00 : f32
    %83 = vector.broadcast %cst_52 : f32 to vector<8x128xf32>
    %84 = arith.maximumf %82, %83 : vector<8x128xf32>
    %85 = arith.truncf %84 : vector<8x128xf32> to vector<8x128xbf16>
    %c768 = arith.constant 768 : index
    %c0_53 = arith.constant 0 : index
    %86 = vector.load %arg2[%c768, %c0_53] : memref<1280x128xbf16, #tpu.memory_space<vmem>>, vector<128x128xbf16>
    %cst_54 = arith.constant dense<0.000000e+00> : vector<8x128xf32>
    %87 = tpu.matmul %85, %86, %cst_54 {dimension_numbers = #tpu.dot_dimension_numbers<[1], [0], [0], [1], [0, 0, 1, 1], [], []>} : vector<8x128xbf16>, vector<128x128xbf16>, vector<8x128xf32> -> vector<8x128xf32>
    %c10 = arith.constant 10 : index
    %c0_55 = arith.constant 0 : index
    %88 = vector.load %arg5[%c10, %c0_55] : memref<16x640xf32, #tpu.memory_space<vmem>>, vector<1x128xf32>
    %89 = vector.broadcast %88 : vector<1x128xf32> to vector<8x128xf32>
    %90 = arith.addf %87, %89 : vector<8x128xf32>
    %cst_56 = arith.constant 0.000000e+00 : f32
    %91 = vector.broadcast %cst_56 : f32 to vector<8x128xf32>
    %92 = arith.maximumf %90, %91 : vector<8x128xf32>
    %93 = arith.truncf %92 : vector<8x128xf32> to vector<8x128xbf16>
    %c896 = arith.constant 896 : index
    %c0_57 = arith.constant 0 : index
    %94 = vector.load %arg2[%c896, %c0_57] : memref<1280x128xbf16, #tpu.memory_space<vmem>>, vector<128x128xbf16>
    %cst_58 = arith.constant dense<0.000000e+00> : vector<8x128xf32>
    %95 = tpu.matmul %93, %94, %cst_58 {dimension_numbers = #tpu.dot_dimension_numbers<[1], [0], [0], [1], [0, 0, 1, 1], [], []>} : vector<8x128xbf16>, vector<128x128xbf16>, vector<8x128xf32> -> vector<8x128xf32>
    %c11 = arith.constant 11 : index
    %c0_59 = arith.constant 0 : index
    %96 = vector.load %arg5[%c11, %c0_59] : memref<16x640xf32, #tpu.memory_space<vmem>>, vector<1x128xf32>
    %97 = vector.broadcast %96 : vector<1x128xf32> to vector<8x128xf32>
    %98 = arith.addf %95, %97 : vector<8x128xf32>
    %cst_60 = arith.constant 0.000000e+00 : f32
    %99 = vector.broadcast %cst_60 : f32 to vector<8x128xf32>
    %100 = arith.maximumf %98, %99 : vector<8x128xf32>
    %101 = arith.truncf %100 : vector<8x128xf32> to vector<8x128xbf16>
    %c1024_61 = arith.constant 1024 : index
    %c0_62 = arith.constant 0 : index
    %102 = vector.load %arg2[%c1024_61, %c0_62] : memref<1280x128xbf16, #tpu.memory_space<vmem>>, vector<128x128xbf16>
    %cst_63 = arith.constant dense<0.000000e+00> : vector<8x128xf32>
    %103 = tpu.matmul %101, %102, %cst_63 {dimension_numbers = #tpu.dot_dimension_numbers<[1], [0], [0], [1], [0, 0, 1, 1], [], []>} : vector<8x128xbf16>, vector<128x128xbf16>, vector<8x128xf32> -> vector<8x128xf32>
    %c12 = arith.constant 12 : index
    %c0_64 = arith.constant 0 : index
    %104 = vector.load %arg5[%c12, %c0_64] : memref<16x640xf32, #tpu.memory_space<vmem>>, vector<1x128xf32>
    %105 = vector.broadcast %104 : vector<1x128xf32> to vector<8x128xf32>
    %106 = arith.addf %103, %105 : vector<8x128xf32>
    %cst_65 = arith.constant 0.000000e+00 : f32
    %107 = vector.broadcast %cst_65 : f32 to vector<8x128xf32>
    %108 = arith.maximumf %106, %107 : vector<8x128xf32>
    %109 = arith.truncf %108 : vector<8x128xf32> to vector<8x128xbf16>
    %c1152 = arith.constant 1152 : index
    %c0_66 = arith.constant 0 : index
    %110 = vector.load %arg2[%c1152, %c0_66] : memref<1280x128xbf16, #tpu.memory_space<vmem>>, vector<128x128xbf16>
    %cst_67 = arith.constant dense<0.000000e+00> : vector<8x128xf32>
    %111 = tpu.matmul %109, %110, %cst_67 {dimension_numbers = #tpu.dot_dimension_numbers<[1], [0], [0], [1], [0, 0, 1, 1], [], []>} : vector<8x128xbf16>, vector<128x128xbf16>, vector<8x128xf32> -> vector<8x128xf32>
    %c13 = arith.constant 13 : index
    %c0_68 = arith.constant 0 : index
    %112 = vector.load %arg5[%c13, %c0_68] : memref<16x640xf32, #tpu.memory_space<vmem>>, vector<1x128xf32>
    %113 = vector.broadcast %112 : vector<1x128xf32> to vector<8x128xf32>
    %114 = arith.addf %111, %113 : vector<8x128xf32>
    %115 = vector.extract_strided_slice %114 {offsets = [0, 0], sizes = [8, 1], strides = [1, 1]} : vector<8x128xf32> to vector<8x1xf32>
    %c0_69 = arith.constant 0 : index
    %c0_70 = arith.constant 0 : index
    %116 = vector.load %arg6[%c0_69, %c0_70] : memref<8x1xf32, #tpu.memory_space<vmem>>, vector<8x1xf32>
    tpu.vector_store %arg6[%c0_69, %c0_70], %115 {strides = array<i32>} : memref<8x1xf32, #tpu.memory_space<vmem>>, vector<8x1xf32>,
    return
  }
  func.func @transform_0(%arg0: i32) -> (i32, i32) {
    %c0_i32 = arith.constant 0 : i32
    %c0_i32_0 = arith.constant 0 : i32
    return %arg0, %c0_i32 : i32, i32
  }
  func.func @transform_1(%arg0: i32) -> (i32, i32) {
    %c0_i32 = arith.constant 0 : i32
    %c0_i32_0 = arith.constant 0 : i32
    %c0_i32_1 = arith.constant 0 : i32
    return %c0_i32, %c0_i32_0 : i32, i32
  }
  func.func @transform_2(%arg0: i32) -> (i32, i32) {
    %c0_i32 = arith.constant 0 : i32
    %c0_i32_0 = arith.constant 0 : i32
    %c0_i32_1 = arith.constant 0 : i32
    return %c0_i32, %c0_i32_0 : i32, i32
  }
  func.func @transform_3(%arg0: i32) -> (i32, i32) {
    %c0_i32 = arith.constant 0 : i32
    %c0_i32_0 = arith.constant 0 : i32
    %c0_i32_1 = arith.constant 0 : i32
    return %c0_i32, %c0_i32_0 : i32, i32
  }
  func.func @transform_4(%arg0: i32) -> (i32, i32) {
    %c0_i32 = arith.constant 0 : i32
    %c0_i32_0 = arith.constant 0 : i32
    %c0_i32_1 = arith.constant 0 : i32
    return %c0_i32, %c0_i32_0 : i32, i32
  }
  func.func @transform_5(%arg0: i32) -> (i32, i32) {
    %c0_i32 = arith.constant 0 : i32
    %c0_i32_0 = arith.constant 0 : i32
    return %arg0, %c0_i32 : i32, i32
  }
}

</mosaic_0001>

<llo_original>
// kernel: tpu_custom_call.1
$region0: #{tpu_custom_call.1}
  #allocation0 [shape = 'u32[]', space=smem, size = 0x4, offset = 0x4, fixed_abs, tag = 'smem constant byte address 0x4 - core index']
  #allocation1 [shape = 'u32[144,128]{1,0:T(1,128)}', space=vmem, size = 0x12000, scoped, tag = 'internal scratch']
  #allocation2 [shape = 'f32[8,128]{1,0:T(8,128)}', space=vmem, size = 0x1000, scoped, tag = 'scratch operand']
  %s0 = inlined_call_operand.hbm [shape: f32[8,10], index: 0, kind: input, shape index: {}]
  %s1 = inlined_call_operand.hbm [shape: bf16[1280,128], index: 1, kind: input, shape index: {}]
  %s2 = inlined_call_operand.hbm [shape: bf16[1408,384], index: 2, kind: input, shape index: {}]
  %s3 = inlined_call_operand.hbm [shape: bf16[384,640], index: 3, kind: input, shape index: {}]
  %s4 = inlined_call_operand.hbm [shape: f32[16,640], index: 4, kind: input, shape index: {}]
  %s5 = inlined_call_operand.vmem [shape: f32[8,1], index: 5, kind: output, shape index: {}]
  %s6 = sld [smem:[#allocation0]]
  $region50: #{tpu_custom_call.1} parent=0
    _
  %s8 = ssub.s32 1, %s6
  %s9 = scalar_select 0, %s8, %s6
  $region1: #{tpu_custom_call.1} parent=0
    #allocation3 [shape = 'u8[4096]{0}', space=vmem, size = 0x1000, scoped, tag = 'input window, operand 0, single buffered']
    #allocation4 [shape = 's32[1]{0}', space=sflag, size = 0x4, scoped, tag = 'scoped memory for tpu_custom_call.1']
    #allocation5 [shape = 'u8[327680]{0}', space=vmem, size = 0x50000, scoped, tag = 'input window, operand 1, single buffered']
    #allocation6 [shape = 's32[1]{0}', space=sflag, size = 0x4, scoped, tag = 'scoped memory for tpu_custom_call.1']
    #allocation7 [shape = 'u8[1081344]{0}', space=vmem, size = 0x108000, scoped, tag = 'input window, operand 2, single buffered']
    #allocation8 [shape = 'u8[491520]{0}', space=vmem, size = 0x78000, scoped, tag = 'input window, operand 3, single buffered']
    #allocation9 [shape = 's32[1]{0}', space=sflag, size = 0x4, scoped, tag = 'scoped memory for tpu_custom_call.1']
    #allocation10 [shape = 'u8[40960]{0}', space=vmem, size = 0xa000, scoped, tag = 'input window, operand 4, single buffered']
    %10 = vsyncpa [#allocation4], 0
    %11 = vsyncpa [#allocation6], 0
    %12 = vsyncpa [#allocation9], 0
    // Predicated region
    $region2: #{tpu_custom_call.1} parent=1 // pred_check
      _
    $region3: #{tpu_custom_call.1} parent=1 // pred_check_branch
      %14 = sbr.rel (0) target = $region5
    $region4: #{tpu_custom_call.1} parent=1 // pred_region
      %s16 = ssub.s32 128, 128
      %17 = vsyncadd [#allocation4], %s16
      %s19 = sshll.u32 [#allocation3], 4
      %s20 = int_to_ptr.vmem [resolvable:$true] %s19
      %22 = dma.hbm_to_vmem [thread:$0]  %s0, 128, %s20, [#allocation4]
    $region5: #{tpu_custom_call.1} parent=1 // pred_fallthru
      _
    // Predicated region
    $region6: #{tpu_custom_call.1} parent=1 // pred_check
      _
    $region7: #{tpu_custom_call.1} parent=1 // pred_check_branch
      %24 = sbr.rel (0) target = $region9
    $region8: #{tpu_custom_call.1} parent=1 // pred_region
      %s26 = ssub.s32 10240, 10240
      %27 = vsyncadd [#allocation6], %s26
      %s28 = sshll.u32 [#allocation5], 4
      %s29 = int_to_ptr.vmem [resolvable:$true] %s28
      %34 = dma.hbm_to_vmem [thread:$0]  %s1, 10240, %s29, [#allocation6], 64, 64, 4
    $region9: #{tpu_custom_call.1} parent=1 // pred_fallthru
      _
    // Predicated region
    $region10: #{tpu_custom_call.1} parent=1 // pred_check
      _
    $region11: #{tpu_custom_call.1} parent=1 // pred_check_branch
      %36 = sbr.rel (0) target = $region13
    $region12: #{tpu_custom_call.1} parent=1 // pred_region
      %s38 = ssub.s32 33792, 33792
      %39 = vsyncadd [#allocation6], %s38
      %s40 = sshll.u32 [#allocation7], 4
      %s41 = int_to_ptr.vmem [resolvable:$true] %s40
      %46 = dma.hbm_to_vmem [thread:$0]  %s2, 33792, %s41, [#allocation6], 192, 192, 12
    $region13: #{tpu_custom_call.1} parent=1 // pred_fallthru
      _
    // Predicated region
    $region14: #{tpu_custom_call.1} parent=1 // pred_check
      _
    $region15: #{tpu_custom_call.1} parent=1 // pred_check_branch
      %48 = sbr.rel (0) target = $region17
    $region16: #{tpu_custom_call.1} parent=1 // pred_region
      %s50 = ssub.s32 15360, 15360
      %51 = vsyncadd [#allocation9], %s50
      %s52 = sshll.u32 [#allocation8], 4
      %s53 = int_to_ptr.vmem [resolvable:$true] %s52
      %58 = dma.hbm_to_vmem [thread:$0]  %s3, 15360, %s53, [#allocation9], 320, 320, 20
    $region17: #{tpu_custom_call.1} parent=1 // pred_fallthru
      _
    // Predicated region
    $region18: #{tpu_custom_call.1} parent=1 // pred_check
      _
    $region19: #{tpu_custom_call.1} parent=1 // pred_check_branch
      %60 = sbr.rel (0) target = $region21
    $region20: #{tpu_custom_call.1} parent=1 // pred_region
      %s62 = ssub.s32 1280, 1280
      %63 = vsyncadd [#allocation9], %s62
      %s64 = sshll.u32 [#allocation10], 4
      %s65 = int_to_ptr.vmem [resolvable:$true] %s64
      %70 = dma.hbm_to_vmem [thread:$0]  %s4, 1280, %s65, [#allocation9], 640, 640, 40
    $region21: #{tpu_custom_call.1} parent=1 // pred_fallthru
      _
    // Predicated region
    $region22: #{tpu_custom_call.1} parent=1 // pred_check
      _
    $region23: #{tpu_custom_call.1} parent=1 // pred_check_branch
      %72 = sbr.rel (0) target = $region25
    $region24: #{tpu_custom_call.1} parent=1 // pred_region
      %73 = dma.done [#allocation4], 128
    $region25: #{tpu_custom_call.1} parent=1 // pred_fallthru
      _
    // Predicated region
    $region26: #{tpu_custom_call.1} parent=1 // pred_check
      _
    $region27: #{tpu_custom_call.1} parent=1 // pred_check_branch
      %75 = sbr.rel (0) target = $region29
    $region28: #{tpu_custom_call.1} parent=1 // pred_region
      %76 = dma.done [#allocation6], 10240
    $region29: #{tpu_custom_call.1} parent=1 // pred_fallthru
      _
    // Predicated region
    $region30: #{tpu_custom_call.1} parent=1 // pred_check
      _
    $region31: #{tpu_custom_call.1} parent=1 // pred_check_branch
      %78 = sbr.rel (0) target = $region33
    $region32: #{tpu_custom_call.1} parent=1 // pred_region
      %79 = dma.done [#allocation6], 33792
    $region33: #{tpu_custom_call.1} parent=1 // pred_fallthru
      _
    // Predicated region
    $region34: #{tpu_custom_call.1} parent=1 // pred_check
      _
    $region35: #{tpu_custom_call.1} parent=1 // pred_check_branch
      %81 = sbr.rel (0) target = $region37
    $region36: #{tpu_custom_call.1} parent=1 // pred_region
      %82 = dma.done [#allocation9], 15360
    $region37: #{tpu_custom_call.1} parent=1 // pred_fallthru
      _
    // Predicated region
    $region38: #{tpu_custom_call.1} parent=1 // pred_check
      _
    $region39: #{tpu_custom_call.1} parent=1 // pred_check_branch
      %84 = sbr.rel (0) target = $region41
    $region40: #{tpu_custom_call.1} parent=1 // pred_region
      %85 = dma.done [#allocation9], 1280
    $region41: #{tpu_custom_call.1} parent=1 // pred_fallthru
      _
    %87 = vst [vmem:[#allocation2] sm:$0xff] 0.0
    %v88 = vld [vmem:[#allocation3] sm:$0xff]
    %vm89 = vcmask 80896
    %90 = vst.msk [vmem:[#allocation2] sm:$0xff] %vm89, %v88
    %v91 = vld [vmem:[#allocation2] sm:$0xff]
    %v92 = vpack.c.bf16 %v91, %v91
    %v93 = vld [vmem:[#allocation5] sm:$0xf]
    %v94 = vld [vmem:[#allocation5 + $0x4] sm:$0xf]
    %v95 = vld [vmem:[#allocation5 + $0x8] sm:$0xf]
    %v96 = vld [vmem:[#allocation5 + $0xc] sm:$0xf]
    %v97 = vld [vmem:[#allocation5 + $0x10] sm:$0xf]
    %v98 = vld [vmem:[#allocation5 + $0x14] sm:$0xf]
    %v99 = vld [vmem:[#allocation5 + $0x18] sm:$0xf]
    %v100 = vld [vmem:[#allocation5 + $0x1c] sm:$0xf]
    %v101 = vld [vmem:[#allocation5 + $0x20] sm:$0xf]
    %v102 = vld [vmem:[#allocation5 + $0x24] sm:$0xf]
    %v103 = vld [vmem:[#allocation5 + $0x28] sm:$0xf]
    %v104 = vld [vmem:[#allocation5 + $0x2c] sm:$0xf]
    %v105 = vld [vmem:[#allocation5 + $0x30] sm:$0xf]
    %v106 = vld [vmem:[#allocation5 + $0x34] sm:$0xf]
    %v107 = vld [vmem:[#allocation5 + $0x38] sm:$0xf]
    %v108 = vld [vmem:[#allocation5 + $0x3c] sm:$0xf]
    %v109 = vld [vmem:[#allocation10] ss:$0 sm:$0xff]
    %v126 = vunpack.c.l.b16 %v93
    %v127 = vunpack.c.l.b16 %v94
    %v128 = vunpack.c.l.b16 %v95
    %v129 = vunpack.c.l.b16 %v96
    %v130 = vunpack.c.l.b16 %v97
    %v131 = vunpack.c.l.b16 %v98
    %v132 = vunpack.c.l.b16 %v99
    %v133 = vunpack.c.l.b16 %v100
    %v134 = vunpack.c.l.b16 %v101
    %v135 = vunpack.c.l.b16 %v102
    %v136 = vunpack.c.l.b16 %v103
    %v137 = vunpack.c.l.b16 %v104
    %v138 = vunpack.c.l.b16 %v105
    %v139 = vunpack.c.l.b16 %v106
    %v140 = vunpack.c.l.b16 %v107
    %v141 = vunpack.c.l.b16 %v108
    %v142 = vpack.c.b16 %v127, %v126
    %v143 = vpack.c.b16 %v129, %v128
    %v144 = vpack.c.b16 %v131, %v130
    %v145 = vpack.c.b16 %v133, %v132
    %v146 = vpack.c.b16 %v135, %v134
    %v147 = vpack.c.b16 %v137, %v136
    %v148 = vpack.c.b16 %v139, %v138
    %v149 = vpack.c.b16 %v141, %v140
    %158 = vmatprep.subr.bf16.mxu0 0
    %159 = vmatpush1.bf16.msra.mxu0 %v149
    %160 = vmatprep.subr.bf16.mxu0 0
    %161 = vmatpush1.bf16.msra.mxu0 %v148
    %162 = vmatprep.subr.bf16.mxu0 0
    %163 = vmatpush1.bf16.msra.mxu0 %v147
    %164 = vmatprep.subr.bf16.mxu0 0
    %165 = vmatpush1.bf16.msra.mxu0 %v146
    %166 = vmatprep.subr.bf16.mxu0 0
    %167 = vmatpush1.bf16.msra.mxu0 %v145
    %168 = vmatprep.subr.bf16.mxu0 0
    %169 = vmatpush1.bf16.msra.mxu0 %v144
    %170 = vmatprep.subr.bf16.mxu0 0
    %171 = vmatpush1.bf16.msra.mxu0 %v143
    %172 = vmatprep.subr.bf16.mxu0 0
    %173 = vmatpush1.bf16.msra.mxu0 %v142
    %174 = vmatprep.subr.bf16.mxu0 0
    %175 = vmatpush2.bf16.msra.mxu0 0
    %176 = vmatprep.subr.bf16.mxu0 0
    %177 = vmatpush2.bf16.msra.mxu0 0
    %178 = vmatprep.subr.bf16.mxu0 0
    %179 = vmatpush2.bf16.msra.mxu0 0
    %180 = vmatprep.subr.bf16.mxu0 0
    %181 = vmatpush2.bf16.msra.mxu0 0
    %182 = vmatprep.subr.bf16.mxu0 0
    %183 = vmatpush2.bf16.msra.mxu0 0
    %184 = vmatprep.subr.bf16.mxu0 0
    %185 = vmatpush2.bf16.msra.mxu0 0
    %186 = vmatprep.subr.bf16.mxu0 0
    %187 = vmatpush2.bf16.msra.mxu0 0
    %188 = vmatprep.subr.bf16.mxu0 0
    %189 = vmatpush2.bf16.msra.mxu0 0
    %190 = vmatprep.mubr.bf16.mxu0 0
    %191 = vmatmul.mubr.bf16.gmra.mxu0 %v92
    %v192 = vpop.f32.mrf.mxu0
    %v193 = vadd.f32 %v109, %v192
    %v194 = vpop.f32.mrf.mxu0
    %v195 = vpop.f32.mrf.mxu0
    %v196 = vpop.f32.mrf.mxu0
    %197 = vdwg.mxu0
    %v198 = vmax.f32 %v193, 0.0
    %v199 = vpack.c.bf16 %v198, %v198
    %v200 = vld [vmem:[#allocation5 + $0x40] sm:$0xf]
    %v201 = vld [vmem:[#allocation5 + $0x44] sm:$0xf]
    %v202 = vld [vmem:[#allocation5 + $0x48] sm:$0xf]
    %v203 = vld [vmem:[#allocation5 + $0x4c] sm:$0xf]
    %v204 = vld [vmem:[#allocation5 + $0x50] sm:$0xf]
    %v205 = vld [vmem:[#allocation5 + $0x54] sm:$0xf]
    %v206 = vld [vmem:[#allocation5 + $0x58] sm:$0xf]
    %v207 = vld [vmem:[#allocation5 + $0x5c] sm:$0xf]
    %v208 = vld [vmem:[#allocation5 + $0x60] sm:$0xf]
    %v209 = vld [vmem:[#allocation5 + $0x64] sm:$0xf]
    %v210 = vld [vmem:[#allocation5 + $0x68] sm:$0xf]
    %v211 = vld [vmem:[#allocation5 + $0x6c] sm:$0xf]
    %v212 = vld [vmem:[#allocation5 + $0x70] sm:$0xf]
    %v213 = vld [vmem:[#allocation5 + $0x74] sm:$0xf]
    %v214 = vld [vmem:[#allocation5 + $0x78] sm:$0xf]
    %v215 = vld [vmem:[#allocation5 + $0x7c] sm:$0xf]
    %v216 = vld [vmem:[#allocation10 + $0x1] ss:$0 sm:$0xff]
    %v233 = vunpack.c.l.b16 %v200
    %v234 = vunpack.c.l.b16 %v201
    %v235 = vunpack.c.l.b16 %v202
    %v236 = vunpack.c.l.b16 %v203
    %v237 = vunpack.c.l.b16 %v204
    %v238 = vunpack.c.l.b16 %v205
    %v239 = vunpack.c.l.b16 %v206
    %v240 = vunpack.c.l.b16 %v207
    %v241 = vunpack.c.l.b16 %v208
    %v242 = vunpack.c.l.b16 %v209
    %v243 = vunpack.c.l.b16 %v210
    %v244 = vunpack.c.l.b16 %v211
    %v245 = vunpack.c.l.b16 %v212
    %v246 = vunpack.c.l.b16 %v213
    %v247 = vunpack.c.l.b16 %v214
    %v248 = vunpack.c.l.b16 %v215
    %v249 = vpack.c.b16 %v234, %v233
    %v250 = vpack.c.b16 %v236, %v235
    %v251 = vpack.c.b16 %v238, %v237
    %v252 = vpack.c.b16 %v240, %v239
    %v253 = vpack.c.b16 %v242, %v241
    %v254 = vpack.c.b16 %v244, %v243
    %v255 = vpack.c.b16 %v246, %v245
    %v256 = vpack.c.b16 %v248, %v247
    %265 = vmatprep.subr.bf16.mxu0 0
    %266 = vmatpush1.bf16.msra.mxu0 %v256
    %267 = vmatprep.subr.bf16.mxu0 0
    %268 = vmatpush1.bf16.msra.mxu0 %v255
    %269 = vmatprep.subr.bf16.mxu0 0
    %270 = vmatpush1.bf16.msra.mxu0 %v254
    %271 = vmatprep.subr.bf16.mxu0 0
    %272 = vmatpush1.bf16.msra.mxu0 %v253
    %273 = vmatprep.subr.bf16.mxu0 0
    %274 = vmatpush1.bf16.msra.mxu0 %v252
    %275 = vmatprep.subr.bf16.mxu0 0
    %276 = vmatpush1.bf16.msra.mxu0 %v251
    %277 = vmatprep.subr.bf16.mxu0 0
    %278 = vmatpush1.bf16.msra.mxu0 %v250
    %279 = vmatprep.subr.bf16.mxu0 0
    %280 = vmatpush1.bf16.msra.mxu0 %v249
    %281 = vmatprep.subr.bf16.mxu0 0
    %282 = vmatpush2.bf16.msra.mxu0 0
    %283 = vmatprep.subr.bf16.mxu0 0
    %284 = vmatpush2.bf16.msra.mxu0 0
    %285 = vmatprep.subr.bf16.mxu0 0
    %286 = vmatpush2.bf16.msra.mxu0 0
    %287 = vmatprep.subr.bf16.mxu0 0
    %288 = vmatpush2.bf16.msra.mxu0 0
    %289 = vmatprep.subr.bf16.mxu0 0
    %290 = vmatpush2.bf16.msra.mxu0 0
    %291 = vmatprep.subr.bf16.mxu0 0
    %292 = vmatpush2.bf16.msra.mxu0 0
    %293 = vmatprep.subr.bf16.mxu0 0
    %294 = vmatpush2.bf16.msra.mxu0 0
    %295 = vmatprep.subr.bf16.mxu0 0
    %296 = vmatpush2.bf16.msra.mxu0 0
    %297 = vmatprep.mubr.bf16.mxu0 0
    %298 = vmatmul.mubr.bf16.gmra.mxu0 %v199
    %v299 = vpop.f32.mrf.mxu0
    %v300 = vadd.f32 %v216, %v299
    %v301 = vpop.f32.mrf.mxu0
    %v302 = vpop.f32.mrf.mxu0
    %v303 = vpop.f32.mrf.mxu0
    %304 = vdwg.mxu0
    %v305 = vmax.f32 %v300, 0.0
    %v306 = vpack.c.bf16 %v305, %v305
    %v307 = vld [vmem:[#allocation5 + $0x80] sm:$0xf]
    %v308 = vld [vmem:[#allocation5 + $0x84] sm:$0xf]
    %v309 = vld [vmem:[#allocation5 + $0x88] sm:$0xf]
    %v310 = vld [vmem:[#allocation5 + $0x8c] sm:$0xf]
    %v311 = vld [vmem:[#allocation5 + $0x90] sm:$0xf]
    %v312 = vld [vmem:[#allocation5 + $0x94] sm:$0xf]
    %v313 = vld [vmem:[#allocation5 + $0x98] sm:$0xf]
    %v314 = vld [vmem:[#allocation5 + $0x9c] sm:$0xf]
    %v315 = vld [vmem:[#allocation5 + $0xa0] sm:$0xf]
    %v316 = vld [vmem:[#allocation5 + $0xa4] sm:$0xf]
    %v317 = vld [vmem:[#allocation5 + $0xa8] sm:$0xf]
    %v318 = vld [vmem:[#allocation5 + $0xac] sm:$0xf]
    %v319 = vld [vmem:[#allocation5 + $0xb0] sm:$0xf]
    %v320 = vld [vmem:[#allocation5 + $0xb4] sm:$0xf]
    %v321 = vld [vmem:[#allocation5 + $0xb8] sm:$0xf]
    %v322 = vld [vmem:[#allocation5 + $0xbc] sm:$0xf]
    %v323 = vld [vmem:[#allocation10 + $0x2] ss:$0 sm:$0xff]
    %v340 = vunpack.c.l.b16 %v307
    %v341 = vunpack.c.l.b16 %v308
    %v342 = vunpack.c.l.b16 %v309
    %v343 = vunpack.c.l.b16 %v310
    %v344 = vunpack.c.l.b16 %v311
    %v345 = vunpack.c.l.b16 %v312
    %v346 = vunpack.c.l.b16 %v313
    %v347 = vunpack.c.l.b16 %v314
    %v348 = vunpack.c.l.b16 %v315
    %v349 = vunpack.c.l.b16 %v316
    %v350 = vunpack.c.l.b16 %v317
    %v351 = vunpack.c.l.b16 %v318
    %v352 = vunpack.c.l.b16 %v319
    %v353 = vunpack.c.l.b16 %v320
    %v354 = vunpack.c.l.b16 %v321
    %v355 = vunpack.c.l.b16 %v322
    %v356 = vpack.c.b16 %v341, %v340
    %v357 = vpack.c.b16 %v343, %v342
    %v358 = vpack.c.b16 %v345, %v344
    %v359 = vpack.c.b16 %v347, %v346
    %v360 = vpack.c.b16 %v349, %v348
    %v361 = vpack.c.b16 %v351, %v350
    %v362 = vpack.c.b16 %v353, %v352
    %v363 = vpack.c.b16 %v355, %v354
    %372 = vmatprep.subr.bf16.mxu0 0
    %373 = vmatpush1.bf16.msra.mxu0 %v363
    %374 = vmatprep.subr.bf16.mxu0 0
    %375 = vmatpush1.bf16.msra.mxu0 %v362
    %376 = vmatprep.subr.bf16.mxu0 0
    %377 = vmatpush1.bf16.msra.mxu0 %v361
    %378 = vmatprep.subr.bf16.mxu0 0
    %379 = vmatpush1.bf16.msra.mxu0 %v360
    %380 = vmatprep.subr.bf16.mxu0 0
    %381 = vmatpush1.bf16.msra.mxu0 %v359
    %382 = vmatprep.subr.bf16.mxu0 0
    %383 = vmatpush1.bf16.msra.mxu0 %v358
    %384 = vmatprep.subr.bf16.mxu0 0
    %385 = vmatpush1.bf16.msra.mxu0 %v357
    %386 = vmatprep.subr.bf16.mxu0 0
    %387 = vmatpush1.bf16.msra.mxu0 %v356
    %388 = vmatprep.subr.bf16.mxu0 0
    %389 = vmatpush2.bf16.msra.mxu0 0
    %390 = vmatprep.subr.bf16.mxu0 0
    %391 = vmatpush2.bf16.msra.mxu0 0
    %392 = vmatprep.subr.bf16.mxu0 0
    %393 = vmatpush2.bf16.msra.mxu0 0
    %394 = vmatprep.subr.bf16.mxu0 0
    %395 = vmatpush2.bf16.msra.mxu0 0
    %396 = vmatprep.subr.bf16.mxu0 0
    %397 = vmatpush2.bf16.msra.mxu0 0
    %398 = vmatprep.subr.bf16.mxu0 0
    %399 = vmatpush2.bf16.msra.mxu0 0
    %400 = vmatprep.subr.bf16.mxu0 0
    %401 = vmatpush2.bf16.msra.mxu0 0
    %402 = vmatprep.subr.bf16.mxu0 0
    %403 = vmatpush2.bf16.msra.mxu0 0
    %404 = vmatprep.mubr.bf16.mxu0 0
    %405 = vmatmul.mubr.bf16.gmra.mxu0 %v306
    %v406 = vpop.f32.mrf.mxu0
    %v407 = vadd.f32 %v323, %v406
    %v408 = vpop.f32.mrf.mxu0
    %v409 = vpop.f32.mrf.mxu0
    %v410 = vpop.f32.mrf.mxu0
    %411 = vdwg.mxu0
    %v412 = vmax.f32 %v407, 0.0
    %v413 = vpack.c.bf16 %v412, %v412
    %v414 = vld [vmem:[#allocation7] sm:$0xff]
    %v415 = vld [vmem:[#allocation7 + $0xc] sm:$0xff]
    %v416 = vld [vmem:[#allocation7 + $0x18] sm:$0xff]
    %v417 = vld [vmem:[#allocation7 + $0x24] sm:$0xff]
    %v418 = vld [vmem:[#allocation7 + $0x30] sm:$0xff]
    %v419 = vld [vmem:[#allocation7 + $0x3c] sm:$0xff]
    %v420 = vld [vmem:[#allocation7 + $0x48] sm:$0xff]
    %v421 = vld [vmem:[#allocation7 + $0x54] sm:$0xff]
    %v422 = vld [vmem:[#allocation7 + $0x60] sm:$0xff]
    %v423 = vld [vmem:[#allocation7 + $0x6c] sm:$0xff]
    %v424 = vld [vmem:[#allocation7 + $0x78] sm:$0xff]
    %v425 = vld [vmem:[#allocation7 + $0x84] sm:$0xff]
    %v426 = vld [vmem:[#allocation7 + $0x90] sm:$0xff]
    %v427 = vld [vmem:[#allocation7 + $0x9c] sm:$0xff]
    %v428 = vld [vmem:[#allocation7 + $0xa8] sm:$0xff]
    %v429 = vld [vmem:[#allocation7 + $0xb4] sm:$0xff]
    %s430 = scalar_lea.vmem [#allocation10], 3
    %v431 = vld [vmem:[%s430] ss:$8 sm:$0x3]
    %v433 = vlaneseq
    %v434 = vshrl.u32 %v433, 7
    %v435 = vsub.s32 0, %v434
    %v436 = vrot.slane %v431, %v435
    %v437 = vlaneseq
    %v438 = vshrl.u32 %v437, 7
    %v439 = vsub.s32 1, %v438
    %v440 = vrot.slane %v431, %v439
    %v459 = vunpack.c.l.b16 %v414
    %v460 = vunpack.c.h.b16 %v414
    %v461 = vunpack.c.l.b16 %v415
    %v462 = vunpack.c.h.b16 %v415
    %v463 = vunpack.c.l.b16 %v416
    %v464 = vunpack.c.h.b16 %v416
    %v465 = vunpack.c.l.b16 %v417
    %v466 = vunpack.c.h.b16 %v417
    %v467 = vunpack.c.l.b16 %v418
    %v468 = vunpack.c.h.b16 %v418
    %v469 = vunpack.c.l.b16 %v419
    %v470 = vunpack.c.h.b16 %v419
    %v471 = vunpack.c.l.b16 %v420
    %v472 = vunpack.c.h.b16 %v420
    %v473 = vunpack.c.l.b16 %v421
    %v474 = vunpack.c.h.b16 %v421
    %v475 = vunpack.c.l.b16 %v422
    %v476 = vunpack.c.h.b16 %v422
    %v477 = vunpack.c.l.b16 %v423
    %v478 = vunpack.c.h.b16 %v423
    %v479 = vunpack.c.l.b16 %v424
    %v480 = vunpack.c.h.b16 %v424
    %v481 = vunpack.c.l.b16 %v425
    %v482 = vunpack.c.h.b16 %v425
    %v483 = vunpack.c.l.b16 %v426
    %v484 = vunpack.c.h.b16 %v426
    %v485 = vunpack.c.l.b16 %v427
    %v486 = vunpack.c.h.b16 %v427
    %v487 = vunpack.c.l.b16 %v428
    %v488 = vunpack.c.h.b16 %v428
    %v489 = vunpack.c.l.b16 %v429
    %v490 = vunpack.c.h.b16 %v429
    %v491 = vpack.c.b16 %v461, %v459
    %v492 = vpack.c.b16 %v462, %v460
    %v493 = vpack.c.b16 %v465, %v463
    %v494 = vpack.c.b16 %v466, %v464
    %v495 = vpack.c.b16 %v469, %v467
    %v496 = vpack.c.b16 %v470, %v468
    %v497 = vpack.c.b16 %v473, %v471
    %v498 = vpack.c.b16 %v474, %v472
    %v499 = vpack.c.b16 %v477, %v475
    %v500 = vpack.c.b16 %v478, %v476
    %v501 = vpack.c.b16 %v481, %v479
    %v502 = vpack.c.b16 %v482, %v480
    %v503 = vpack.c.b16 %v485, %v483
    %v504 = vpack.c.b16 %v486, %v484
    %v505 = vpack.c.b16 %v489, %v487
    %v506 = vpack.c.b16 %v490, %v488
    %523 = vmatprep.subr.bf16.mxu0 %v506
    %524 = vmatpush1.bf16.msra.mxu0 %v505
    %525 = vmatprep.subr.bf16.mxu0 %v504
    %526 = vmatpush1.bf16.msra.mxu0 %v503
    %527 = vmatprep.subr.bf16.mxu0 %v502
    %528 = vmatpush1.bf16.msra.mxu0 %v501
    %529 = vmatprep.subr.bf16.mxu0 %v500
    %530 = vmatpush1.bf16.msra.mxu0 %v499
    %531 = vmatprep.subr.bf16.mxu0 %v498
    %532 = vmatpush1.bf16.msra.mxu0 %v497
    %533 = vmatprep.subr.bf16.mxu0 %v496
    %534 = vmatpush1.bf16.msra.mxu0 %v495
    %535 = vmatprep.subr.bf16.mxu0 %v494
    %536 = vmatpush1.bf16.msra.mxu0 %v493
    %537 = vmatprep.subr.bf16.mxu0 %v492
    %538 = vmatpush1.bf16.msra.mxu0 %v491
    %539 = vmatprep.subr.bf16.mxu0 0
    %540 = vmatpush2.bf16.msra.mxu0 0
    %541 = vmatprep.subr.bf16.mxu0 0
    %542 = vmatpush2.bf16.msra.mxu0 0
    %543 = vmatprep.subr.bf16.mxu0 0
    %544 = vmatpush2.bf16.msra.mxu0 0
    %545 = vmatprep.subr.bf16.mxu0 0
    %546 = vmatpush2.bf16.msra.mxu0 0
    %547 = vmatprep.subr.bf16.mxu0 0
    %548 = vmatpush2.bf16.msra.mxu0 0
    %549 = vmatprep.subr.bf16.mxu0 0
    %550 = vmatpush2.bf16.msra.mxu0 0
    %551 = vmatprep.subr.bf16.mxu0 0
    %552 = vmatpush2.bf16.msra.mxu0 0
    %553 = vmatprep.subr.bf16.mxu0 0
    %554 = vmatpush2.bf16.msra.mxu0 0
    %555 = vmatprep.mubr.bf16.mxu0 0
    %556 = vmatmul.mubr.bf16.gmra.mxu0 %v413
    %v557 = vpop.f32.mrf.mxu0
    %v558 = vadd.f32 %v436, %v557
    %v559 = vpop.f32.mrf.mxu0
    %v560 = vadd.f32 %v440, %v559
    %v561 = vpop.f32.mrf.mxu0
    %v562 = vpop.f32.mrf.mxu0
    %563 = vdwg.mxu0
    %v564 = vmax.f32 %v558, 0.0
    %v565 = vmax.f32 %v560, 0.0
    %v566 = vpack.c.bf16 %v564, %v564
    %v567 = vpack.c.bf16 %v565, %v565
    %v568 = vld [vmem:[#allocation7 + $0xc0] sm:$0xff]
    %v569 = vld [vmem:[#allocation7 + $0xc8] sm:$0xf]
    %v570 = vld [vmem:[#allocation7 + $0xcc] sm:$0xff]
    %v571 = vld [vmem:[#allocation7 + $0xd4] sm:$0xf]
    %v572 = vld [vmem:[#allocation7 + $0xd8] sm:$0xff]
    %v573 = vld [vmem:[#allocation7 + $0xe0] sm:$0xf]
    %v574 = vld [vmem:[#allocation7 + $0xe4] sm:$0xff]
    %v575 = vld [vmem:[#allocation7 + $0xec] sm:$0xf]
    %v576 = vld [vmem:[#allocation7 + $0xf0] sm:$0xff]
    %v577 = vld [vmem:[#allocation7 + $0xf8] sm:$0xf]
    %v578 = vld [vmem:[#allocation7 + $0xfc] sm:$0xff]
    %v579 = vld [vmem:[#allocation7 + $0x104] sm:$0xf]
    %v580 = vld [vmem:[#allocation7 + $0x108] sm:$0xff]
    %v581 = vld [vmem:[#allocation7 + $0x110] sm:$0xf]
    %v582 = vld [vmem:[#allocation7 + $0x114] sm:$0xff]
    %v583 = vld [vmem:[#allocation7 + $0x11c] sm:$0xf]
    %v584 = vld [vmem:[#allocation7 + $0x120] sm:$0xff]
    %v585 = vld [vmem:[#allocation7 + $0x128] sm:$0xf]
    %v586 = vld [vmem:[#allocation7 + $0x12c] sm:$0xff]
    %v587 = vld [vmem:[#allocation7 + $0x134] sm:$0xf]
    %v588 = vld [vmem:[#allocation7 + $0x138] sm:$0xff]
    %v589 = vld [vmem:[#allocation7 + $0x140] sm:$0xf]
    %v590 = vld [vmem:[#allocation7 + $0x144] sm:$0xff]
    %v591 = vld [vmem:[#allocation7 + $0x14c] sm:$0xf]
    %v592 = vld [vmem:[#allocation7 + $0x150] sm:$0xff]
    %v593 = vld [vmem:[#allocation7 + $0x158] sm:$0xf]
    %v594 = vld [vmem:[#allocation7 + $0x15c] sm:$0xff]
    %v595 = vld [vmem:[#allocation7 + $0x164] sm:$0xf]
    %v596 = vld [vmem:[#allocation7 + $0x168] sm:$0xff]
    %v597 = vld [vmem:[#allocation7 + $0x170] sm:$0xf]
    %v598 = vld [vmem:[#allocation7 + $0x174] sm:$0xff]
    %v599 = vld [vmem:[#allocation7 + $0x17c] sm:$0xf]
    %v600 = vld [vmem:[#allocation7 + $0x180] sm:$0xff]
    %v601 = vld [vmem:[#allocation7 + $0x188] sm:$0xf]
    %v602 = vld [vmem:[#allocation7 + $0x18c] sm:$0xff]
    %v603 = vld [vmem:[#allocation7 + $0x194] sm:$0xf]
    %v604 = vld [vmem:[#allocation7 + $0x198] sm:$0xff]
    %v605 = vld [vmem:[#allocation7 + $0x1a0] sm:$0xf]
    %v606 = vld [vmem:[#allocation7 + $0x1a4] sm:$0xff]
    %v607 = vld [vmem:[#allocation7 + $0x1ac] sm:$0xf]
    %v608 = vld [vmem:[#allocation7 + $0x1b0] sm:$0xff]
    %v609 = vld [vmem:[#allocation7 + $0x1b8] sm:$0xf]
    %v610 = vld [vmem:[#allocation7 + $0x1bc] sm:$0xff]
    %v611 = vld [vmem:[#allocation7 + $0x1c4] sm:$0xf]
    %v612 = vld [vmem:[#allocation7 + $0x1c8] sm:$0xff]
    %v613 = vld [vmem:[#allocation7 + $0x1d0] sm:$0xf]
    %v614 = vld [vmem:[#allocation7 + $0x1d4] sm:$0xff]
    %v615 = vld [vmem:[#allocation7 + $0x1dc] sm:$0xf]
    %v616 = vld [vmem:[#allocation7 + $0x1e0] sm:$0xff]
    %v617 = vld [vmem:[#allocation7 + $0x1e8] sm:$0xf]
    %v618 = vld [vmem:[#allocation7 + $0x1ec] sm:$0xff]
    %v619 = vld [vmem:[#allocation7 + $0x1f4] sm:$0xf]
    %v620 = vld [vmem:[#allocation7 + $0x1f8] sm:$0xff]
    %v621 = vld [vmem:[#allocation7 + $0x200] sm:$0xf]
    %v622 = vld [vmem:[#allocation7 + $0x204] sm:$0xff]
    %v623 = vld [vmem:[#allocation7 + $0x20c] sm:$0xf]
    %v624 = vld [vmem:[#allocation7 + $0x210] sm:$0xff]
    %v625 = vld [vmem:[#allocation7 + $0x218] sm:$0xf]
    %v626 = vld [vmem:[#allocation7 + $0x21c] sm:$0xff]
    %v627 = vld [vmem:[#allocation7 + $0x224] sm:$0xf]
    %v628 = vld [vmem:[#allocation7 + $0x228] sm:$0xff]
    %v629 = vld [vmem:[#allocation7 + $0x230] sm:$0xf]
    %v630 = vld [vmem:[#allocation7 + $0x234] sm:$0xff]
    %v631 = vld [vmem:[#allocation7 + $0x23c] sm:$0xf]
    %s632 = scalar_lea.vmem [#allocation10], 4
    %v633 = vld [vmem:[%s632] ss:$8 sm:$0x7]
    %v635 = vlaneseq
    %v636 = vshrl.u32 %v635, 7
    %v637 = vsub.s32 0, %v636
    %v638 = vrot.slane %v633, %v637
    %v639 = vlaneseq
    %v640 = vshrl.u32 %v639, 7
    %v641 = vsub.s32 1, %v640
    %v642 = vrot.slane %v633, %v641
    %v643 = vlaneseq
    %v644 = vshrl.u32 %v643, 7
    %v645 = vsub.s32 2, %v644
    %v646 = vrot.slane %v633, %v645
    %v714 = vunpack.c.l.b16 %v568
    %v715 = vunpack.c.h.b16 %v568
    %v716 = vunpack.c.l.b16 %v569
    %v717 = vunpack.c.l.b16 %v570
    %v718 = vunpack.c.h.b16 %v570
    %v719 = vunpack.c.l.b16 %v571
    %v720 = vunpack.c.l.b16 %v572
    %v721 = vunpack.c.h.b16 %v572
    %v722 = vunpack.c.l.b16 %v573
    %v723 = vunpack.c.l.b16 %v574
    %v724 = vunpack.c.h.b16 %v574
    %v725 = vunpack.c.l.b16 %v575
    %v726 = vunpack.c.l.b16 %v576
    %v727 = vunpack.c.h.b16 %v576
    %v728 = vunpack.c.l.b16 %v577
    %v729 = vunpack.c.l.b16 %v578
    %v730 = vunpack.c.h.b16 %v578
    %v731 = vunpack.c.l.b16 %v579
    %v732 = vunpack.c.l.b16 %v580
    %v733 = vunpack.c.h.b16 %v580
    %v734 = vunpack.c.l.b16 %v581
    %v735 = vunpack.c.l.b16 %v582
    %v736 = vunpack.c.h.b16 %v582
    %v737 = vunpack.c.l.b16 %v583
    %v738 = vunpack.c.l.b16 %v584
    %v739 = vunpack.c.h.b16 %v584
    %v740 = vunpack.c.l.b16 %v585
    %v741 = vunpack.c.l.b16 %v586
    %v742 = vunpack.c.h.b16 %v586
    %v743 = vunpack.c.l.b16 %v587
    %v744 = vunpack.c.l.b16 %v588
    %v745 = vunpack.c.h.b16 %v588
    %v746 = vunpack.c.l.b16 %v589
    %v747 = vunpack.c.l.b16 %v590
    %v748 = vunpack.c.h.b16 %v590
    %v749 = vunpack.c.l.b16 %v591
    %v750 = vunpack.c.l.b16 %v592
    %v751 = vunpack.c.h.b16 %v592
    %v752 = vunpack.c.l.b16 %v593
    %v753 = vunpack.c.l.b16 %v594
    %v754 = vunpack.c.h.b16 %v594
    %v755 = vunpack.c.l.b16 %v595
    %v756 = vunpack.c.l.b16 %v596
    %v757 = vunpack.c.h.b16 %v596
    %v758 = vunpack.c.l.b16 %v597
    %v759 = vunpack.c.l.b16 %v598
    %v760 = vunpack.c.h.b16 %v598
    %v761 = vunpack.c.l.b16 %v599
    %v762 = vunpack.c.l.b16 %v600
    %v763 = vunpack.c.h.b16 %v600
    %v764 = vunpack.c.l.b16 %v601
    %v765 = vunpack.c.l.b16 %v602
    %v766 = vunpack.c.h.b16 %v602
    %v767 = vunpack.c.l.b16 %v603
    %v768 = vunpack.c.l.b16 %v604
    %v769 = vunpack.c.h.b16 %v604
    %v770 = vunpack.c.l.b16 %v605
    %v771 = vunpack.c.l.b16 %v606
    %v772 = vunpack.c.h.b16 %v606
    %v773 = vunpack.c.l.b16 %v607
    %v774 = vunpack.c.l.b16 %v608
    %v775 = vunpack.c.h.b16 %v608
    %v776 = vunpack.c.l.b16 %v609
    %v777 = vunpack.c.l.b16 %v610
    %v778 = vunpack.c.h.b16 %v610
    %v779 = vunpack.c.l.b16 %v611
    %v780 = vunpack.c.l.b16 %v612
    %v781 = vunpack.c.h.b16 %v612
    %v782 = vunpack.c.l.b16 %v613
    %v783 = vunpack.c.l.b16 %v614
    %v784 = vunpack.c.h.b16 %v614
    %v785 = vunpack.c.l.b16 %v615
    %v786 = vunpack.c.l.b16 %v616
    %v787 = vunpack.c.h.b16 %v616
    %v788 = vunpack.c.l.b16 %v617
    %v789 = vunpack.c.l.b16 %v618
    %v790 = vunpack.c.h.b16 %v618
    %v791 = vunpack.c.l.b16 %v619
    %v792 = vunpack.c.l.b16 %v620
    %v793 = vunpack.c.h.b16 %v620
    %v794 = vunpack.c.l.b16 %v621
    %v795 = vunpack.c.l.b16 %v622
    %v796 = vunpack.c.h.b16 %v622
    %v797 = vunpack.c.l.b16 %v623
    %v798 = vunpack.c.l.b16 %v624
    %v799 = vunpack.c.h.b16 %v624
    %v800 = vunpack.c.l.b16 %v625
    %v801 = vunpack.c.l.b16 %v626
    %v802 = vunpack.c.h.b16 %v626
    %v803 = vunpack.c.l.b16 %v627
    %v804 = vunpack.c.l.b16 %v628
    %v805 = vunpack.c.h.b16 %v628
    %v806 = vunpack.c.l.b16 %v629
    %v807 = vunpack.c.l.b16 %v630
    %v808 = vunpack.c.h.b16 %v630
    %v809 = vunpack.c.l.b16 %v631
    %v810 = vpack.c.b16 %v717, %v714
    %v811 = vpack.c.b16 %v718, %v715
    %v812 = vpack.c.b16 %v719, %v716
    %v813 = vpack.c.b16 %v723, %v720
    %v814 = vpack.c.b16 %v724, %v721
    %v815 = vpack.c.b16 %v725, %v722
    %v816 = vpack.c.b16 %v729, %v726
    %v817 = vpack.c.b16 %v730, %v727
    %v818 = vpack.c.b16 %v731, %v728
    %v819 = vpack.c.b16 %v735, %v732
    %v820 = vpack.c.b16 %v736, %v733
    %v821 = vpack.c.b16 %v737, %v734
    %v822 = vpack.c.b16 %v741, %v738
    %v823 = vpack.c.b16 %v742, %v739
    %v824 = vpack.c.b16 %v743, %v740
    %v825 = vpack.c.b16 %v747, %v744
    %v826 = vpack.c.b16 %v748, %v745
    %v827 = vpack.c.b16 %v749, %v746
    %v828 = vpack.c.b16 %v753, %v750
    %v829 = vpack.c.b16 %v754, %v751
    %v830 = vpack.c.b16 %v755, %v752
    %v831 = vpack.c.b16 %v759, %v756
    %v832 = vpack.c.b16 %v760, %v757
    %v833 = vpack.c.b16 %v761, %v758
    %v834 = vpack.c.b16 %v765, %v762
    %v835 = vpack.c.b16 %v766, %v763
    %v836 = vpack.c.b16 %v767, %v764
    %v837 = vpack.c.b16 %v771, %v768
    %v838 = vpack.c.b16 %v772, %v769
    %v839 = vpack.c.b16 %v773, %v770
    %v840 = vpack.c.b16 %v777, %v774
    %v841 = vpack.c.b16 %v778, %v775
    %v842 = vpack.c.b16 %v779, %v776
    %v843 = vpack.c.b16 %v783, %v780
    %v844 = vpack.c.b16 %v784, %v781
    %v845 = vpack.c.b16 %v785, %v782
    %v846 = vpack.c.b16 %v789, %v786
    %v847 = vpack.c.b16 %v790, %v787
    %v848 = vpack.c.b16 %v791, %v788
    %v849 = vpack.c.b16 %v795, %v792
    %v850 = vpack.c.b16 %v796, %v793
    %v851 = vpack.c.b16 %v797, %v794
    %v852 = vpack.c.b16 %v801, %v798
    %v853 = vpack.c.b16 %v802, %v799
    %v854 = vpack.c.b16 %v803, %v800
    %v855 = vpack.c.b16 %v807, %v804
    %v856 = vpack.c.b16 %v808, %v805
    %v857 = vpack.c.b16 %v809, %v806
    %906 = vmatprep.subr.bf16.mxu0 %v832
    %907 = vmatpush1.bf16.msra.mxu0 %v831
    %908 = vmatprep.subr.bf16.mxu0 %v829
    %909 = vmatpush1.bf16.msra.mxu0 %v828
    %910 = vmatprep.subr.bf16.mxu0 %v826
    %911 = vmatpush1.bf16.msra.mxu0 %v825
    %912 = vmatprep.subr.bf16.mxu0 %v823
    %913 = vmatpush1.bf16.msra.mxu0 %v822
    %914 = vmatprep.subr.bf16.mxu0 %v820
    %915 = vmatpush1.bf16.msra.mxu0 %v819
    %916 = vmatprep.subr.bf16.mxu0 %v817
    %917 = vmatpush1.bf16.msra.mxu0 %v816
    %918 = vmatprep.subr.bf16.mxu0 %v814
    %919 = vmatpush1.bf16.msra.mxu0 %v813
    %920 = vmatprep.subr.bf16.mxu0 %v811
    %921 = vmatpush1.bf16.msra.mxu0 %v810
    %922 = vmatprep.subr.bf16.mxu0 %v856
    %923 = vmatpush2.bf16.msra.mxu0 %v855
    %924 = vmatprep.subr.bf16.mxu0 %v853
    %925 = vmatpush2.bf16.msra.mxu0 %v852
    %926 = vmatprep.subr.bf16.mxu0 %v850
    %927 = vmatpush2.bf16.msra.mxu0 %v849
    %928 = vmatprep.subr.bf16.mxu0 %v847
    %929 = vmatpush2.bf16.msra.mxu0 %v846
    %930 = vmatprep.subr.bf16.mxu0 %v844
    %931 = vmatpush2.bf16.msra.mxu0 %v843
    %932 = vmatprep.subr.bf16.mxu0 %v841
    %933 = vmatpush2.bf16.msra.mxu0 %v840
    %934 = vmatprep.subr.bf16.mxu0 %v838
    %935 = vmatpush2.bf16.msra.mxu0 %v837
    %936 = vmatprep.subr.bf16.mxu0 %v835
    %937 = vmatpush2.bf16.msra.mxu0 %v834
    %938 = vmatprep.mubr.bf16.mxu0 %v567
    %939 = vmatmul.mubr.bf16.gmra.mxu0 %v566
    %v940 = vpop.f32.mrf.mxu0
    %v941 = vadd.f32 %v638, %v940
    %v942 = vpop.f32.mrf.mxu0
    %v943 = vadd.f32 %v642, %v942
    %v944 = vpop.f32.mrf.mxu0
    %v945 = vpop.f32.mrf.mxu0
    %946 = vdwg.mxu0
    %947 = vmatprep.subr.bf16.mxu0 0
    %948 = vmatpush1.bf16.msra.mxu0 %v833
    %949 = vmatprep.subr.bf16.mxu0 0
    %950 = vmatpush1.bf16.msra.mxu0 %v830
    %951 = vmatprep.subr.bf16.mxu0 0
    %952 = vmatpush1.bf16.msra.mxu0 %v827
    %953 = vmatprep.subr.bf16.mxu0 0
    %954 = vmatpush1.bf16.msra.mxu0 %v824
    %955 = vmatprep.subr.bf16.mxu0 0
    %956 = vmatpush1.bf16.msra.mxu0 %v821
    %957 = vmatprep.subr.bf16.mxu0 0
    %958 = vmatpush1.bf16.msra.mxu0 %v818
    %959 = vmatprep.subr.bf16.mxu0 0
    %960 = vmatpush1.bf16.msra.mxu0 %v815
    %961 = vmatprep.subr.bf16.mxu0 0
    %962 = vmatpush1.bf16.msra.mxu0 %v812
    %963 = vmatprep.subr.bf16.mxu0 0
    %964 = vmatpush2.bf16.msra.mxu0 %v857
    %965 = vmatprep.subr.bf16.mxu0 0
    %966 = vmatpush2.bf16.msra.mxu0 %v854
    %967 = vmatprep.subr.bf16.mxu0 0
    %968 = vmatpush2.bf16.msra.mxu0 %v851
    %969 = vmatprep.subr.bf16.mxu0 0
    %970 = vmatpush2.bf16.msra.mxu0 %v848
    %971 = vmatprep.subr.bf16.mxu0 0
    %972 = vmatpush2.bf16.msra.mxu0 %v845
    %973 = vmatprep.subr.bf16.mxu0 0
    %974 = vmatpush2.bf16.msra.mxu0 %v842
    %975 = vmatprep.subr.bf16.mxu0 0
    %976 = vmatpush2.bf16.msra.mxu0 %v839
    %977 = vmatprep.subr.bf16.mxu0 0
    %978 = vmatpush2.bf16.msra.mxu0 %v836
    %979 = vmatprep.mubr.bf16.mxu0 %v567
    %980 = vmatmul.mubr.bf16.gmra.mxu0 %v566
    %v981 = vpop.f32.mrf.mxu0
    %v982 = vadd.f32 %v646, %v981
    %v983 = vpop.f32.mrf.mxu0
    %v984 = vpop.f32.mrf.mxu0
    %v985 = vpop.f32.mrf.mxu0
    %986 = vdwg.mxu0
    %v987 = vmax.f32 %v941, 0.0
    %v988 = vmax.f32 %v943, 0.0
    %v989 = vmax.f32 %v982, 0.0
    %v990 = vpack.c.bf16 %v987, %v987
    %v991 = vpack.c.bf16 %v988, %v988
    %v992 = vpack.c.bf16 %v989, %v989
    %v993 = vld [vmem:[#allocation8] sm:$0xff]
    %v994 = vld [vmem:[#allocation8 + $0x8] sm:$0xff]
    %v995 = vld [vmem:[#allocation8 + $0x10] sm:$0xf]
    %v996 = vld [vmem:[#allocation8 + $0x14] sm:$0xff]
    %v997 = vld [vmem:[#allocation8 + $0x1c] sm:$0xff]
    %v998 = vld [vmem:[#allocation8 + $0x24] sm:$0xf]
    %v999 = vld [vmem:[#allocation8 + $0x28] sm:$0xff]
    %v1000 = vld [vmem:[#allocation8 + $0x30] sm:$0xff]
    %v1001 = vld [vmem:[#allocation8 + $0x38] sm:$0xf]
    %v1002 = vld [vmem:[#allocation8 + $0x3c] sm:$0xff]
    %v1003 = vld [vmem:[#allocation8 + $0x44] sm:$0xff]
    %v1004 = vld [vmem:[#allocation8 + $0x4c] sm:$0xf]
    %v1005 = vld [vmem:[#allocation8 + $0x50] sm:$0xff]
    %v1006 = vld [vmem:[#allocation8 + $0x58] sm:$0xff]
    %v1007 = vld [vmem:[#allocation8 + $0x60] sm:$0xf]
    %v1008 = vld [vmem:[#allocation8 + $0x64] sm:$0xff]
    %v1009 = vld [vmem:[#allocation8 + $0x6c] sm:$0xff]
    %v1010 = vld [vmem:[#allocation8 + $0x74] sm:$0xf]
    %v1011 = vld [vmem:[#allocation8 + $0x78] sm:$0xff]
    %v1012 = vld [vmem:[#allocation8 + $0x80] sm:$0xff]
    %v1013 = vld [vmem:[#allocation8 + $0x88] sm:$0xf]
    %v1014 = vld [vmem:[#allocation8 + $0x8c] sm:$0xff]
    %v1015 = vld [vmem:[#allocation8 + $0x94] sm:$0xff]
    %v1016 = vld [vmem:[#allocation8 + $0x9c] sm:$0xf]
    %v1017 = vld [vmem:[#allocation8 + $0xa0] sm:$0xff]
    %v1018 = vld [vmem:[#allocation8 + $0xa8] sm:$0xff]
    %v1019 = vld [vmem:[#allocation8 + $0xb0] sm:$0xf]
    %v1020 = vld [vmem:[#allocation8 + $0xb4] sm:$0xff]
    %v1021 = vld [vmem:[#allocation8 + $0xbc] sm:$0xff]
    %v1022 = vld [vmem:[#allocation8 + $0xc4] sm:$0xf]
    %v1023 = vld [vmem:[#allocation8 + $0xc8] sm:$0xff]
    %v1024 = vld [vmem:[#allocation8 + $0xd0] sm:$0xff]
    %v1025 = vld [vmem:[#allocation8 + $0xd8] sm:$0xf]
    %v1026 = vld [vmem:[#allocation8 + $0xdc] sm:$0xff]
    %v1027 = vld [vmem:[#allocation8 + $0xe4] sm:$0xff]
    %v1028 = vld [vmem:[#allocation8 + $0xec] sm:$0xf]
    %v1029 = vld [vmem:[#allocation8 + $0xf0] sm:$0xff]
    %v1030 = vld [vmem:[#allocation8 + $0xf8] sm:$0xff]
    %v1031 = vld [vmem:[#allocation8 + $0x100] sm:$0xf]
    %v1032 = vld [vmem:[#allocation8 + $0x104] sm:$0xff]
    %v1033 = vld [vmem:[#allocation8 + $0x10c] sm:$0xff]
    %v1034 = vld [vmem:[#allocation8 + $0x114] sm:$0xf]
    %v1035 = vld [vmem:[#allocation8 + $0x118] sm:$0xff]
    %v1036 = vld [vmem:[#allocation8 + $0x120] sm:$0xff]
    %v1037 = vld [vmem:[#allocation8 + $0x128] sm:$0xf]
    %v1038 = vld [vmem:[#allocation8 + $0x12c] sm:$0xff]
    %v1039 = vld [vmem:[#allocation8 + $0x134] sm:$0xff]
    %v1040 = vld [vmem:[#allocation8 + $0x13c] sm:$0xf]
    %v1041 = vld [vmem:[#allocation8 + $0x140] sm:$0xff]
    %v1042 = vld [vmem:[#allocation8 + $0x148] sm:$0xff]
    %v1043 = vld [vmem:[#allocation8 + $0x150] sm:$0xf]
    %v1044 = vld [vmem:[#allocation8 + $0x154] sm:$0xff]
    %v1045 = vld [vmem:[#allocation8 + $0x15c] sm:$0xff]
    %v1046 = vld [vmem:[#allocation8 + $0x164] sm:$0xf]
    %v1047 = vld [vmem:[#allocation8 + $0x168] sm:$0xff]
    %v1048 = vld [vmem:[#allocation8 + $0x170] sm:$0xff]
    %v1049 = vld [vmem:[#allocation8 + $0x178] sm:$0xf]
    %v1050 = vld [vmem:[#allocation8 + $0x17c] sm:$0xff]
    %v1051 = vld [vmem:[#allocation8 + $0x184] sm:$0xff]
    %v1052 = vld [vmem:[#allocation8 + $0x18c] sm:$0xf]
    %v1053 = vld [vmem:[#allocation8 + $0x190] sm:$0xff]
    %v1054 = vld [vmem:[#allocation8 + $0x198] sm:$0xff]
    %v1055 = vld [vmem:[#allocation8 + $0x1a0] sm:$0xf]
    %v1056 = vld [vmem:[#allocation8 + $0x1a4] sm:$0xff]
    %v1057 = vld [vmem:[#allocation8 + $0x1ac] sm:$0xff]
    %v1058 = vld [vmem:[#allocation8 + $0x1b4] sm:$0xf]
    %v1059 = vld [vmem:[#allocation8 + $0x1b8] sm:$0xff]
    %v1060 = vld [vmem:[#allocation8 + $0x1c0] sm:$0xff]
    %v1061 = vld [vmem:[#allocation8 + $0x1c8] sm:$0xf]
    %v1062 = vld [vmem:[#allocation8 + $0x1cc] sm:$0xff]
    %v1063 = vld [vmem:[#allocation8 + $0x1d4] sm:$0xff]
    %v1064 = vld [vmem:[#allocation8 + $0x1dc] sm:$0xf]
    %v1065 = vld [vmem:[#allocation8 + $0x1e0] sm:$0xff]
    %v1066 = vld [vmem:[#allocation8 + $0x1e8] sm:$0xff]
    %v1067 = vld [vmem:[#allocation8 + $0x1f0] sm:$0xf]
    %v1068 = vld [vmem:[#allocation8 + $0x1f4] sm:$0xff]
    %v1069 = vld [vmem:[#allocation8 + $0x1fc] sm:$0xff]
    %v1070 = vld [vmem:[#allocation8 + $0x204] sm:$0xf]
    %v1071 = vld [vmem:[#allocation8 + $0x208] sm:$0xff]
    %v1072 = vld [vmem:[#allocation8 + $0x210] sm:$0xff]
    %v1073 = vld [vmem:[#allocation8 + $0x218] sm:$0xf]
    %v1074 = vld [vmem:[#allocation8 + $0x21c] sm:$0xff]
    %v1075 = vld [vmem:[#allocation8 + $0x224] sm:$0xff]
    %v1076 = vld [vmem:[#allocation8 + $0x22c] sm:$0xf]
    %v1077 = vld [vmem:[#allocation8 + $0x230] sm:$0xff]
    %v1078 = vld [vmem:[#allocation8 + $0x238] sm:$0xff]
    %v1079 = vld [vmem:[#allocation8 + $0x240] sm:$0xf]
    %v1080 = vld [vmem:[#allocation8 + $0x244] sm:$0xff]
    %v1081 = vld [vmem:[#allocation8 + $0x24c] sm:$0xff]
    %v1082 = vld [vmem:[#allocation8 + $0x254] sm:$0xf]
    %v1083 = vld [vmem:[#allocation8 + $0x258] sm:$0xff]
    %v1084 = vld [vmem:[#allocation8 + $0x260] sm:$0xff]
    %v1085 = vld [vmem:[#allocation8 + $0x268] sm:$0xf]
    %v1086 = vld [vmem:[#allocation8 + $0x26c] sm:$0xff]
    %v1087 = vld [vmem:[#allocation8 + $0x274] sm:$0xff]
    %v1088 = vld [vmem:[#allocation8 + $0x27c] sm:$0xf]
    %v1089 = vld [vmem:[#allocation8 + $0x280] sm:$0xff]
    %v1090 = vld [vmem:[#allocation8 + $0x288] sm:$0xff]
    %v1091 = vld [vmem:[#allocation8 + $0x290] sm:$0xf]
    %v1092 = vld [vmem:[#allocation8 + $0x294] sm:$0xff]
    %v1093 = vld [vmem:[#allocation8 + $0x29c] sm:$0xff]
    %v1094 = vld [vmem:[#allocation8 + $0x2a4] sm:$0xf]
    %v1095 = vld [vmem:[#allocation8 + $0x2a8] sm:$0xff]
    %v1096 = vld [vmem:[#allocation8 + $0x2b0] sm:$0xff]
    %v1097 = vld [vmem:[#allocation8 + $0x2b8] sm:$0xf]
    %v1098 = vld [vmem:[#allocation8 + $0x2bc] sm:$0xff]
    %v1099 = vld [vmem:[#allocation8 + $0x2c4] sm:$0xff]
    %v1100 = vld [vmem:[#allocation8 + $0x2cc] sm:$0xf]
    %v1101 = vld [vmem:[#allocation8 + $0x2d0] sm:$0xff]
    %v1102 = vld [vmem:[#allocation8 + $0x2d8] sm:$0xff]
    %v1103 = vld [vmem:[#allocation8 + $0x2e0] sm:$0xf]
    %v1104 = vld [vmem:[#allocation8 + $0x2e4] sm:$0xff]
    %v1105 = vld [vmem:[#allocation8 + $0x2ec] sm:$0xff]
    %v1106 = vld [vmem:[#allocation8 + $0x2f4] sm:$0xf]
    %v1107 = vld [vmem:[#allocation8 + $0x2f8] sm:$0xff]
    %v1108 = vld [vmem:[#allocation8 + $0x300] sm:$0xff]
    %v1109 = vld [vmem:[#allocation8 + $0x308] sm:$0xf]
    %v1110 = vld [vmem:[#allocation8 + $0x30c] sm:$0xff]
    %v1111 = vld [vmem:[#allocation8 + $0x314] sm:$0xff]
    %v1112 = vld [vmem:[#allocation8 + $0x31c] sm:$0xf]
    %v1113 = vld [vmem:[#allocation8 + $0x320] sm:$0xff]
    %v1114 = vld [vmem:[#allocation8 + $0x328] sm:$0xff]
    %v1115 = vld [vmem:[#allocation8 + $0x330] sm:$0xf]
    %v1116 = vld [vmem:[#allocation8 + $0x334] sm:$0xff]
    %v1117 = vld [vmem:[#allocation8 + $0x33c] sm:$0xff]
    %v1118 = vld [vmem:[#allocation8 + $0x344] sm:$0xf]
    %v1119 = vld [vmem:[#allocation8 + $0x348] sm:$0xff]
    %v1120 = vld [vmem:[#allocation8 + $0x350] sm:$0xff]
    %v1121 = vld [vmem:[#allocation8 + $0x358] sm:$0xf]
    %v1122 = vld [vmem:[#allocation8 + $0x35c] sm:$0xff]
    %v1123 = vld [vmem:[#allocation8 + $0x364] sm:$0xff]
    %v1124 = vld [vmem:[#allocation8 + $0x36c] sm:$0xf]
    %v1125 = vld [vmem:[#allocation8 + $0x370] sm:$0xff]
    %v1126 = vld [vmem:[#allocation8 + $0x378] sm:$0xff]
    %v1127 = vld [vmem:[#allocation8 + $0x380] sm:$0xf]
    %v1128 = vld [vmem:[#allocation8 + $0x384] sm:$0xff]
    %v1129 = vld [vmem:[#allocation8 + $0x38c] sm:$0xff]
    %v1130 = vld [vmem:[#allocation8 + $0x394] sm:$0xf]
    %v1131 = vld [vmem:[#allocation8 + $0x398] sm:$0xff]
    %v1132 = vld [vmem:[#allocation8 + $0x3a0] sm:$0xff]
    %v1133 = vld [vmem:[#allocation8 + $0x3a8] sm:$0xf]
    %v1134 = vld [vmem:[#allocation8 + $0x3ac] sm:$0xff]
    %v1135 = vld [vmem:[#allocation8 + $0x3b4] sm:$0xff]
    %v1136 = vld [vmem:[#allocation8 + $0x3bc] sm:$0xf]
    %s1137 = scalar_lea.vmem [#allocation10], 5
    %v1138 = vld [vmem:[%s1137] ss:$8 sm:$0xf]
    %v1139 = vld [vmem:[%s1137] ss:$8 sm:$0x10]
    %v1140 = vor.u32 %v1138, %v1139
    %v1142 = vlaneseq
    %v1143 = vshrl.u32 %v1142, 7
    %v1144 = vsub.s32 0, %v1143
    %v1145 = vrot.slane %v1140, %v1144
    %v1146 = vlaneseq
    %v1147 = vshrl.u32 %v1146, 7
    %v1148 = vsub.s32 1, %v1147
    %v1149 = vrot.slane %v1140, %v1148
    %v1150 = vlaneseq
    %v1151 = vshrl.u32 %v1150, 7
    %v1152 = vsub.s32 2, %v1151
    %v1153 = vrot.slane %v1140, %v1152
    %v1154 = vlaneseq
    %v1155 = vshrl.u32 %v1154, 7
    %v1156 = vsub.s32 3, %v1155
    %v1157 = vrot.slane %v1140, %v1156
    %v1158 = vlaneseq
    %v1159 = vshrl.u32 %v1158, 7
    %v1160 = vsub.s32 4, %v1159
    %v1161 = vrot.slane %v1140, %v1160
    %v1311 = vunpack.c.l.b16 %v993
    %v1312 = vunpack.c.h.b16 %v993
    %v1313 = vunpack.c.l.b16 %v994
    %v1314 = vunpack.c.h.b16 %v994
    %v1315 = vunpack.c.l.b16 %v995
    %v1316 = vunpack.c.l.b16 %v996
    %v1317 = vunpack.c.h.b16 %v996
    %v1318 = vunpack.c.l.b16 %v997
    %v1319 = vunpack.c.h.b16 %v997
    %v1320 = vunpack.c.l.b16 %v998
    %v1321 = vunpack.c.l.b16 %v999
    %v1322 = vunpack.c.h.b16 %v999
    %v1323 = vunpack.c.l.b16 %v1000
    %v1324 = vunpack.c.h.b16 %v1000
    %v1325 = vunpack.c.l.b16 %v1001
    %v1326 = vunpack.c.l.b16 %v1002
    %v1327 = vunpack.c.h.b16 %v1002
    %v1328 = vunpack.c.l.b16 %v1003
    %v1329 = vunpack.c.h.b16 %v1003
    %v1330 = vunpack.c.l.b16 %v1004
    %v1331 = vunpack.c.l.b16 %v1005
    %v1332 = vunpack.c.h.b16 %v1005
    %v1333 = vunpack.c.l.b16 %v1006
    %v1334 = vunpack.c.h.b16 %v1006
    %v1335 = vunpack.c.l.b16 %v1007
    %v1336 = vunpack.c.l.b16 %v1008
    %v1337 = vunpack.c.h.b16 %v1008
    %v1338 = vunpack.c.l.b16 %v1009
    %v1339 = vunpack.c.h.b16 %v1009
    %v1340 = vunpack.c.l.b16 %v1010
    %v1341 = vunpack.c.l.b16 %v1011
    %v1342 = vunpack.c.h.b16 %v1011
    %v1343 = vunpack.c.l.b16 %v1012
    %v1344 = vunpack.c.h.b16 %v1012
    %v1345 = vunpack.c.l.b16 %v1013
    %v1346 = vunpack.c.l.b16 %v1014
    %v1347 = vunpack.c.h.b16 %v1014
    %v1348 = vunpack.c.l.b16 %v1015
    %v1349 = vunpack.c.h.b16 %v1015
    %v1350 = vunpack.c.l.b16 %v1016
    %v1351 = vunpack.c.l.b16 %v1017
    %v1352 = vunpack.c.h.b16 %v1017
    %v1353 = vunpack.c.l.b16 %v1018
    %v1354 = vunpack.c.h.b16 %v1018
    %v1355 = vunpack.c.l.b16 %v1019
    %v1356 = vunpack.c.l.b16 %v1020
    %v1357 = vunpack.c.h.b16 %v1020
    %v1358 = vunpack.c.l.b16 %v1021
    %v1359 = vunpack.c.h.b16 %v1021
    %v1360 = vunpack.c.l.b16 %v1022
    %v1361 = vunpack.c.l.b16 %v1023
    %v1362 = vunpack.c.h.b16 %v1023
    %v1363 = vunpack.c.l.b16 %v1024
    %v1364 = vunpack.c.h.b16 %v1024
    %v1365 = vunpack.c.l.b16 %v1025
    %v1366 = vunpack.c.l.b16 %v1026
    %v1367 = vunpack.c.h.b16 %v1026
    %v1368 = vunpack.c.l.b16 %v1027
    %v1369 = vunpack.c.h.b16 %v1027
    %v1370 = vunpack.c.l.b16 %v1028
    %v1371 = vunpack.c.l.b16 %v1029
    %v1372 = vunpack.c.h.b16 %v1029
    %v1373 = vunpack.c.l.b16 %v1030
    %v1374 = vunpack.c.h.b16 %v1030
    %v1375 = vunpack.c.l.b16 %v1031
    %v1376 = vunpack.c.l.b16 %v1032
    %v1377 = vunpack.c.h.b16 %v1032
    %v1378 = vunpack.c.l.b16 %v1033
    %v1379 = vunpack.c.h.b16 %v1033
    %v1380 = vunpack.c.l.b16 %v1034
    %v1381 = vunpack.c.l.b16 %v1035
    %v1382 = vunpack.c.h.b16 %v1035
    %v1383 = vunpack.c.l.b16 %v1036
    %v1384 = vunpack.c.h.b16 %v1036
    %v1385 = vunpack.c.l.b16 %v1037
    %v1386 = vunpack.c.l.b16 %v1038
    %v1387 = vunpack.c.h.b16 %v1038
    %v1388 = vunpack.c.l.b16 %v1039
    %v1389 = vunpack.c.h.b16 %v1039
    %v1390 = vunpack.c.l.b16 %v1040
    %v1391 = vunpack.c.l.b16 %v1041
    %v1392 = vunpack.c.h.b16 %v1041
    %v1393 = vunpack.c.l.b16 %v1042
    %v1394 = vunpack.c.h.b16 %v1042
    %v1395 = vunpack.c.l.b16 %v1043
    %v1396 = vunpack.c.l.b16 %v1044
    %v1397 = vunpack.c.h.b16 %v1044
    %v1398 = vunpack.c.l.b16 %v1045
    %v1399 = vunpack.c.h.b16 %v1045
    %v1400 = vunpack.c.l.b16 %v1046
    %v1401 = vunpack.c.l.b16 %v1047
    %v1402 = vunpack.c.h.b16 %v1047
    %v1403 = vunpack.c.l.b16 %v1048
    %v1404 = vunpack.c.h.b16 %v1048
    %v1405 = vunpack.c.l.b16 %v1049
    %v1406 = vunpack.c.l.b16 %v1050
    %v1407 = vunpack.c.h.b16 %v1050
    %v1408 = vunpack.c.l.b16 %v1051
    %v1409 = vunpack.c.h.b16 %v1051
    %v1410 = vunpack.c.l.b16 %v1052
    %v1411 = vunpack.c.l.b16 %v1053
    %v1412 = vunpack.c.h.b16 %v1053
    %v1413 = vunpack.c.l.b16 %v1054
    %v1414 = vunpack.c.h.b16 %v1054
    %v1415 = vunpack.c.l.b16 %v1055
    %v1416 = vunpack.c.l.b16 %v1056
    %v1417 = vunpack.c.h.b16 %v1056
    %v1418 = vunpack.c.l.b16 %v1057
    %v1419 = vunpack.c.h.b16 %v1057
    %v1420 = vunpack.c.l.b16 %v1058
    %v1421 = vunpack.c.l.b16 %v1059
    %v1422 = vunpack.c.h.b16 %v1059
    %v1423 = vunpack.c.l.b16 %v1060
    %v1424 = vunpack.c.h.b16 %v1060
    %v1425 = vunpack.c.l.b16 %v1061
    %v1426 = vunpack.c.l.b16 %v1062
    %v1427 = vunpack.c.h.b16 %v1062
    %v1428 = vunpack.c.l.b16 %v1063
    %v1429 = vunpack.c.h.b16 %v1063
    %v1430 = vunpack.c.l.b16 %v1064
    %v1431 = vunpack.c.l.b16 %v1065
    %v1432 = vunpack.c.h.b16 %v1065
    %v1433 = vunpack.c.l.b16 %v1066
    %v1434 = vunpack.c.h.b16 %v1066
    %v1435 = vunpack.c.l.b16 %v1067
    %v1436 = vunpack.c.l.b16 %v1068
    %v1437 = vunpack.c.h.b16 %v1068
    %v1438 = vunpack.c.l.b16 %v1069
    %v1439 = vunpack.c.h.b16 %v1069
    %v1440 = vunpack.c.l.b16 %v1070
    %v1441 = vunpack.c.l.b16 %v1071
    %v1442 = vunpack.c.h.b16 %v1071
    %v1443 = vunpack.c.l.b16 %v1072
    %v1444 = vunpack.c.h.b16 %v1072
    %v1445 = vunpack.c.l.b16 %v1073
    %v1446 = vunpack.c.l.b16 %v1074
    %v1447 = vunpack.c.h.b16 %v1074
    %v1448 = vunpack.c.l.b16 %v1075
    %v1449 = vunpack.c.h.b16 %v1075
    %v1450 = vunpack.c.l.b16 %v1076
    %v1451 = vunpack.c.l.b16 %v1077
    %v1452 = vunpack.c.h.b16 %v1077
    %v1453 = vunpack.c.l.b16 %v1078
    %v1454 = vunpack.c.h.b16 %v1078
    %v1455 = vunpack.c.l.b16 %v1079
    %v1456 = vunpack.c.l.b16 %v1080
    %v1457 = vunpack.c.h.b16 %v1080
    %v1458 = vunpack.c.l.b16 %v1081
    %v1459 = vunpack.c.h.b16 %v1081
    %v1460 = vunpack.c.l.b16 %v1082
    %v1461 = vunpack.c.l.b16 %v1083
    %v1462 = vunpack.c.h.b16 %v1083
    %v1463 = vunpack.c.l.b16 %v1084
    %v1464 = vunpack.c.h.b16 %v1084
    %v1465 = vunpack.c.l.b16 %v1085
    %v1466 = vunpack.c.l.b16 %v1086
    %v1467 = vunpack.c.h.b16 %v1086
    %v1468 = vunpack.c.l.b16 %v1087
    %v1469 = vunpack.c.h.b16 %v1087
    %v1470 = vunpack.c.l.b16 %v1088
    %v1471 = vunpack.c.l.b16 %v1089
    %v1472 = vunpack.c.h.b16 %v1089
    %v1473 = vunpack.c.l.b16 %v1090
    %v1474 = vunpack.c.h.b16 %v1090
    %v1475 = vunpack.c.l.b16 %v1091
    %v1476 = vunpack.c.l.b16 %v1092
    %v1477 = vunpack.c.h.b16 %v1092
    %v1478 = vunpack.c.l.b16 %v1093
    %v1479 = vunpack.c.h.b16 %v1093
    %v1480 = vunpack.c.l.b16 %v1094
    %v1481 = vunpack.c.l.b16 %v1095
    %v1482 = vunpack.c.h.b16 %v1095
    %v1483 = vunpack.c.l.b16 %v1096
    %v1484 = vunpack.c.h.b16 %v1096
    %v1485 = vunpack.c.l.b16 %v1097
    %v1486 = vunpack.c.l.b16 %v1098
    %v1487 = vunpack.c.h.b16 %v1098
    %v1488 = vunpack.c.l.b16 %v1099
    %v1489 = vunpack.c.h.b16 %v1099
    %v1490 = vunpack.c.l.b16 %v1100
    %v1491 = vunpack.c.l.b16 %v1101
    %v1492 = vunpack.c.h.b16 %v1101
    %v1493 = vunpack.c.l.b16 %v1102
    %v1494 = vunpack.c.h.b16 %v1102
    %v1495 = vunpack.c.l.b16 %v1103
    %v1496 = vunpack.c.l.b16 %v1104
    %v1497 = vunpack.c.h.b16 %v1104
    %v1498 = vunpack.c.l.b16 %v1105
    %v1499 = vunpack.c.h.b16 %v1105
    %v1500 = vunpack.c.l.b16 %v1106
    %v1501 = vunpack.c.l.b16 %v1107
    %v1502 = vunpack.c.h.b16 %v1107
    %v1503 = vunpack.c.l.b16 %v1108
    %v1504 = vunpack.c.h.b16 %v1108
    %v1505 = vunpack.c.l.b16 %v1109
    %v1506 = vunpack.c.l.b16 %v1110
    %v1507 = vunpack.c.h.b16 %v1110
    %v1508 = vunpack.c.l.b16 %v1111
    %v1509 = vunpack.c.h.b16 %v1111
    %v1510 = vunpack.c.l.b16 %v1112
    %v1511 = vunpack.c.l.b16 %v1113
    %v1512 = vunpack.c.h.b16 %v1113
    %v1513 = vunpack.c.l.b16 %v1114
    %v1514 = vunpack.c.h.b16 %v1114
    %v1515 = vunpack.c.l.b16 %v1115
    %v1516 = vunpack.c.l.b16 %v1116
    %v1517 = vunpack.c.h.b16 %v1116
    %v1518 = vunpack.c.l.b16 %v1117
    %v1519 = vunpack.c.h.b16 %v1117
    %v1520 = vunpack.c.l.b16 %v1118
    %v1521 = vunpack.c.l.b16 %v1119
    %v1522 = vunpack.c.h.b16 %v1119
    %v1523 = vunpack.c.l.b16 %v1120
    %v1524 = vunpack.c.h.b16 %v1120
    %v1525 = vunpack.c.l.b16 %v1121
    %v1526 = vunpack.c.l.b16 %v1122
    %v1527 = vunpack.c.h.b16 %v1122
    %v1528 = vunpack.c.l.b16 %v1123
    %v1529 = vunpack.c.h.b16 %v1123
    %v1530 = vunpack.c.l.b16 %v1124
    %v1531 = vunpack.c.l.b16 %v1125
    %v1532 = vunpack.c.h.b16 %v1125
    %v1533 = vunpack.c.l.b16 %v1126
    %v1534 = vunpack.c.h.b16 %v1126
    %v1535 = vunpack.c.l.b16 %v1127
    %v1536 = vunpack.c.l.b16 %v1128
    %v1537 = vunpack.c.h.b16 %v1128
    %v1538 = vunpack.c.l.b16 %v1129
    %v1539 = vunpack.c.h.b16 %v1129
    %v1540 = vunpack.c.l.b16 %v1130
    %v1541 = vunpack.c.l.b16 %v1131
    %v1542 = vunpack.c.h.b16 %v1131
    %v1543 = vunpack.c.l.b16 %v1132
    %v1544 = vunpack.c.h.b16 %v1132
    %v1545 = vunpack.c.l.b16 %v1133
    %v1546 = vunpack.c.l.b16 %v1134
    %v1547 = vunpack.c.h.b16 %v1134
    %v1548 = vunpack.c.l.b16 %v1135
    %v1549 = vunpack.c.h.b16 %v1135
    %v1550 = vunpack.c.l.b16 %v1136
    %v1551 = vpack.c.b16 %v1316, %v1311
    %v1552 = vpack.c.b16 %v1317, %v1312
    %v1553 = vpack.c.b16 %v1318, %v1313
    %v1554 = vpack.c.b16 %v1319, %v1314
    %v1555 = vpack.c.b16 %v1320, %v1315
    %v1556 = vpack.c.b16 %v1326, %v1321
    %v1557 = vpack.c.b16 %v1327, %v1322
    %v1558 = vpack.c.b16 %v1328, %v1323
    %v1559 = vpack.c.b16 %v1329, %v1324
    %v1560 = vpack.c.b16 %v1330, %v1325
    %v1561 = vpack.c.b16 %v1336, %v1331
    %v1562 = vpack.c.b16 %v1337, %v1332
    %v1563 = vpack.c.b16 %v1338, %v1333
    %v1564 = vpack.c.b16 %v1339, %v1334
    %v1565 = vpack.c.b16 %v1340, %v1335
    %v1566 = vpack.c.b16 %v1346, %v1341
    %v1567 = vpack.c.b16 %v1347, %v1342
    %v1568 = vpack.c.b16 %v1348, %v1343
    %v1569 = vpack.c.b16 %v1349, %v1344
    %v1570 = vpack.c.b16 %v1350, %v1345
    %v1571 = vpack.c.b16 %v1356, %v1351
    %v1572 = vpack.c.b16 %v1357, %v1352
    %v1573 = vpack.c.b16 %v1358, %v1353
    %v1574 = vpack.c.b16 %v1359, %v1354
    %v1575 = vpack.c.b16 %v1360, %v1355
    %v1576 = vpack.c.b16 %v1366, %v1361
    %v1577 = vpack.c.b16 %v1367, %v1362
    %v1578 = vpack.c.b16 %v1368, %v1363
    %v1579 = vpack.c.b16 %v1369, %v1364
    %v1580 = vpack.c.b16 %v1370, %v1365
    %v1581 = vpack.c.b16 %v1376, %v1371
    %v1582 = vpack.c.b16 %v1377, %v1372
    %v1583 = vpack.c.b16 %v1378, %v1373
    %v1584 = vpack.c.b16 %v1379, %v1374
    %v1585 = vpack.c.b16 %v1380, %v1375
    %v1586 = vpack.c.b16 %v1386, %v1381
    %v1587 = vpack.c.b16 %v1387, %v1382
    %v1588 = vpack.c.b16 %v1388, %v1383
    %v1589 = vpack.c.b16 %v1389, %v1384
    %v1590 = vpack.c.b16 %v1390, %v1385
    %v1591 = vpack.c.b16 %v1396, %v1391
    %v1592 = vpack.c.b16 %v1397, %v1392
    %v1593 = vpack.c.b16 %v1398, %v1393
    %v1594 = vpack.c.b16 %v1399, %v1394
    %v1595 = vpack.c.b16 %v1400, %v1395
    %v1596 = vpack.c.b16 %v1406, %v1401
    %v1597 = vpack.c.b16 %v1407, %v1402
    %v1598 = vpack.c.b16 %v1408, %v1403
    %v1599 = vpack.c.b16 %v1409, %v1404
    %v1600 = vpack.c.b16 %v1410, %v1405
    %v1601 = vpack.c.b16 %v1416, %v1411
    %v1602 = vpack.c.b16 %v1417, %v1412
    %v1603 = vpack.c.b16 %v1418, %v1413
    %v1604 = vpack.c.b16 %v1419, %v1414
    %v1605 = vpack.c.b16 %v1420, %v1415
    %v1606 = vpack.c.b16 %v1426, %v1421
    %v1607 = vpack.c.b16 %v1427, %v1422
    %v1608 = vpack.c.b16 %v1428, %v1423
    %v1609 = vpack.c.b16 %v1429, %v1424
    %v1610 = vpack.c.b16 %v1430, %v1425
    %v1611 = vpack.c.b16 %v1436, %v1431
    %v1612 = vpack.c.b16 %v1437, %v1432
    %v1613 = vpack.c.b16 %v1438, %v1433
    %v1614 = vpack.c.b16 %v1439, %v1434
    %v1615 = vpack.c.b16 %v1440, %v1435
    %v1616 = vpack.c.b16 %v1446, %v1441
    %v1617 = vpack.c.b16 %v1447, %v1442
    %v1618 = vpack.c.b16 %v1448, %v1443
    %v1619 = vpack.c.b16 %v1449, %v1444
    %v1620 = vpack.c.b16 %v1450, %v1445
    %v1621 = vpack.c.b16 %v1456, %v1451
    %v1622 = vpack.c.b16 %v1457, %v1452
    %v1623 = vpack.c.b16 %v1458, %v1453
    %v1624 = vpack.c.b16 %v1459, %v1454
    %v1625 = vpack.c.b16 %v1460, %v1455
    %v1626 = vpack.c.b16 %v1466, %v1461
    %v1627 = vpack.c.b16 %v1467, %v1462
    %v1628 = vpack.c.b16 %v1468, %v1463
    %v1629 = vpack.c.b16 %v1469, %v1464
    %v1630 = vpack.c.b16 %v1470, %v1465
    %v1631 = vpack.c.b16 %v1476, %v1471
    %v1632 = vpack.c.b16 %v1477, %v1472
    %v1633 = vpack.c.b16 %v1478, %v1473
    %v1634 = vpack.c.b16 %v1479, %v1474
    %v1635 = vpack.c.b16 %v1480, %v1475
    %v1636 = vpack.c.b16 %v1486, %v1481
    %v1637 = vpack.c.b16 %v1487, %v1482
    %v1638 = vpack.c.b16 %v1488, %v1483
    %v1639 = vpack.c.b16 %v1489, %v1484
    %v1640 = vpack.c.b16 %v1490, %v1485
    %v1641 = vpack.c.b16 %v1496, %v1491
    %v1642 = vpack.c.b16 %v1497, %v1492
    %v1643 = vpack.c.b16 %v1498, %v1493
    %v1644 = vpack.c.b16 %v1499, %v1494
    %v1645 = vpack.c.b16 %v1500, %v1495
    %v1646 = vpack.c.b16 %v1506, %v1501
    %v1647 = vpack.c.b16 %v1507, %v1502
    %v1648 = vpack.c.b16 %v1508, %v1503
    %v1649 = vpack.c.b16 %v1509, %v1504
    %v1650 = vpack.c.b16 %v1510, %v1505
    %v1651 = vpack.c.b16 %v1516, %v1511
    %v1652 = vpack.c.b16 %v1517, %v1512
    %v1653 = vpack.c.b16 %v1518, %v1513
    %v1654 = vpack.c.b16 %v1519, %v1514
    %v1655 = vpack.c.b16 %v1520, %v1515
    %v1656 = vpack.c.b16 %v1526, %v1521
    %v1657 = vpack.c.b16 %v1527, %v1522
    %v1658 = vpack.c.b16 %v1528, %v1523
    %v1659 = vpack.c.b16 %v1529, %v1524
    %v1660 = vpack.c.b16 %v1530, %v1525
    %v1661 = vpack.c.b16 %v1536, %v1531
    %v1662 = vpack.c.b16 %v1537, %v1532
    %v1663 = vpack.c.b16 %v1538, %v1533
    %v1664 = vpack.c.b16 %v1539, %v1534
    %v1665 = vpack.c.b16 %v1540, %v1535
    %v1666 = vpack.c.b16 %v1546, %v1541
    %v1667 = vpack.c.b16 %v1547, %v1542
    %v1668 = vpack.c.b16 %v1548, %v1543
    %v1669 = vpack.c.b16 %v1549, %v1544
    %v1670 = vpack.c.b16 %v1550, %v1545
    %1791 = vmatprep.subr.bf16.mxu0 %v1587
    %1792 = vmatpush1.bf16.msra.mxu0 %v1586
    %1793 = vmatprep.subr.bf16.mxu0 %v1582
    %1794 = vmatpush1.bf16.msra.mxu0 %v1581
    %1795 = vmatprep.subr.bf16.mxu0 %v1577
    %1796 = vmatpush1.bf16.msra.mxu0 %v1576
    %1797 = vmatprep.subr.bf16.mxu0 %v1572
    %1798 = vmatpush1.bf16.msra.mxu0 %v1571
    %1799 = vmatprep.subr.bf16.mxu0 %v1567
    %1800 = vmatpush1.bf16.msra.mxu0 %v1566
    %1801 = vmatprep.subr.bf16.mxu0 %v1562
    %1802 = vmatpush1.bf16.msra.mxu0 %v1561
    %1803 = vmatprep.subr.bf16.mxu0 %v1557
    %1804 = vmatpush1.bf16.msra.mxu0 %v1556
    %1805 = vmatprep.subr.bf16.mxu0 %v1552
    %1806 = vmatpush1.bf16.msra.mxu0 %v1551
    %1807 = vmatprep.subr.bf16.mxu0 %v1627
    %1808 = vmatpush2.bf16.msra.mxu0 %v1626
    %1809 = vmatprep.subr.bf16.mxu0 %v1622
    %1810 = vmatpush2.bf16.msra.mxu0 %v1621
    %1811 = vmatprep.subr.bf16.mxu0 %v1617
    %1812 = vmatpush2.bf16.msra.mxu0 %v1616
    %1813 = vmatprep.subr.bf16.mxu0 %v1612
    %1814 = vmatpush2.bf16.msra.mxu0 %v1611
    %1815 = vmatprep.subr.bf16.mxu0 %v1607
    %1816 = vmatpush2.bf16.msra.mxu0 %v1606
    %1817 = vmatprep.subr.bf16.mxu0 %v1602
    %1818 = vmatpush2.bf16.msra.mxu0 %v1601
    %1819 = vmatprep.subr.bf16.mxu0 %v1597
    %1820 = vmatpush2.bf16.msra.mxu0 %v1596
    %1821 = vmatprep.subr.bf16.mxu0 %v1592
    %1822 = vmatpush2.bf16.msra.mxu0 %v1591
    %1823 = vmatprep.mubr.bf16.mxu0 %v991
    %1824 = vmatmul.mubr.bf16.gmra.mxu0 %v990
    %v1825 = vpop.f32.mrf.mxu0
    %v1826 = vadd.f32 %v1145, %v1825
    %v1827 = vpop.f32.mrf.mxu0
    %v1828 = vadd.f32 %v1149, %v1827
    %v1829 = vpop.f32.mrf.mxu0
    %v1830 = vpop.f32.mrf.mxu0
    %1831 = vdwg.mxu0
    %1832 = vmatprep.subr.bf16.mxu0 %v1667
    %1833 = vmatpush1.bf16.msra.mxu0 %v1666
    %1834 = vmatprep.subr.bf16.mxu0 %v1662
    %1835 = vmatpush1.bf16.msra.mxu0 %v1661
    %1836 = vmatprep.subr.bf16.mxu0 %v1657
    %1837 = vmatpush1.bf16.msra.mxu0 %v1656
    %1838 = vmatprep.subr.bf16.mxu0 %v1652
    %1839 = vmatpush1.bf16.msra.mxu0 %v1651
    %1840 = vmatprep.subr.bf16.mxu0 %v1647
    %1841 = vmatpush1.bf16.msra.mxu0 %v1646
    %1842 = vmatprep.subr.bf16.mxu0 %v1642
    %1843 = vmatpush1.bf16.msra.mxu0 %v1641
    %1844 = vmatprep.subr.bf16.mxu0 %v1637
    %1845 = vmatpush1.bf16.msra.mxu0 %v1636
    %1846 = vmatprep.subr.bf16.mxu0 %v1632
    %1847 = vmatpush1.bf16.msra.mxu0 %v1631
    %1848 = vmatprep.subr.bf16.mxu0 0
    %1849 = vmatpush2.bf16.msra.mxu0 0
    %1850 = vmatprep.subr.bf16.mxu0 0
    %1851 = vmatpush2.bf16.msra.mxu0 0
    %1852 = vmatprep.subr.bf16.mxu0 0
    %1853 = vmatpush2.bf16.msra.mxu0 0
    %1854 = vmatprep.subr.bf16.mxu0 0
    %1855 = vmatpush2.bf16.msra.mxu0 0
    %1856 = vmatprep.subr.bf16.mxu0 0
    %1857 = vmatpush2.bf16.msra.mxu0 0
    %1858 = vmatprep.subr.bf16.mxu0 0
    %1859 = vmatpush2.bf16.msra.mxu0 0
    %1860 = vmatprep.subr.bf16.mxu0 0
    %1861 = vmatpush2.bf16.msra.mxu0 0
    %1862 = vmatprep.subr.bf16.mxu0 0
    %1863 = vmatpush2.bf16.msra.mxu0 0
    %1864 = vmatprep.mubr.bf16.mxu0 0
    %1865 = vmatmul.mubr.bf16.gmra.mxu0 %v992
    %v1866 = vpop.f32.mrf.mxu0
    %v1867 = vadd.f32 %v1826, %v1866
    %v1868 = vpop.f32.mrf.mxu0
    %v1869 = vadd.f32 %v1828, %v1868
    %v1870 = vpop.f32.mrf.mxu0
    %v1871 = vpop.f32.mrf.mxu0
    %1872 = vdwg.mxu0
    %1873 = vmatprep.subr.bf16.mxu0 %v1589
    %1874 = vmatpush1.bf16.msra.mxu0 %v1588
    %1875 = vmatprep.subr.bf16.mxu0 %v1584
    %1876 = vmatpush1.bf16.msra.mxu0 %v1583
    %1877 = vmatprep.subr.bf16.mxu0 %v1579
    %1878 = vmatpush1.bf16.msra.mxu0 %v1578
    %1879 = vmatprep.subr.bf16.mxu0 %v1574
    %1880 = vmatpush1.bf16.msra.mxu0 %v1573
    %1881 = vmatprep.subr.bf16.mxu0 %v1569
    %1882 = vmatpush1.bf16.msra.mxu0 %v1568
    %1883 = vmatprep.subr.bf16.mxu0 %v1564
    %1884 = vmatpush1.bf16.msra.mxu0 %v1563
    %1885 = vmatprep.subr.bf16.mxu0 %v1559
    %1886 = vmatpush1.bf16.msra.mxu0 %v1558
    %1887 = vmatprep.subr.bf16.mxu0 %v1554
    %1888 = vmatpush1.bf16.msra.mxu0 %v1553
    %1889 = vmatprep.subr.bf16.mxu0 %v1629
    %1890 = vmatpush2.bf16.msra.mxu0 %v1628
    %1891 = vmatprep.subr.bf16.mxu0 %v1624
    %1892 = vmatpush2.bf16.msra.mxu0 %v1623
    %1893 = vmatprep.subr.bf16.mxu0 %v1619
    %1894 = vmatpush2.bf16.msra.mxu0 %v1618
    %1895 = vmatprep.subr.bf16.mxu0 %v1614
    %1896 = vmatpush2.bf16.msra.mxu0 %v1613
    %1897 = vmatprep.subr.bf16.mxu0 %v1609
    %1898 = vmatpush2.bf16.msra.mxu0 %v1608
    %1899 = vmatprep.subr.bf16.mxu0 %v1604
    %1900 = vmatpush2.bf16.msra.mxu0 %v1603
    %1901 = vmatprep.subr.bf16.mxu0 %v1599
    %1902 = vmatpush2.bf16.msra.mxu0 %v1598
    %1903 = vmatprep.subr.bf16.mxu0 %v1594
    %1904 = vmatpush2.bf16.msra.mxu0 %v1593
    %1905 = vmatprep.mubr.bf16.mxu0 %v991
    %1906 = vmatmul.mubr.bf16.gmra.mxu0 %v990
    %v1907 = vpop.f32.mrf.mxu0
    %v1908 = vadd.f32 %v1153, %v1907
    %v1909 = vpop.f32.mrf.mxu0
    %v1910 = vadd.f32 %v1157, %v1909
    %v1911 = vpop.f32.mrf.mxu0
    %v1912 = vpop.f32.mrf.mxu0
    %1913 = vdwg.mxu0
    %1914 = vmatprep.subr.bf16.mxu0 %v1669
    %1915 = vmatpush1.bf16.msra.mxu0 %v1668
    %1916 = vmatprep.subr.bf16.mxu0 %v1664
    %1917 = vmatpush1.bf16.msra.mxu0 %v1663
    %1918 = vmatprep.subr.bf16.mxu0 %v1659
    %1919 = vmatpush1.bf16.msra.mxu0 %v1658
    %1920 = vmatprep.subr.bf16.mxu0 %v1654
    %1921 = vmatpush1.bf16.msra.mxu0 %v1653
    %1922 = vmatprep.subr.bf16.mxu0 %v1649
    %1923 = vmatpush1.bf16.msra.mxu0 %v1648
    %1924 = vmatprep.subr.bf16.mxu0 %v1644
    %1925 = vmatpush1.bf16.msra.mxu0 %v1643
    %1926 = vmatprep.subr.bf16.mxu0 %v1639
    %1927 = vmatpush1.bf16.msra.mxu0 %v1638
    %1928 = vmatprep.subr.bf16.mxu0 %v1634
    %1929 = vmatpush1.bf16.msra.mxu0 %v1633
    %1930 = vmatprep.subr.bf16.mxu0 0
    %1931 = vmatpush2.bf16.msra.mxu0 0
    %1932 = vmatprep.subr.bf16.mxu0 0
    %1933 = vmatpush2.bf16.msra.mxu0 0
    %1934 = vmatprep.subr.bf16.mxu0 0
    %1935 = vmatpush2.bf16.msra.mxu0 0
    %1936 = vmatprep.subr.bf16.mxu0 0
    %1937 = vmatpush2.bf16.msra.mxu0 0
    %1938 = vmatprep.subr.bf16.mxu0 0
    %1939 = vmatpush2.bf16.msra.mxu0 0
    %1940 = vmatprep.subr.bf16.mxu0 0
    %1941 = vmatpush2.bf16.msra.mxu0 0
    %1942 = vmatprep.subr.bf16.mxu0 0
    %1943 = vmatpush2.bf16.msra.mxu0 0
    %1944 = vmatprep.subr.bf16.mxu0 0
    %1945 = vmatpush2.bf16.msra.mxu0 0
    %1946 = vmatprep.mubr.bf16.mxu0 0
    %1947 = vmatmul.mubr.bf16.gmra.mxu0 %v992
    %v1948 = vpop.f32.mrf.mxu0
    %v1949 = vadd.f32 %v1908, %v1948
    %v1950 = vpop.f32.mrf.mxu0
    %v1951 = vadd.f32 %v1910, %v1950
    %v1952 = vpop.f32.mrf.mxu0
    %v1953 = vpop.f32.mrf.mxu0
    %1954 = vdwg.mxu0
    %1955 = vmatprep.subr.bf16.mxu0 0
    %1956 = vmatpush1.bf16.msra.mxu0 %v1590
    %1957 = vmatprep.subr.bf16.mxu0 0
    %1958 = vmatpush1.bf16.msra.mxu0 %v1585
    %1959 = vmatprep.subr.bf16.mxu0 0
    %1960 = vmatpush1.bf16.msra.mxu0 %v1580
    %1961 = vmatprep.subr.bf16.mxu0 0
    %1962 = vmatpush1.bf16.msra.mxu0 %v1575
    %1963 = vmatprep.subr.bf16.mxu0 0
    %1964 = vmatpush1.bf16.msra.mxu0 %v1570
    %1965 = vmatprep.subr.bf16.mxu0 0
    %1966 = vmatpush1.bf16.msra.mxu0 %v1565
    %1967 = vmatprep.subr.bf16.mxu0 0
    %1968 = vmatpush1.bf16.msra.mxu0 %v1560
    %1969 = vmatprep.subr.bf16.mxu0 0
    %1970 = vmatpush1.bf16.msra.mxu0 %v1555
    %1971 = vmatprep.subr.bf16.mxu0 0
    %1972 = vmatpush2.bf16.msra.mxu0 %v1630
    %1973 = vmatprep.subr.bf16.mxu0 0
    %1974 = vmatpush2.bf16.msra.mxu0 %v1625
    %1975 = vmatprep.subr.bf16.mxu0 0
    %1976 = vmatpush2.bf16.msra.mxu0 %v1620
    %1977 = vmatprep.subr.bf16.mxu0 0
    %1978 = vmatpush2.bf16.msra.mxu0 %v1615
    %1979 = vmatprep.subr.bf16.mxu0 0
    %1980 = vmatpush2.bf16.msra.mxu0 %v1610
    %1981 = vmatprep.subr.bf16.mxu0 0
    %1982 = vmatpush2.bf16.msra.mxu0 %v1605
    %1983 = vmatprep.subr.bf16.mxu0 0
    %1984 = vmatpush2.bf16.msra.mxu0 %v1600
    %1985 = vmatprep.subr.bf16.mxu0 0
    %1986 = vmatpush2.bf16.msra.mxu0 %v1595
    %1987 = vmatprep.mubr.bf16.mxu0 %v991
    %1988 = vmatmul.mubr.bf16.gmra.mxu0 %v990
    %v1989 = vpop.f32.mrf.mxu0
    %v1990 = vadd.f32 %v1161, %v1989
    %v1991 = vpop.f32.mrf.mxu0
    %v1992 = vpop.f32.mrf.mxu0
    %v1993 = vpop.f32.mrf.mxu0
    %1994 = vdwg.mxu0
    %1995 = vmatprep.subr.bf16.mxu0 0
    %1996 = vmatpush1.bf16.msra.mxu0 %v1670
    %1997 = vmatprep.subr.bf16.mxu0 0
    %1998 = vmatpush1.bf16.msra.mxu0 %v1665
    %1999 = vmatprep.subr.bf16.mxu0 0
    %2000 = vmatpush1.bf16.msra.mxu0 %v1660
    %2001 = vmatprep.subr.bf16.mxu0 0
    %2002 = vmatpush1.bf16.msra.mxu0 %v1655
    %2003 = vmatprep.subr.bf16.mxu0 0
    %2004 = vmatpush1.bf16.msra.mxu0 %v1650
    %2005 = vmatprep.subr.bf16.mxu0 0
    %2006 = vmatpush1.bf16.msra.mxu0 %v1645
    %2007 = vmatprep.subr.bf16.mxu0 0
    %2008 = vmatpush1.bf16.msra.mxu0 %v1640
    %2009 = vmatprep.subr.bf16.mxu0 0
    %2010 = vmatpush1.bf16.msra.mxu0 %v1635
    %2011 = vmatprep.subr.bf16.mxu0 0
    %2012 = vmatpush2.bf16.msra.mxu0 0
    %2013 = vmatprep.subr.bf16.mxu0 0
    %2014 = vmatpush2.bf16.msra.mxu0 0
    %2015 = vmatprep.subr.bf16.mxu0 0
    %2016 = vmatpush2.bf16.msra.mxu0 0
    %2017 = vmatprep.subr.bf16.mxu0 0
    %2018 = vmatpush2.bf16.msra.mxu0 0
    %2019 = vmatprep.subr.bf16.mxu0 0
    %2020 = vmatpush2.bf16.msra.mxu0 0
    %2021 = vmatprep.subr.bf16.mxu0 0
    %2022 = vmatpush2.bf16.msra.mxu0 0
    %2023 = vmatprep.subr.bf16.mxu0 0
    %2024 = vmatpush2.bf16.msra.mxu0 0
    %2025 = vmatprep.subr.bf16.mxu0 0
    %2026 = vmatpush2.bf16.msra.mxu0 0
    %2027 = vmatprep.mubr.bf16.mxu0 0
    %2028 = vmatmul.mubr.bf16.gmra.mxu0 %v992
    %v2029 = vpop.f32.mrf.mxu0
    %v2030 = vadd.f32 %v1990, %v2029
    %v2031 = vpop.f32.mrf.mxu0
    %v2032 = vpop.f32.mrf.mxu0
    %v2033 = vpop.f32.mrf.mxu0
    %2034 = vdwg.mxu0
    %v2035 = vmax.f32 %v1867, 0.0
    %v2036 = vmax.f32 %v1869, 0.0
    %v2037 = vmax.f32 %v1949, 0.0
    %v2038 = vmax.f32 %v1951, 0.0
    %v2039 = vmax.f32 %v2030, 0.0
    %v2040 = vpack.c.bf16 %v2035, %v2035
    %v2041 = vpack.c.bf16 %v2036, %v2036
    %v2042 = vpack.c.bf16 %v2037, %v2037
    %v2043 = vpack.c.bf16 %v2038, %v2038
    %v2044 = vpack.c.bf16 %v2039, %v2039
    %v2045 = vld [vmem:[#allocation7 + $0x240] sm:$0xff]
    %v2046 = vld [vmem:[#allocation7 + $0x248] sm:$0xf]
    %v2047 = vld [vmem:[#allocation7 + $0x24c] sm:$0xff]
    %v2048 = vld [vmem:[#allocation7 + $0x254] sm:$0xf]
    %v2049 = vld [vmem:[#allocation7 + $0x258] sm:$0xff]
    %v2050 = vld [vmem:[#allocation7 + $0x260] sm:$0xf]
    %v2051 = vld [vmem:[#allocation7 + $0x264] sm:$0xff]
    %v2052 = vld [vmem:[#allocation7 + $0x26c] sm:$0xf]
    %v2053 = vld [vmem:[#allocation7 + $0x270] sm:$0xff]
    %v2054 = vld [vmem:[#allocation7 + $0x278] sm:$0xf]
    %v2055 = vld [vmem:[#allocation7 + $0x27c] sm:$0xff]
    %v2056 = vld [vmem:[#allocation7 + $0x284] sm:$0xf]
    %v2057 = vld [vmem:[#allocation7 + $0x288] sm:$0xff]
    %v2058 = vld [vmem:[#allocation7 + $0x290] sm:$0xf]
    %v2059 = vld [vmem:[#allocation7 + $0x294] sm:$0xff]
    %v2060 = vld [vmem:[#allocation7 + $0x29c] sm:$0xf]
    %v2061 = vld [vmem:[#allocation7 + $0x2a0] sm:$0xff]
    %v2062 = vld [vmem:[#allocation7 + $0x2a8] sm:$0xf]
    %v2063 = vld [vmem:[#allocation7 + $0x2ac] sm:$0xff]
    %v2064 = vld [vmem:[#allocation7 + $0x2b4] sm:$0xf]
    %v2065 = vld [vmem:[#allocation7 + $0x2b8] sm:$0xff]
    %v2066 = vld [vmem:[#allocation7 + $0x2c0] sm:$0xf]
    %v2067 = vld [vmem:[#allocation7 + $0x2c4] sm:$0xff]
    %v2068 = vld [vmem:[#allocation7 + $0x2cc] sm:$0xf]
    %v2069 = vld [vmem:[#allocation7 + $0x2d0] sm:$0xff]
    %v2070 = vld [vmem:[#allocation7 + $0x2d8] sm:$0xf]
    %v2071 = vld [vmem:[#allocation7 + $0x2dc] sm:$0xff]
    %v2072 = vld [vmem:[#allocation7 + $0x2e4] sm:$0xf]
    %v2073 = vld [vmem:[#allocation7 + $0x2e8] sm:$0xff]
    %v2074 = vld [vmem:[#allocation7 + $0x2f0] sm:$0xf]
    %v2075 = vld [vmem:[#allocation7 + $0x2f4] sm:$0xff]
    %v2076 = vld [vmem:[#allocation7 + $0x2fc] sm:$0xf]
    %v2077 = vld [vmem:[#allocation7 + $0x300] sm:$0xff]
    %v2078 = vld [vmem:[#allocation7 + $0x308] sm:$0xf]
    %v2079 = vld [vmem:[#allocation7 + $0x30c] sm:$0xff]
    %v2080 = vld [vmem:[#allocation7 + $0x314] sm:$0xf]
    %v2081 = vld [vmem:[#allocation7 + $0x318] sm:$0xff]
    %v2082 = vld [vmem:[#allocation7 + $0x320] sm:$0xf]
    %v2083 = vld [vmem:[#allocation7 + $0x324] sm:$0xff]
    %v2084 = vld [vmem:[#allocation7 + $0x32c] sm:$0xf]
    %v2085 = vld [vmem:[#allocation7 + $0x330] sm:$0xff]
    %v2086 = vld [vmem:[#allocation7 + $0x338] sm:$0xf]
    %v2087 = vld [vmem:[#allocation7 + $0x33c] sm:$0xff]
    %v2088 = vld [vmem:[#allocation7 + $0x344] sm:$0xf]
    %v2089 = vld [vmem:[#allocation7 + $0x348] sm:$0xff]
    %v2090 = vld [vmem:[#allocation7 + $0x350] sm:$0xf]
    %v2091 = vld [vmem:[#allocation7 + $0x354] sm:$0xff]
    %v2092 = vld [vmem:[#allocation7 + $0x35c] sm:$0xf]
    %v2093 = vld [vmem:[#allocation7 + $0x360] sm:$0xff]
    %v2094 = vld [vmem:[#allocation7 + $0x368] sm:$0xf]
    %v2095 = vld [vmem:[#allocation7 + $0x36c] sm:$0xff]
    %v2096 = vld [vmem:[#allocation7 + $0x374] sm:$0xf]
    %v2097 = vld [vmem:[#allocation7 + $0x378] sm:$0xff]
    %v2098 = vld [vmem:[#allocation7 + $0x380] sm:$0xf]
    %v2099 = vld [vmem:[#allocation7 + $0x384] sm:$0xff]
    %v2100 = vld [vmem:[#allocation7 + $0x38c] sm:$0xf]
    %v2101 = vld [vmem:[#allocation7 + $0x390] sm:$0xff]
    %v2102 = vld [vmem:[#allocation7 + $0x398] sm:$0xf]
    %v2103 = vld [vmem:[#allocation7 + $0x39c] sm:$0xff]
    %v2104 = vld [vmem:[#allocation7 + $0x3a4] sm:$0xf]
    %v2105 = vld [vmem:[#allocation7 + $0x3a8] sm:$0xff]
    %v2106 = vld [vmem:[#allocation7 + $0x3b0] sm:$0xf]
    %v2107 = vld [vmem:[#allocation7 + $0x3b4] sm:$0xff]
    %v2108 = vld [vmem:[#allocation7 + $0x3bc] sm:$0xf]
    %v2109 = vld [vmem:[#allocation7 + $0x3c0] sm:$0xff]
    %v2110 = vld [vmem:[#allocation7 + $0x3c8] sm:$0xf]
    %v2111 = vld [vmem:[#allocation7 + $0x3cc] sm:$0xff]
    %v2112 = vld [vmem:[#allocation7 + $0x3d4] sm:$0xf]
    %v2113 = vld [vmem:[#allocation7 + $0x3d8] sm:$0xff]
    %v2114 = vld [vmem:[#allocation7 + $0x3e0] sm:$0xf]
    %v2115 = vld [vmem:[#allocation7 + $0x3e4] sm:$0xff]
    %v2116 = vld [vmem:[#allocation7 + $0x3ec] sm:$0xf]
    %v2117 = vld [vmem:[#allocation7 + $0x3f0] sm:$0xff]
    %v2118 = vld [vmem:[#allocation7 + $0x3f8] sm:$0xf]
    %v2119 = vld [vmem:[#allocation7 + $0x3fc] sm:$0xff]
    %v2120 = vld [vmem:[#allocation7 + $0x404] sm:$0xf]
    %v2121 = vld [vmem:[#allocation7 + $0x408] sm:$0xff]
    %v2122 = vld [vmem:[#allocation7 + $0x410] sm:$0xf]
    %v2123 = vld [vmem:[#allocation7 + $0x414] sm:$0xff]
    %v2124 = vld [vmem:[#allocation7 + $0x41c] sm:$0xf]
    %v2125 = vld [vmem:[#allocation7 + $0x420] sm:$0xff]
    %v2126 = vld [vmem:[#allocation7 + $0x428] sm:$0xf]
    %v2127 = vld [vmem:[#allocation7 + $0x42c] sm:$0xff]
    %v2128 = vld [vmem:[#allocation7 + $0x434] sm:$0xf]
    %v2129 = vld [vmem:[#allocation7 + $0x438] sm:$0xff]
    %v2130 = vld [vmem:[#allocation7 + $0x440] sm:$0xf]
    %v2131 = vld [vmem:[#allocation7 + $0x444] sm:$0xff]
    %v2132 = vld [vmem:[#allocation7 + $0x44c] sm:$0xf]
    %v2133 = vld [vmem:[#allocation7 + $0x450] sm:$0xff]
    %v2134 = vld [vmem:[#allocation7 + $0x458] sm:$0xf]
    %v2135 = vld [vmem:[#allocation7 + $0x45c] sm:$0xff]
    %v2136 = vld [vmem:[#allocation7 + $0x464] sm:$0xf]
    %v2137 = vld [vmem:[#allocation7 + $0x468] sm:$0xff]
    %v2138 = vld [vmem:[#allocation7 + $0x470] sm:$0xf]
    %v2139 = vld [vmem:[#allocation7 + $0x474] sm:$0xff]
    %v2140 = vld [vmem:[#allocation7 + $0x47c] sm:$0xf]
    %v2141 = vld [vmem:[#allocation7 + $0x480] sm:$0xff]
    %v2142 = vld [vmem:[#allocation7 + $0x488] sm:$0xf]
    %v2143 = vld [vmem:[#allocation7 + $0x48c] sm:$0xff]
    %v2144 = vld [vmem:[#allocation7 + $0x494] sm:$0xf]
    %v2145 = vld [vmem:[#allocation7 + $0x498] sm:$0xff]
    %v2146 = vld [vmem:[#allocation7 + $0x4a0] sm:$0xf]
    %v2147 = vld [vmem:[#allocation7 + $0x4a4] sm:$0xff]
    %v2148 = vld [vmem:[#allocation7 + $0x4ac] sm:$0xf]
    %v2149 = vld [vmem:[#allocation7 + $0x4b0] sm:$0xff]
    %v2150 = vld [vmem:[#allocation7 + $0x4b8] sm:$0xf]
    %v2151 = vld [vmem:[#allocation7 + $0x4bc] sm:$0xff]
    %v2152 = vld [vmem:[#allocation7 + $0x4c4] sm:$0xf]
    %v2153 = vld [vmem:[#allocation7 + $0x4c8] sm:$0xff]
    %v2154 = vld [vmem:[#allocation7 + $0x4d0] sm:$0xf]
    %v2155 = vld [vmem:[#allocation7 + $0x4d4] sm:$0xff]
    %v2156 = vld [vmem:[#allocation7 + $0x4dc] sm:$0xf]
    %v2157 = vld [vmem:[#allocation7 + $0x4e0] sm:$0xff]
    %v2158 = vld [vmem:[#allocation7 + $0x4e8] sm:$0xf]
    %v2159 = vld [vmem:[#allocation7 + $0x4ec] sm:$0xff]
    %v2160 = vld [vmem:[#allocation7 + $0x4f4] sm:$0xf]
    %v2161 = vld [vmem:[#allocation7 + $0x4f8] sm:$0xff]
    %v2162 = vld [vmem:[#allocation7 + $0x500] sm:$0xf]
    %v2163 = vld [vmem:[#allocation7 + $0x504] sm:$0xff]
    %v2164 = vld [vmem:[#allocation7 + $0x50c] sm:$0xf]
    %v2165 = vld [vmem:[#allocation7 + $0x510] sm:$0xff]
    %v2166 = vld [vmem:[#allocation7 + $0x518] sm:$0xf]
    %v2167 = vld [vmem:[#allocation7 + $0x51c] sm:$0xff]
    %v2168 = vld [vmem:[#allocation7 + $0x524] sm:$0xf]
    %v2169 = vld [vmem:[#allocation7 + $0x528] sm:$0xff]
    %v2170 = vld [vmem:[#allocation7 + $0x530] sm:$0xf]
    %v2171 = vld [vmem:[#allocation7 + $0x534] sm:$0xff]
    %v2172 = vld [vmem:[#allocation7 + $0x53c] sm:$0xf]
    %v2173 = vld [vmem:[#allocation7 + $0x540] sm:$0xff]
    %v2174 = vld [vmem:[#allocation7 + $0x548] sm:$0xf]
    %v2175 = vld [vmem:[#allocation7 + $0x54c] sm:$0xff]
    %v2176 = vld [vmem:[#allocation7 + $0x554] sm:$0xf]
    %v2177 = vld [vmem:[#allocation7 + $0x558] sm:$0xff]
    %v2178 = vld [vmem:[#allocation7 + $0x560] sm:$0xf]
    %v2179 = vld [vmem:[#allocation7 + $0x564] sm:$0xff]
    %v2180 = vld [vmem:[#allocation7 + $0x56c] sm:$0xf]
    %v2181 = vld [vmem:[#allocation7 + $0x570] sm:$0xff]
    %v2182 = vld [vmem:[#allocation7 + $0x578] sm:$0xf]
    %v2183 = vld [vmem:[#allocation7 + $0x57c] sm:$0xff]
    %v2184 = vld [vmem:[#allocation7 + $0x584] sm:$0xf]
    %v2185 = vld [vmem:[#allocation7 + $0x588] sm:$0xff]
    %v2186 = vld [vmem:[#allocation7 + $0x590] sm:$0xf]
    %v2187 = vld [vmem:[#allocation7 + $0x594] sm:$0xff]
    %v2188 = vld [vmem:[#allocation7 + $0x59c] sm:$0xf]
    %v2189 = vld [vmem:[#allocation7 + $0x5a0] sm:$0xff]
    %v2190 = vld [vmem:[#allocation7 + $0x5a8] sm:$0xf]
    %v2191 = vld [vmem:[#allocation7 + $0x5ac] sm:$0xff]
    %v2192 = vld [vmem:[#allocation7 + $0x5b4] sm:$0xf]
    %v2193 = vld [vmem:[#allocation7 + $0x5b8] sm:$0xff]
    %v2194 = vld [vmem:[#allocation7 + $0x5c0] sm:$0xf]
    %v2195 = vld [vmem:[#allocation7 + $0x5c4] sm:$0xff]
    %v2196 = vld [vmem:[#allocation7 + $0x5cc] sm:$0xf]
    %v2197 = vld [vmem:[#allocation7 + $0x5d0] sm:$0xff]
    %v2198 = vld [vmem:[#allocation7 + $0x5d8] sm:$0xf]
    %v2199 = vld [vmem:[#allocation7 + $0x5dc] sm:$0xff]
    %v2200 = vld [vmem:[#allocation7 + $0x5e4] sm:$0xf]
    %v2201 = vld [vmem:[#allocation7 + $0x5e8] sm:$0xff]
    %v2202 = vld [vmem:[#allocation7 + $0x5f0] sm:$0xf]
    %v2203 = vld [vmem:[#allocation7 + $0x5f4] sm:$0xff]
    %v2204 = vld [vmem:[#allocation7 + $0x5fc] sm:$0xf]
    %s2205 = scalar_lea.vmem [#allocation10], 6
    %v2206 = vld [vmem:[%s2205] ss:$8 sm:$0x7]
    %v2208 = vlaneseq
    %v2209 = vshrl.u32 %v2208, 7
    %v2210 = vsub.s32 0, %v2209
    %v2211 = vrot.slane %v2206, %v2210
    %v2212 = vlaneseq
    %v2213 = vshrl.u32 %v2212, 7
    %v2214 = vsub.s32 1, %v2213
    %v2215 = vrot.slane %v2206, %v2214
    %v2216 = vlaneseq
    %v2217 = vshrl.u32 %v2216, 7
    %v2218 = vsub.s32 2, %v2217
    %v2219 = vrot.slane %v2206, %v2218
    %v2383 = vunpack.c.l.b16 %v2045
    %v2384 = vunpack.c.h.b16 %v2045
    %v2385 = vunpack.c.l.b16 %v2046
    %v2386 = vunpack.c.l.b16 %v2047
    %v2387 = vunpack.c.h.b16 %v2047
    %v2388 = vunpack.c.l.b16 %v2048
    %v2389 = vunpack.c.l.b16 %v2049
    %v2390 = vunpack.c.h.b16 %v2049
    %v2391 = vunpack.c.l.b16 %v2050
    %v2392 = vunpack.c.l.b16 %v2051
    %v2393 = vunpack.c.h.b16 %v2051
    %v2394 = vunpack.c.l.b16 %v2052
    %v2395 = vunpack.c.l.b16 %v2053
    %v2396 = vunpack.c.h.b16 %v2053
    %v2397 = vunpack.c.l.b16 %v2054
    %v2398 = vunpack.c.l.b16 %v2055
    %v2399 = vunpack.c.h.b16 %v2055
    %v2400 = vunpack.c.l.b16 %v2056
    %v2401 = vunpack.c.l.b16 %v2057
    %v2402 = vunpack.c.h.b16 %v2057
    %v2403 = vunpack.c.l.b16 %v2058
    %v2404 = vunpack.c.l.b16 %v2059
    %v2405 = vunpack.c.h.b16 %v2059
    %v2406 = vunpack.c.l.b16 %v2060
    %v2407 = vunpack.c.l.b16 %v2061
    %v2408 = vunpack.c.h.b16 %v2061
    %v2409 = vunpack.c.l.b16 %v2062
    %v2410 = vunpack.c.l.b16 %v2063
    %v2411 = vunpack.c.h.b16 %v2063
    %v2412 = vunpack.c.l.b16 %v2064
    %v2413 = vunpack.c.l.b16 %v2065
    %v2414 = vunpack.c.h.b16 %v2065
    %v2415 = vunpack.c.l.b16 %v2066
    %v2416 = vunpack.c.l.b16 %v2067
    %v2417 = vunpack.c.h.b16 %v2067
    %v2418 = vunpack.c.l.b16 %v2068
    %v2419 = vunpack.c.l.b16 %v2069
    %v2420 = vunpack.c.h.b16 %v2069
    %v2421 = vunpack.c.l.b16 %v2070
    %v2422 = vunpack.c.l.b16 %v2071
    %v2423 = vunpack.c.h.b16 %v2071
    %v2424 = vunpack.c.l.b16 %v2072
    %v2425 = vunpack.c.l.b16 %v2073
    %v2426 = vunpack.c.h.b16 %v2073
    %v2427 = vunpack.c.l.b16 %v2074
    %v2428 = vunpack.c.l.b16 %v2075
    %v2429 = vunpack.c.h.b16 %v2075
    %v2430 = vunpack.c.l.b16 %v2076
    %v2431 = vunpack.c.l.b16 %v2077
    %v2432 = vunpack.c.h.b16 %v2077
    %v2433 = vunpack.c.l.b16 %v2078
    %v2434 = vunpack.c.l.b16 %v2079
    %v2435 = vunpack.c.h.b16 %v2079
    %v2436 = vunpack.c.l.b16 %v2080
    %v2437 = vunpack.c.l.b16 %v2081
    %v2438 = vunpack.c.h.b16 %v2081
    %v2439 = vunpack.c.l.b16 %v2082
    %v2440 = vunpack.c.l.b16 %v2083
    %v2441 = vunpack.c.h.b16 %v2083
    %v2442 = vunpack.c.l.b16 %v2084
    %v2443 = vunpack.c.l.b16 %v2085
    %v2444 = vunpack.c.h.b16 %v2085
    %v2445 = vunpack.c.l.b16 %v2086
    %v2446 = vunpack.c.l.b16 %v2087
    %v2447 = vunpack.c.h.b16 %v2087
    %v2448 = vunpack.c.l.b16 %v2088
    %v2449 = vunpack.c.l.b16 %v2089
    %v2450 = vunpack.c.h.b16 %v2089
    %v2451 = vunpack.c.l.b16 %v2090
    %v2452 = vunpack.c.l.b16 %v2091
    %v2453 = vunpack.c.h.b16 %v2091
    %v2454 = vunpack.c.l.b16 %v2092
    %v2455 = vunpack.c.l.b16 %v2093
    %v2456 = vunpack.c.h.b16 %v2093
    %v2457 = vunpack.c.l.b16 %v2094
    %v2458 = vunpack.c.l.b16 %v2095
    %v2459 = vunpack.c.h.b16 %v2095
    %v2460 = vunpack.c.l.b16 %v2096
    %v2461 = vunpack.c.l.b16 %v2097
    %v2462 = vunpack.c.h.b16 %v2097
    %v2463 = vunpack.c.l.b16 %v2098
    %v2464 = vunpack.c.l.b16 %v2099
    %v2465 = vunpack.c.h.b16 %v2099
    %v2466 = vunpack.c.l.b16 %v2100
    %v2467 = vunpack.c.l.b16 %v2101
    %v2468 = vunpack.c.h.b16 %v2101
    %v2469 = vunpack.c.l.b16 %v2102
    %v2470 = vunpack.c.l.b16 %v2103
    %v2471 = vunpack.c.h.b16 %v2103
    %v2472 = vunpack.c.l.b16 %v2104
    %v2473 = vunpack.c.l.b16 %v2105
    %v2474 = vunpack.c.h.b16 %v2105
    %v2475 = vunpack.c.l.b16 %v2106
    %v2476 = vunpack.c.l.b16 %v2107
    %v2477 = vunpack.c.h.b16 %v2107
    %v2478 = vunpack.c.l.b16 %v2108
    %v2479 = vunpack.c.l.b16 %v2109
    %v2480 = vunpack.c.h.b16 %v2109
    %v2481 = vunpack.c.l.b16 %v2110
    %v2482 = vunpack.c.l.b16 %v2111
    %v2483 = vunpack.c.h.b16 %v2111
    %v2484 = vunpack.c.l.b16 %v2112
    %v2485 = vunpack.c.l.b16 %v2113
    %v2486 = vunpack.c.h.b16 %v2113
    %v2487 = vunpack.c.l.b16 %v2114
    %v2488 = vunpack.c.l.b16 %v2115
    %v2489 = vunpack.c.h.b16 %v2115
    %v2490 = vunpack.c.l.b16 %v2116
    %v2491 = vunpack.c.l.b16 %v2117
    %v2492 = vunpack.c.h.b16 %v2117
    %v2493 = vunpack.c.l.b16 %v2118
    %v2494 = vunpack.c.l.b16 %v2119
    %v2495 = vunpack.c.h.b16 %v2119
    %v2496 = vunpack.c.l.b16 %v2120
    %v2497 = vunpack.c.l.b16 %v2121
    %v2498 = vunpack.c.h.b16 %v2121
    %v2499 = vunpack.c.l.b16 %v2122
    %v2500 = vunpack.c.l.b16 %v2123
    %v2501 = vunpack.c.h.b16 %v2123
    %v2502 = vunpack.c.l.b16 %v2124
    %v2503 = vunpack.c.l.b16 %v2125
    %v2504 = vunpack.c.h.b16 %v2125
    %v2505 = vunpack.c.l.b16 %v2126
    %v2506 = vunpack.c.l.b16 %v2127
    %v2507 = vunpack.c.h.b16 %v2127
    %v2508 = vunpack.c.l.b16 %v2128
    %v2509 = vunpack.c.l.b16 %v2129
    %v2510 = vunpack.c.h.b16 %v2129
    %v2511 = vunpack.c.l.b16 %v2130
    %v2512 = vunpack.c.l.b16 %v2131
    %v2513 = vunpack.c.h.b16 %v2131
    %v2514 = vunpack.c.l.b16 %v2132
    %v2515 = vunpack.c.l.b16 %v2133
    %v2516 = vunpack.c.h.b16 %v2133
    %v2517 = vunpack.c.l.b16 %v2134
    %v2518 = vunpack.c.l.b16 %v2135
    %v2519 = vunpack.c.h.b16 %v2135
    %v2520 = vunpack.c.l.b16 %v2136
    %v2521 = vunpack.c.l.b16 %v2137
    %v2522 = vunpack.c.h.b16 %v2137
    %v2523 = vunpack.c.l.b16 %v2138
    %v2524 = vunpack.c.l.b16 %v2139
    %v2525 = vunpack.c.h.b16 %v2139
    %v2526 = vunpack.c.l.b16 %v2140
    %v2527 = vunpack.c.l.b16 %v2141
    %v2528 = vunpack.c.h.b16 %v2141
    %v2529 = vunpack.c.l.b16 %v2142
    %v2530 = vunpack.c.l.b16 %v2143
    %v2531 = vunpack.c.h.b16 %v2143
    %v2532 = vunpack.c.l.b16 %v2144
    %v2533 = vunpack.c.l.b16 %v2145
    %v2534 = vunpack.c.h.b16 %v2145
    %v2535 = vunpack.c.l.b16 %v2146
    %v2536 = vunpack.c.l.b16 %v2147
    %v2537 = vunpack.c.h.b16 %v2147
    %v2538 = vunpack.c.l.b16 %v2148
    %v2539 = vunpack.c.l.b16 %v2149
    %v2540 = vunpack.c.h.b16 %v2149
    %v2541 = vunpack.c.l.b16 %v2150
    %v2542 = vunpack.c.l.b16 %v2151
    %v2543 = vunpack.c.h.b16 %v2151
    %v2544 = vunpack.c.l.b16 %v2152
    %v2545 = vunpack.c.l.b16 %v2153
    %v2546 = vunpack.c.h.b16 %v2153
    %v2547 = vunpack.c.l.b16 %v2154
    %v2548 = vunpack.c.l.b16 %v2155
    %v2549 = vunpack.c.h.b16 %v2155
    %v2550 = vunpack.c.l.b16 %v2156
    %v2551 = vunpack.c.l.b16 %v2157
    %v2552 = vunpack.c.h.b16 %v2157
    %v2553 = vunpack.c.l.b16 %v2158
    %v2554 = vunpack.c.l.b16 %v2159
    %v2555 = vunpack.c.h.b16 %v2159
    %v2556 = vunpack.c.l.b16 %v2160
    %v2557 = vunpack.c.l.b16 %v2161
    %v2558 = vunpack.c.h.b16 %v2161
    %v2559 = vunpack.c.l.b16 %v2162
    %v2560 = vunpack.c.l.b16 %v2163
    %v2561 = vunpack.c.h.b16 %v2163
    %v2562 = vunpack.c.l.b16 %v2164
    %v2563 = vunpack.c.l.b16 %v2165
    %v2564 = vunpack.c.h.b16 %v2165
    %v2565 = vunpack.c.l.b16 %v2166
    %v2566 = vunpack.c.l.b16 %v2167
    %v2567 = vunpack.c.h.b16 %v2167
    %v2568 = vunpack.c.l.b16 %v2168
    %v2569 = vunpack.c.l.b16 %v2169
    %v2570 = vunpack.c.h.b16 %v2169
    %v2571 = vunpack.c.l.b16 %v2170
    %v2572 = vunpack.c.l.b16 %v2171
    %v2573 = vunpack.c.h.b16 %v2171
    %v2574 = vunpack.c.l.b16 %v2172
    %v2575 = vunpack.c.l.b16 %v2173
    %v2576 = vunpack.c.h.b16 %v2173
    %v2577 = vunpack.c.l.b16 %v2174
    %v2578 = vunpack.c.l.b16 %v2175
    %v2579 = vunpack.c.h.b16 %v2175
    %v2580 = vunpack.c.l.b16 %v2176
    %v2581 = vunpack.c.l.b16 %v2177
    %v2582 = vunpack.c.h.b16 %v2177
    %v2583 = vunpack.c.l.b16 %v2178
    %v2584 = vunpack.c.l.b16 %v2179
    %v2585 = vunpack.c.h.b16 %v2179
    %v2586 = vunpack.c.l.b16 %v2180
    %v2587 = vunpack.c.l.b16 %v2181
    %v2588 = vunpack.c.h.b16 %v2181
    %v2589 = vunpack.c.l.b16 %v2182
    %v2590 = vunpack.c.l.b16 %v2183
    %v2591 = vunpack.c.h.b16 %v2183
    %v2592 = vunpack.c.l.b16 %v2184
    %v2593 = vunpack.c.l.b16 %v2185
    %v2594 = vunpack.c.h.b16 %v2185
    %v2595 = vunpack.c.l.b16 %v2186
    %v2596 = vunpack.c.l.b16 %v2187
    %v2597 = vunpack.c.h.b16 %v2187
    %v2598 = vunpack.c.l.b16 %v2188
    %v2599 = vunpack.c.l.b16 %v2189
    %v2600 = vunpack.c.h.b16 %v2189
    %v2601 = vunpack.c.l.b16 %v2190
    %v2602 = vunpack.c.l.b16 %v2191
    %v2603 = vunpack.c.h.b16 %v2191
    %v2604 = vunpack.c.l.b16 %v2192
    %v2605 = vunpack.c.l.b16 %v2193
    %v2606 = vunpack.c.h.b16 %v2193
    %v2607 = vunpack.c.l.b16 %v2194
    %v2608 = vunpack.c.l.b16 %v2195
    %v2609 = vunpack.c.h.b16 %v2195
    %v2610 = vunpack.c.l.b16 %v2196
    %v2611 = vunpack.c.l.b16 %v2197
    %v2612 = vunpack.c.h.b16 %v2197
    %v2613 = vunpack.c.l.b16 %v2198
    %v2614 = vunpack.c.l.b16 %v2199
    %v2615 = vunpack.c.h.b16 %v2199
    %v2616 = vunpack.c.l.b16 %v2200
    %v2617 = vunpack.c.l.b16 %v2201
    %v2618 = vunpack.c.h.b16 %v2201
    %v2619 = vunpack.c.l.b16 %v2202
    %v2620 = vunpack.c.l.b16 %v2203
    %v2621 = vunpack.c.h.b16 %v2203
    %v2622 = vunpack.c.l.b16 %v2204
    %v2623 = vpack.c.b16 %v2386, %v2383
    %v2624 = vpack.c.b16 %v2387, %v2384
    %v2625 = vpack.c.b16 %v2388, %v2385
    %v2626 = vpack.c.b16 %v2392, %v2389
    %v2627 = vpack.c.b16 %v2393, %v2390
    %v2628 = vpack.c.b16 %v2394, %v2391
    %v2629 = vpack.c.b16 %v2398, %v2395
    %v2630 = vpack.c.b16 %v2399, %v2396
    %v2631 = vpack.c.b16 %v2400, %v2397
    %v2632 = vpack.c.b16 %v2404, %v2401
    %v2633 = vpack.c.b16 %v2405, %v2402
    %v2634 = vpack.c.b16 %v2406, %v2403
    %v2635 = vpack.c.b16 %v2410, %v2407
    %v2636 = vpack.c.b16 %v2411, %v2408
    %v2637 = vpack.c.b16 %v2412, %v2409
    %v2638 = vpack.c.b16 %v2416, %v2413
    %v2639 = vpack.c.b16 %v2417, %v2414
    %v2640 = vpack.c.b16 %v2418, %v2415
    %v2641 = vpack.c.b16 %v2422, %v2419
    %v2642 = vpack.c.b16 %v2423, %v2420
    %v2643 = vpack.c.b16 %v2424, %v2421
    %v2644 = vpack.c.b16 %v2428, %v2425
    %v2645 = vpack.c.b16 %v2429, %v2426
    %v2646 = vpack.c.b16 %v2430, %v2427
    %v2647 = vpack.c.b16 %v2434, %v2431
    %v2648 = vpack.c.b16 %v2435, %v2432
    %v2649 = vpack.c.b16 %v2436, %v2433
    %v2650 = vpack.c.b16 %v2440, %v2437
    %v2651 = vpack.c.b16 %v2441, %v2438
    %v2652 = vpack.c.b16 %v2442, %v2439
    %v2653 = vpack.c.b16 %v2446, %v2443
    %v2654 = vpack.c.b16 %v2447, %v2444
    %v2655 = vpack.c.b16 %v2448, %v2445
    %v2656 = vpack.c.b16 %v2452, %v2449
    %v2657 = vpack.c.b16 %v2453, %v2450
    %v2658 = vpack.c.b16 %v2454, %v2451
    %v2659 = vpack.c.b16 %v2458, %v2455
    %v2660 = vpack.c.b16 %v2459, %v2456
    %v2661 = vpack.c.b16 %v2460, %v2457
    %v2662 = vpack.c.b16 %v2464, %v2461
    %v2663 = vpack.c.b16 %v2465, %v2462
    %v2664 = vpack.c.b16 %v2466, %v2463
    %v2665 = vpack.c.b16 %v2470, %v2467
    %v2666 = vpack.c.b16 %v2471, %v2468
    %v2667 = vpack.c.b16 %v2472, %v2469
    %v2668 = vpack.c.b16 %v2476, %v2473
    %v2669 = vpack.c.b16 %v2477, %v2474
    %v2670 = vpack.c.b16 %v2478, %v2475
    %v2671 = vpack.c.b16 %v2482, %v2479
    %v2672 = vpack.c.b16 %v2483, %v2480
    %v2673 = vpack.c.b16 %v2484, %v2481
    %v2674 = vpack.c.b16 %v2488, %v2485
    %v2675 = vpack.c.b16 %v2489, %v2486
    %v2676 = vpack.c.b16 %v2490, %v2487
    %v2677 = vpack.c.b16 %v2494, %v2491
    %v2678 = vpack.c.b16 %v2495, %v2492
    %v2679 = vpack.c.b16 %v2496, %v2493
    %v2680 = vpack.c.b16 %v2500, %v2497
    %v2681 = vpack.c.b16 %v2501, %v2498
    %v2682 = vpack.c.b16 %v2502, %v2499
    %v2683 = vpack.c.b16 %v2506, %v2503
    %v2684 = vpack.c.b16 %v2507, %v2504
    %v2685 = vpack.c.b16 %v2508, %v2505
    %v2686 = vpack.c.b16 %v2512, %v2509
    %v2687 = vpack.c.b16 %v2513, %v2510
    %v2688 = vpack.c.b16 %v2514, %v2511
    %v2689 = vpack.c.b16 %v2518, %v2515
    %v2690 = vpack.c.b16 %v2519, %v2516
    %v2691 = vpack.c.b16 %v2520, %v2517
    %v2692 = vpack.c.b16 %v2524, %v2521
    %v2693 = vpack.c.b16 %v2525, %v2522
    %v2694 = vpack.c.b16 %v2526, %v2523
    %v2695 = vpack.c.b16 %v2530, %v2527
    %v2696 = vpack.c.b16 %v2531, %v2528
    %v2697 = vpack.c.b16 %v2532, %v2529
    %v2698 = vpack.c.b16 %v2536, %v2533
    %v2699 = vpack.c.b16 %v2537, %v2534
    %v2700 = vpack.c.b16 %v2538, %v2535
    %v2701 = vpack.c.b16 %v2542, %v2539
    %v2702 = vpack.c.b16 %v2543, %v2540
    %v2703 = vpack.c.b16 %v2544, %v2541
    %v2704 = vpack.c.b16 %v2548, %v2545
    %v2705 = vpack.c.b16 %v2549, %v2546
    %v2706 = vpack.c.b16 %v2550, %v2547
    %v2707 = vpack.c.b16 %v2554, %v2551
    %v2708 = vpack.c.b16 %v2555, %v2552
    %v2709 = vpack.c.b16 %v2556, %v2553
    %v2710 = vpack.c.b16 %v2560, %v2557
    %v2711 = vpack.c.b16 %v2561, %v2558
    %v2712 = vpack.c.b16 %v2562, %v2559
    %v2713 = vpack.c.b16 %v2566, %v2563
    %v2714 = vpack.c.b16 %v2567, %v2564
    %v2715 = vpack.c.b16 %v2568, %v2565
    %v2716 = vpack.c.b16 %v2572, %v2569
    %v2717 = vpack.c.b16 %v2573, %v2570
    %v2718 = vpack.c.b16 %v2574, %v2571
    %v2719 = vpack.c.b16 %v2578, %v2575
    %v2720 = vpack.c.b16 %v2579, %v2576
    %v2721 = vpack.c.b16 %v2580, %v2577
    %v2722 = vpack.c.b16 %v2584, %v2581
    %v2723 = vpack.c.b16 %v2585, %v2582
    %v2724 = vpack.c.b16 %v2586, %v2583
    %v2725 = vpack.c.b16 %v2590, %v2587
    %v2726 = vpack.c.b16 %v2591, %v2588
    %v2727 = vpack.c.b16 %v2592, %v2589
    %v2728 = vpack.c.b16 %v2596, %v2593
    %v2729 = vpack.c.b16 %v2597, %v2594
    %v2730 = vpack.c.b16 %v2598, %v2595
    %v2731 = vpack.c.b16 %v2602, %v2599
    %v2732 = vpack.c.b16 %v2603, %v2600
    %v2733 = vpack.c.b16 %v2604, %v2601
    %v2734 = vpack.c.b16 %v2608, %v2605
    %v2735 = vpack.c.b16 %v2609, %v2606
    %v2736 = vpack.c.b16 %v2610, %v2607
    %v2737 = vpack.c.b16 %v2614, %v2611
    %v2738 = vpack.c.b16 %v2615, %v2612
    %v2739 = vpack.c.b16 %v2616, %v2613
    %v2740 = vpack.c.b16 %v2620, %v2617
    %v2741 = vpack.c.b16 %v2621, %v2618
    %v2742 = vpack.c.b16 %v2622, %v2619
    %2863 = vmatprep.subr.bf16.mxu0 %v2645
    %2864 = vmatpush1.bf16.msra.mxu0 %v2644
    %2865 = vmatprep.subr.bf16.mxu0 %v2642
    %2866 = vmatpush1.bf16.msra.mxu0 %v2641
    %2867 = vmatprep.subr.bf16.mxu0 %v2639
    %2868 = vmatpush1.bf16.msra.mxu0 %v2638
    %2869 = vmatprep.subr.bf16.mxu0 %v2636
    %2870 = vmatpush1.bf16.msra.mxu0 %v2635
    %2871 = vmatprep.subr.bf16.mxu0 %v2633
    %2872 = vmatpush1.bf16.msra.mxu0 %v2632
    %2873 = vmatprep.subr.bf16.mxu0 %v2630
    %2874 = vmatpush1.bf16.msra.mxu0 %v2629
    %2875 = vmatprep.subr.bf16.mxu0 %v2627
    %2876 = vmatpush1.bf16.msra.mxu0 %v2626
    %2877 = vmatprep.subr.bf16.mxu0 %v2624
    %2878 = vmatpush1.bf16.msra.mxu0 %v2623
    %2879 = vmatprep.subr.bf16.mxu0 %v2669
    %2880 = vmatpush2.bf16.msra.mxu0 %v2668
    %2881 = vmatprep.subr.bf16.mxu0 %v2666
    %2882 = vmatpush2.bf16.msra.mxu0 %v2665
    %2883 = vmatprep.subr.bf16.mxu0 %v2663
    %2884 = vmatpush2.bf16.msra.mxu0 %v2662
    %2885 = vmatprep.subr.bf16.mxu0 %v2660
    %2886 = vmatpush2.bf16.msra.mxu0 %v2659
    %2887 = vmatprep.subr.bf16.mxu0 %v2657
    %2888 = vmatpush2.bf16.msra.mxu0 %v2656
    %2889 = vmatprep.subr.bf16.mxu0 %v2654
    %2890 = vmatpush2.bf16.msra.mxu0 %v2653
    %2891 = vmatprep.subr.bf16.mxu0 %v2651
    %2892 = vmatpush2.bf16.msra.mxu0 %v2650
    %2893 = vmatprep.subr.bf16.mxu0 %v2648
    %2894 = vmatpush2.bf16.msra.mxu0 %v2647
    %2895 = vmatprep.mubr.bf16.mxu0 %v2041
    %2896 = vmatmul.mubr.bf16.gmra.mxu0 %v2040
    %v2897 = vpop.f32.mrf.mxu0
    %v2898 = vadd.f32 %v2211, %v2897
    %v2899 = vpop.f32.mrf.mxu0
    %v2900 = vadd.f32 %v2215, %v2899
    %v2901 = vpop.f32.mrf.mxu0
    %v2902 = vpop.f32.mrf.mxu0
    %2903 = vdwg.mxu0
    %2904 = vmatprep.subr.bf16.mxu0 %v2693
    %2905 = vmatpush1.bf16.msra.mxu0 %v2692
    %2906 = vmatprep.subr.bf16.mxu0 %v2690
    %2907 = vmatpush1.bf16.msra.mxu0 %v2689
    %2908 = vmatprep.subr.bf16.mxu0 %v2687
    %2909 = vmatpush1.bf16.msra.mxu0 %v2686
    %2910 = vmatprep.subr.bf16.mxu0 %v2684
    %2911 = vmatpush1.bf16.msra.mxu0 %v2683
    %2912 = vmatprep.subr.bf16.mxu0 %v2681
    %2913 = vmatpush1.bf16.msra.mxu0 %v2680
    %2914 = vmatprep.subr.bf16.mxu0 %v2678
    %2915 = vmatpush1.bf16.msra.mxu0 %v2677
    %2916 = vmatprep.subr.bf16.mxu0 %v2675
    %2917 = vmatpush1.bf16.msra.mxu0 %v2674
    %2918 = vmatprep.subr.bf16.mxu0 %v2672
    %2919 = vmatpush1.bf16.msra.mxu0 %v2671
    %2920 = vmatprep.subr.bf16.mxu0 %v2717
    %2921 = vmatpush2.bf16.msra.mxu0 %v2716
    %2922 = vmatprep.subr.bf16.mxu0 %v2714
    %2923 = vmatpush2.bf16.msra.mxu0 %v2713
    %2924 = vmatprep.subr.bf16.mxu0 %v2711
    %2925 = vmatpush2.bf16.msra.mxu0 %v2710
    %2926 = vmatprep.subr.bf16.mxu0 %v2708
    %2927 = vmatpush2.bf16.msra.mxu0 %v2707
    %2928 = vmatprep.subr.bf16.mxu0 %v2705
    %2929 = vmatpush2.bf16.msra.mxu0 %v2704
    %2930 = vmatprep.subr.bf16.mxu0 %v2702
    %2931 = vmatpush2.bf16.msra.mxu0 %v2701
    %2932 = vmatprep.subr.bf16.mxu0 %v2699
    %2933 = vmatpush2.bf16.msra.mxu0 %v2698
    %2934 = vmatprep.subr.bf16.mxu0 %v2696
    %2935 = vmatpush2.bf16.msra.mxu0 %v2695
    %2936 = vmatprep.mubr.bf16.mxu0 %v2043
    %2937 = vmatmul.mubr.bf16.gmra.mxu0 %v2042
    %v2938 = vpop.f32.mrf.mxu0
    %v2939 = vadd.f32 %v2898, %v2938
    %v2940 = vpop.f32.mrf.mxu0
    %v2941 = vadd.f32 %v2900, %v2940
    %v2942 = vpop.f32.mrf.mxu0
    %v2943 = vpop.f32.mrf.mxu0
    %2944 = vdwg.mxu0
    %2945 = vmatprep.subr.bf16.mxu0 %v2741
    %2946 = vmatpush1.bf16.msra.mxu0 %v2740
    %2947 = vmatprep.subr.bf16.mxu0 %v2738
    %2948 = vmatpush1.bf16.msra.mxu0 %v2737
    %2949 = vmatprep.subr.bf16.mxu0 %v2735
    %2950 = vmatpush1.bf16.msra.mxu0 %v2734
    %2951 = vmatprep.subr.bf16.mxu0 %v2732
    %2952 = vmatpush1.bf16.msra.mxu0 %v2731
    %2953 = vmatprep.subr.bf16.mxu0 %v2729
    %2954 = vmatpush1.bf16.msra.mxu0 %v2728
    %2955 = vmatprep.subr.bf16.mxu0 %v2726
    %2956 = vmatpush1.bf16.msra.mxu0 %v2725
    %2957 = vmatprep.subr.bf16.mxu0 %v2723
    %2958 = vmatpush1.bf16.msra.mxu0 %v2722
    %2959 = vmatprep.subr.bf16.mxu0 %v2720
    %2960 = vmatpush1.bf16.msra.mxu0 %v2719
    %2961 = vmatprep.subr.bf16.mxu0 0
    %2962 = vmatpush2.bf16.msra.mxu0 0
    %2963 = vmatprep.subr.bf16.mxu0 0
    %2964 = vmatpush2.bf16.msra.mxu0 0
    %2965 = vmatprep.subr.bf16.mxu0 0
    %2966 = vmatpush2.bf16.msra.mxu0 0
    %2967 = vmatprep.subr.bf16.mxu0 0
    %2968 = vmatpush2.bf16.msra.mxu0 0
    %2969 = vmatprep.subr.bf16.mxu0 0
    %2970 = vmatpush2.bf16.msra.mxu0 0
    %2971 = vmatprep.subr.bf16.mxu0 0
    %2972 = vmatpush2.bf16.msra.mxu0 0
    %2973 = vmatprep.subr.bf16.mxu0 0
    %2974 = vmatpush2.bf16.msra.mxu0 0
    %2975 = vmatprep.subr.bf16.mxu0 0
    %2976 = vmatpush2.bf16.msra.mxu0 0
    %2977 = vmatprep.mubr.bf16.mxu0 0
    %2978 = vmatmul.mubr.bf16.gmra.mxu0 %v2044
    %v2979 = vpop.f32.mrf.mxu0
    %v2980 = vadd.f32 %v2939, %v2979
    %v2981 = vpop.f32.mrf.mxu0
    %v2982 = vadd.f32 %v2941, %v2981
    %v2983 = vpop.f32.mrf.mxu0
    %v2984 = vpop.f32.mrf.mxu0
    %2985 = vdwg.mxu0
    %2986 = vmatprep.subr.bf16.mxu0 0
    %2987 = vmatpush1.bf16.msra.mxu0 %v2646
    %2988 = vmatprep.subr.bf16.mxu0 0
    %2989 = vmatpush1.bf16.msra.mxu0 %v2643
    %2990 = vmatprep.subr.bf16.mxu0 0
    %2991 = vmatpush1.bf16.msra.mxu0 %v2640
    %2992 = vmatprep.subr.bf16.mxu0 0
    %2993 = vmatpush1.bf16.msra.mxu0 %v2637
    %2994 = vmatprep.subr.bf16.mxu0 0
    %2995 = vmatpush1.bf16.msra.mxu0 %v2634
    %2996 = vmatprep.subr.bf16.mxu0 0
    %2997 = vmatpush1.bf16.msra.mxu0 %v2631
    %2998 = vmatprep.subr.bf16.mxu0 0
    %2999 = vmatpush1.bf16.msra.mxu0 %v2628
    %3000 = vmatprep.subr.bf16.mxu0 0
    %3001 = vmatpush1.bf16.msra.mxu0 %v2625
    %3002 = vmatprep.subr.bf16.mxu0 0
    %3003 = vmatpush2.bf16.msra.mxu0 %v2670
    %3004 = vmatprep.subr.bf16.mxu0 0
    %3005 = vmatpush2.bf16.msra.mxu0 %v2667
    %3006 = vmatprep.subr.bf16.mxu0 0
    %3007 = vmatpush2.bf16.msra.mxu0 %v2664
    %3008 = vmatprep.subr.bf16.mxu0 0
    %3009 = vmatpush2.bf16.msra.mxu0 %v2661
    %3010 = vmatprep.subr.bf16.mxu0 0
    %3011 = vmatpush2.bf16.msra.mxu0 %v2658
    %3012 = vmatprep.subr.bf16.mxu0 0
    %3013 = vmatpush2.bf16.msra.mxu0 %v2655
    %3014 = vmatprep.subr.bf16.mxu0 0
    %3015 = vmatpush2.bf16.msra.mxu0 %v2652
    %3016 = vmatprep.subr.bf16.mxu0 0
    %3017 = vmatpush2.bf16.msra.mxu0 %v2649
    %3018 = vmatprep.mubr.bf16.mxu0 %v2041
    %3019 = vmatmul.mubr.bf16.gmra.mxu0 %v2040
    %v3020 = vpop.f32.mrf.mxu0
    %v3021 = vadd.f32 %v2219, %v3020
    %v3022 = vpop.f32.mrf.mxu0
    %v3023 = vpop.f32.mrf.mxu0
    %v3024 = vpop.f32.mrf.mxu0
    %3025 = vdwg.mxu0
    %3026 = vmatprep.subr.bf16.mxu0 0
    %3027 = vmatpush1.bf16.msra.mxu0 %v2694
    %3028 = vmatprep.subr.bf16.mxu0 0
    %3029 = vmatpush1.bf16.msra.mxu0 %v2691
    %3030 = vmatprep.subr.bf16.mxu0 0
    %3031 = vmatpush1.bf16.msra.mxu0 %v2688
    %3032 = vmatprep.subr.bf16.mxu0 0
    %3033 = vmatpush1.bf16.msra.mxu0 %v2685
    %3034 = vmatprep.subr.bf16.mxu0 0
    %3035 = vmatpush1.bf16.msra.mxu0 %v2682
    %3036 = vmatprep.subr.bf16.mxu0 0
    %3037 = vmatpush1.bf16.msra.mxu0 %v2679
    %3038 = vmatprep.subr.bf16.mxu0 0
    %3039 = vmatpush1.bf16.msra.mxu0 %v2676
    %3040 = vmatprep.subr.bf16.mxu0 0
    %3041 = vmatpush1.bf16.msra.mxu0 %v2673
    %3042 = vmatprep.subr.bf16.mxu0 0
    %3043 = vmatpush2.bf16.msra.mxu0 %v2718
    %3044 = vmatprep.subr.bf16.mxu0 0
    %3045 = vmatpush2.bf16.msra.mxu0 %v2715
    %3046 = vmatprep.subr.bf16.mxu0 0
    %3047 = vmatpush2.bf16.msra.mxu0 %v2712
    %3048 = vmatprep.subr.bf16.mxu0 0
    %3049 = vmatpush2.bf16.msra.mxu0 %v2709
    %3050 = vmatprep.subr.bf16.mxu0 0
    %3051 = vmatpush2.bf16.msra.mxu0 %v2706
    %3052 = vmatprep.subr.bf16.mxu0 0
    %3053 = vmatpush2.bf16.msra.mxu0 %v2703
    %3054 = vmatprep.subr.bf16.mxu0 0
    %3055 = vmatpush2.bf16.msra.mxu0 %v2700
    %3056 = vmatprep.subr.bf16.mxu0 0
    %3057 = vmatpush2.bf16.msra.mxu0 %v2697
    %3058 = vmatprep.mubr.bf16.mxu0 %v2043
    %3059 = vmatmul.mubr.bf16.gmra.mxu0 %v2042
    %v3060 = vpop.f32.mrf.mxu0
    %v3061 = vadd.f32 %v3021, %v3060
    %v3062 = vpop.f32.mrf.mxu0
    %v3063 = vpop.f32.mrf.mxu0
    %v3064 = vpop.f32.mrf.mxu0
    %3065 = vdwg.mxu0
    %3066 = vmatprep.subr.bf16.mxu0 0
    %3067 = vmatpush1.bf16.msra.mxu0 %v2742
    %3068 = vmatprep.subr.bf16.mxu0 0
    %3069 = vmatpush1.bf16.msra.mxu0 %v2739
    %3070 = vmatprep.subr.bf16.mxu0 0
    %3071 = vmatpush1.bf16.msra.mxu0 %v2736
    %3072 = vmatprep.subr.bf16.mxu0 0
    %3073 = vmatpush1.bf16.msra.mxu0 %v2733
    %3074 = vmatprep.subr.bf16.mxu0 0
    %3075 = vmatpush1.bf16.msra.mxu0 %v2730
    %3076 = vmatprep.subr.bf16.mxu0 0
    %3077 = vmatpush1.bf16.msra.mxu0 %v2727
    %3078 = vmatprep.subr.bf16.mxu0 0
    %3079 = vmatpush1.bf16.msra.mxu0 %v2724
    %3080 = vmatprep.subr.bf16.mxu0 0
    %3081 = vmatpush1.bf16.msra.mxu0 %v2721
    %3082 = vmatprep.subr.bf16.mxu0 0
    %3083 = vmatpush2.bf16.msra.mxu0 0
    %3084 = vmatprep.subr.bf16.mxu0 0
    %3085 = vmatpush2.bf16.msra.mxu0 0
    %3086 = vmatprep.subr.bf16.mxu0 0
    %3087 = vmatpush2.bf16.msra.mxu0 0
    %3088 = vmatprep.subr.bf16.mxu0 0
    %3089 = vmatpush2.bf16.msra.mxu0 0
    %3090 = vmatprep.subr.bf16.mxu0 0
    %3091 = vmatpush2.bf16.msra.mxu0 0
    %3092 = vmatprep.subr.bf16.mxu0 0
    %3093 = vmatpush2.bf16.msra.mxu0 0
    %3094 = vmatprep.subr.bf16.mxu0 0
    %3095 = vmatpush2.bf16.msra.mxu0 0
    %3096 = vmatprep.subr.bf16.mxu0 0
    %3097 = vmatpush2.bf16.msra.mxu0 0
    %3098 = vmatprep.mubr.bf16.mxu0 0
    %3099 = vmatmul.mubr.bf16.gmra.mxu0 %v2044
    %v3100 = vpop.f32.mrf.mxu0
    %v3101 = vadd.f32 %v3061, %v3100
    %v3102 = vpop.f32.mrf.mxu0
    %v3103 = vpop.f32.mrf.mxu0
    %v3104 = vpop.f32.mrf.mxu0
    %3105 = vdwg.mxu0
    %v3106 = vmax.f32 %v2980, 0.0
    %v3107 = vmax.f32 %v2982, 0.0
    %v3108 = vmax.f32 %v3101, 0.0
    %v3109 = vpack.c.bf16 %v3106, %v3106
    %v3110 = vpack.c.bf16 %v3107, %v3107
    %v3111 = vpack.c.bf16 %v3108, %v3108
    %v3112 = vld [vmem:[#allocation7 + $0x600] sm:$0xff]
    %v3113 = vld [vmem:[#allocation7 + $0x60c] sm:$0xff]
    %v3114 = vld [vmem:[#allocation7 + $0x618] sm:$0xff]
    %v3115 = vld [vmem:[#allocation7 + $0x624] sm:$0xff]
    %v3116 = vld [vmem:[#allocation7 + $0x630] sm:$0xff]
    %v3117 = vld [vmem:[#allocation7 + $0x63c] sm:$0xff]
    %v3118 = vld [vmem:[#allocation7 + $0x648] sm:$0xff]
    %v3119 = vld [vmem:[#allocation7 + $0x654] sm:$0xff]
    %v3120 = vld [vmem:[#allocation7 + $0x660] sm:$0xff]
    %v3121 = vld [vmem:[#allocation7 + $0x66c] sm:$0xff]
    %v3122 = vld [vmem:[#allocation7 + $0x678] sm:$0xff]
    %v3123 = vld [vmem:[#allocation7 + $0x684] sm:$0xff]
    %v3124 = vld [vmem:[#allocation7 + $0x690] sm:$0xff]
    %v3125 = vld [vmem:[#allocation7 + $0x69c] sm:$0xff]
    %v3126 = vld [vmem:[#allocation7 + $0x6a8] sm:$0xff]
    %v3127 = vld [vmem:[#allocation7 + $0x6b4] sm:$0xff]
    %v3128 = vld [vmem:[#allocation7 + $0x6c0] sm:$0xff]
    %v3129 = vld [vmem:[#allocation7 + $0x6cc] sm:$0xff]
    %v3130 = vld [vmem:[#allocation7 + $0x6d8] sm:$0xff]
    %v3131 = vld [vmem:[#allocation7 + $0x6e4] sm:$0xff]
    %v3132 = vld [vmem:[#allocation7 + $0x6f0] sm:$0xff]
    %v3133 = vld [vmem:[#allocation7 + $0x6fc] sm:$0xff]
    %v3134 = vld [vmem:[#allocation7 + $0x708] sm:$0xff]
    %v3135 = vld [vmem:[#allocation7 + $0x714] sm:$0xff]
    %v3136 = vld [vmem:[#allocation7 + $0x720] sm:$0xff]
    %v3137 = vld [vmem:[#allocation7 + $0x72c] sm:$0xff]
    %v3138 = vld [vmem:[#allocation7 + $0x738] sm:$0xff]
    %v3139 = vld [vmem:[#allocation7 + $0x744] sm:$0xff]
    %v3140 = vld [vmem:[#allocation7 + $0x750] sm:$0xff]
    %v3141 = vld [vmem:[#allocation7 + $0x75c] sm:$0xff]
    %v3142 = vld [vmem:[#allocation7 + $0x768] sm:$0xff]
    %v3143 = vld [vmem:[#allocation7 + $0x774] sm:$0xff]
    %v3144 = vld [vmem:[#allocation7 + $0x780] sm:$0xff]
    %v3145 = vld [vmem:[#allocation7 + $0x78c] sm:$0xff]
    %v3146 = vld [vmem:[#allocation7 + $0x798] sm:$0xff]
    %v3147 = vld [vmem:[#allocation7 + $0x7a4] sm:$0xff]
    %v3148 = vld [vmem:[#allocation7 + $0x7b0] sm:$0xff]
    %v3149 = vld [vmem:[#allocation7 + $0x7bc] sm:$0xff]
    %v3150 = vld [vmem:[#allocation7 + $0x7c8] sm:$0xff]
    %v3151 = vld [vmem:[#allocation7 + $0x7d4] sm:$0xff]
    %v3152 = vld [vmem:[#allocation7 + $0x7e0] sm:$0xff]
    %v3153 = vld [vmem:[#allocation7 + $0x7ec] sm:$0xff]
    %v3154 = vld [vmem:[#allocation7 + $0x7f8] sm:$0xff]
    %v3155 = vld [vmem:[#allocation7 + $0x804] sm:$0xff]
    %v3156 = vld [vmem:[#allocation7 + $0x810] sm:$0xff]
    %v3157 = vld [vmem:[#allocation7 + $0x81c] sm:$0xff]
    %v3158 = vld [vmem:[#allocation7 + $0x828] sm:$0xff]
    %v3159 = vld [vmem:[#allocation7 + $0x834] sm:$0xff]
    %s3160 = scalar_lea.vmem [#allocation10], 7
    %v3161 = vld [vmem:[%s3160] ss:$8 sm:$0x3]
    %v3163 = vlaneseq
    %v3164 = vshrl.u32 %v3163, 7
    %v3165 = vsub.s32 0, %v3164
    %v3166 = vrot.slane %v3161, %v3165
    %v3167 = vlaneseq
    %v3168 = vshrl.u32 %v3167, 7
    %v3169 = vsub.s32 1, %v3168
    %v3170 = vrot.slane %v3161, %v3169
    %v3221 = vunpack.c.l.b16 %v3112
    %v3222 = vunpack.c.h.b16 %v3112
    %v3223 = vunpack.c.l.b16 %v3113
    %v3224 = vunpack.c.h.b16 %v3113
    %v3225 = vunpack.c.l.b16 %v3114
    %v3226 = vunpack.c.h.b16 %v3114
    %v3227 = vunpack.c.l.b16 %v3115
    %v3228 = vunpack.c.h.b16 %v3115
    %v3229 = vunpack.c.l.b16 %v3116
    %v3230 = vunpack.c.h.b16 %v3116
    %v3231 = vunpack.c.l.b16 %v3117
    %v3232 = vunpack.c.h.b16 %v3117
    %v3233 = vunpack.c.l.b16 %v3118
    %v3234 = vunpack.c.h.b16 %v3118
    %v3235 = vunpack.c.l.b16 %v3119
    %v3236 = vunpack.c.h.b16 %v3119
    %v3237 = vunpack.c.l.b16 %v3120
    %v3238 = vunpack.c.h.b16 %v3120
    %v3239 = vunpack.c.l.b16 %v3121
    %v3240 = vunpack.c.h.b16 %v3121
    %v3241 = vunpack.c.l.b16 %v3122
    %v3242 = vunpack.c.h.b16 %v3122
    %v3243 = vunpack.c.l.b16 %v3123
    %v3244 = vunpack.c.h.b16 %v3123
    %v3245 = vunpack.c.l.b16 %v3124
    %v3246 = vunpack.c.h.b16 %v3124
    %v3247 = vunpack.c.l.b16 %v3125
    %v3248 = vunpack.c.h.b16 %v3125
    %v3249 = vunpack.c.l.b16 %v3126
    %v3250 = vunpack.c.h.b16 %v3126
    %v3251 = vunpack.c.l.b16 %v3127
    %v3252 = vunpack.c.h.b16 %v3127
    %v3253 = vunpack.c.l.b16 %v3128
    %v3254 = vunpack.c.h.b16 %v3128
    %v3255 = vunpack.c.l.b16 %v3129
    %v3256 = vunpack.c.h.b16 %v3129
    %v3257 = vunpack.c.l.b16 %v3130
    %v3258 = vunpack.c.h.b16 %v3130
    %v3259 = vunpack.c.l.b16 %v3131
    %v3260 = vunpack.c.h.b16 %v3131
    %v3261 = vunpack.c.l.b16 %v3132
    %v3262 = vunpack.c.h.b16 %v3132
    %v3263 = vunpack.c.l.b16 %v3133
    %v3264 = vunpack.c.h.b16 %v3133
    %v3265 = vunpack.c.l.b16 %v3134
    %v3266 = vunpack.c.h.b16 %v3134
    %v3267 = vunpack.c.l.b16 %v3135
    %v3268 = vunpack.c.h.b16 %v3135
    %v3269 = vunpack.c.l.b16 %v3136
    %v3270 = vunpack.c.h.b16 %v3136
    %v3271 = vunpack.c.l.b16 %v3137
    %v3272 = vunpack.c.h.b16 %v3137
    %v3273 = vunpack.c.l.b16 %v3138
    %v3274 = vunpack.c.h.b16 %v3138
    %v3275 = vunpack.c.l.b16 %v3139
    %v3276 = vunpack.c.h.b16 %v3139
    %v3277 = vunpack.c.l.b16 %v3140
    %v3278 = vunpack.c.h.b16 %v3140
    %v3279 = vunpack.c.l.b16 %v3141
    %v3280 = vunpack.c.h.b16 %v3141
    %v3281 = vunpack.c.l.b16 %v3142
    %v3282 = vunpack.c.h.b16 %v3142
    %v3283 = vunpack.c.l.b16 %v3143
    %v3284 = vunpack.c.h.b16 %v3143
    %v3285 = vunpack.c.l.b16 %v3144
    %v3286 = vunpack.c.h.b16 %v3144
    %v3287 = vunpack.c.l.b16 %v3145
    %v3288 = vunpack.c.h.b16 %v3145
    %v3289 = vunpack.c.l.b16 %v3146
    %v3290 = vunpack.c.h.b16 %v3146
    %v3291 = vunpack.c.l.b16 %v3147
    %v3292 = vunpack.c.h.b16 %v3147
    %v3293 = vunpack.c.l.b16 %v3148
    %v3294 = vunpack.c.h.b16 %v3148
    %v3295 = vunpack.c.l.b16 %v3149
    %v3296 = vunpack.c.h.b16 %v3149
    %v3297 = vunpack.c.l.b16 %v3150
    %v3298 = vunpack.c.h.b16 %v3150
    %v3299 = vunpack.c.l.b16 %v3151
    %v3300 = vunpack.c.h.b16 %v3151
    %v3301 = vunpack.c.l.b16 %v3152
    %v3302 = vunpack.c.h.b16 %v3152
    %v3303 = vunpack.c.l.b16 %v3153
    %v3304 = vunpack.c.h.b16 %v3153
    %v3305 = vunpack.c.l.b16 %v3154
    %v3306 = vunpack.c.h.b16 %v3154
    %v3307 = vunpack.c.l.b16 %v3155
    %v3308 = vunpack.c.h.b16 %v3155
    %v3309 = vunpack.c.l.b16 %v3156
    %v3310 = vunpack.c.h.b16 %v3156
    %v3311 = vunpack.c.l.b16 %v3157
    %v3312 = vunpack.c.h.b16 %v3157
    %v3313 = vunpack.c.l.b16 %v3158
    %v3314 = vunpack.c.h.b16 %v3158
    %v3315 = vunpack.c.l.b16 %v3159
    %v3316 = vunpack.c.h.b16 %v3159
    %v3317 = vpack.c.b16 %v3223, %v3221
    %v3318 = vpack.c.b16 %v3224, %v3222
    %v3319 = vpack.c.b16 %v3227, %v3225
    %v3320 = vpack.c.b16 %v3228, %v3226
    %v3321 = vpack.c.b16 %v3231, %v3229
    %v3322 = vpack.c.b16 %v3232, %v3230
    %v3323 = vpack.c.b16 %v3235, %v3233
    %v3324 = vpack.c.b16 %v3236, %v3234
    %v3325 = vpack.c.b16 %v3239, %v3237
    %v3326 = vpack.c.b16 %v3240, %v3238
    %v3327 = vpack.c.b16 %v3243, %v3241
    %v3328 = vpack.c.b16 %v3244, %v3242
    %v3329 = vpack.c.b16 %v3247, %v3245
    %v3330 = vpack.c.b16 %v3248, %v3246
    %v3331 = vpack.c.b16 %v3251, %v3249
    %v3332 = vpack.c.b16 %v3252, %v3250
    %v3333 = vpack.c.b16 %v3255, %v3253
    %v3334 = vpack.c.b16 %v3256, %v3254
    %v3335 = vpack.c.b16 %v3259, %v3257
    %v3336 = vpack.c.b16 %v3260, %v3258
    %v3337 = vpack.c.b16 %v3263, %v3261
    %v3338 = vpack.c.b16 %v3264, %v3262
    %v3339 = vpack.c.b16 %v3267, %v3265
    %v3340 = vpack.c.b16 %v3268, %v3266
    %v3341 = vpack.c.b16 %v3271, %v3269
    %v3342 = vpack.c.b16 %v3272, %v3270
    %v3343 = vpack.c.b16 %v3275, %v3273
    %v3344 = vpack.c.b16 %v3276, %v3274
    %v3345 = vpack.c.b16 %v3279, %v3277
    %v3346 = vpack.c.b16 %v3280, %v3278
    %v3347 = vpack.c.b16 %v3283, %v3281
    %v3348 = vpack.c.b16 %v3284, %v3282
    %v3349 = vpack.c.b16 %v3287, %v3285
    %v3350 = vpack.c.b16 %v3288, %v3286
    %v3351 = vpack.c.b16 %v3291, %v3289
    %v3352 = vpack.c.b16 %v3292, %v3290
    %v3353 = vpack.c.b16 %v3295, %v3293
    %v3354 = vpack.c.b16 %v3296, %v3294
    %v3355 = vpack.c.b16 %v3299, %v3297
    %v3356 = vpack.c.b16 %v3300, %v3298
    %v3357 = vpack.c.b16 %v3303, %v3301
    %v3358 = vpack.c.b16 %v3304, %v3302
    %v3359 = vpack.c.b16 %v3307, %v3305
    %v3360 = vpack.c.b16 %v3308, %v3306
    %v3361 = vpack.c.b16 %v3311, %v3309
    %v3362 = vpack.c.b16 %v3312, %v3310
    %v3363 = vpack.c.b16 %v3315, %v3313
    %v3364 = vpack.c.b16 %v3316, %v3314
    %3413 = vmatprep.subr.bf16.mxu0 %v3332
    %3414 = vmatpush1.bf16.msra.mxu0 %v3331
    %3415 = vmatprep.subr.bf16.mxu0 %v3330
    %3416 = vmatpush1.bf16.msra.mxu0 %v3329
    %3417 = vmatprep.subr.bf16.mxu0 %v3328
    %3418 = vmatpush1.bf16.msra.mxu0 %v3327
    %3419 = vmatprep.subr.bf16.mxu0 %v3326
    %3420 = vmatpush1.bf16.msra.mxu0 %v3325
    %3421 = vmatprep.subr.bf16.mxu0 %v3324
    %3422 = vmatpush1.bf16.msra.mxu0 %v3323
    %3423 = vmatprep.subr.bf16.mxu0 %v3322
    %3424 = vmatpush1.bf16.msra.mxu0 %v3321
    %3425 = vmatprep.subr.bf16.mxu0 %v3320
    %3426 = vmatpush1.bf16.msra.mxu0 %v3319
    %3427 = vmatprep.subr.bf16.mxu0 %v3318
    %3428 = vmatpush1.bf16.msra.mxu0 %v3317
    %3429 = vmatprep.subr.bf16.mxu0 %v3348
    %3430 = vmatpush2.bf16.msra.mxu0 %v3347
    %3431 = vmatprep.subr.bf16.mxu0 %v3346
    %3432 = vmatpush2.bf16.msra.mxu0 %v3345
    %3433 = vmatprep.subr.bf16.mxu0 %v3344
    %3434 = vmatpush2.bf16.msra.mxu0 %v3343
    %3435 = vmatprep.subr.bf16.mxu0 %v3342
    %3436 = vmatpush2.bf16.msra.mxu0 %v3341
    %3437 = vmatprep.subr.bf16.mxu0 %v3340
    %3438 = vmatpush2.bf16.msra.mxu0 %v3339
    %3439 = vmatprep.subr.bf16.mxu0 %v3338
    %3440 = vmatpush2.bf16.msra.mxu0 %v3337
    %3441 = vmatprep.subr.bf16.mxu0 %v3336
    %3442 = vmatpush2.bf16.msra.mxu0 %v3335
    %3443 = vmatprep.subr.bf16.mxu0 %v3334
    %3444 = vmatpush2.bf16.msra.mxu0 %v3333
    %3445 = vmatprep.mubr.bf16.mxu0 %v3110
    %3446 = vmatmul.mubr.bf16.gmra.mxu0 %v3109
    %v3447 = vpop.f32.mrf.mxu0
    %v3448 = vadd.f32 %v3166, %v3447
    %v3449 = vpop.f32.mrf.mxu0
    %v3450 = vadd.f32 %v3170, %v3449
    %v3451 = vpop.f32.mrf.mxu0
    %v3452 = vpop.f32.mrf.mxu0
    %3453 = vdwg.mxu0
    %3454 = vmatprep.subr.bf16.mxu0 %v3364
    %3455 = vmatpush1.bf16.msra.mxu0 %v3363
    %3456 = vmatprep.subr.bf16.mxu0 %v3362
    %3457 = vmatpush1.bf16.msra.mxu0 %v3361
    %3458 = vmatprep.subr.bf16.mxu0 %v3360
    %3459 = vmatpush1.bf16.msra.mxu0 %v3359
    %3460 = vmatprep.subr.bf16.mxu0 %v3358
    %3461 = vmatpush1.bf16.msra.mxu0 %v3357
    %3462 = vmatprep.subr.bf16.mxu0 %v3356
    %3463 = vmatpush1.bf16.msra.mxu0 %v3355
    %3464 = vmatprep.subr.bf16.mxu0 %v3354
    %3465 = vmatpush1.bf16.msra.mxu0 %v3353
    %3466 = vmatprep.subr.bf16.mxu0 %v3352
    %3467 = vmatpush1.bf16.msra.mxu0 %v3351
    %3468 = vmatprep.subr.bf16.mxu0 %v3350
    %3469 = vmatpush1.bf16.msra.mxu0 %v3349
    %3470 = vmatprep.subr.bf16.mxu0 0
    %3471 = vmatpush2.bf16.msra.mxu0 0
    %3472 = vmatprep.subr.bf16.mxu0 0
    %3473 = vmatpush2.bf16.msra.mxu0 0
    %3474 = vmatprep.subr.bf16.mxu0 0
    %3475 = vmatpush2.bf16.msra.mxu0 0
    %3476 = vmatprep.subr.bf16.mxu0 0
    %3477 = vmatpush2.bf16.msra.mxu0 0
    %3478 = vmatprep.subr.bf16.mxu0 0
    %3479 = vmatpush2.bf16.msra.mxu0 0
    %3480 = vmatprep.subr.bf16.mxu0 0
    %3481 = vmatpush2.bf16.msra.mxu0 0
    %3482 = vmatprep.subr.bf16.mxu0 0
    %3483 = vmatpush2.bf16.msra.mxu0 0
    %3484 = vmatprep.subr.bf16.mxu0 0
    %3485 = vmatpush2.bf16.msra.mxu0 0
    %3486 = vmatprep.mubr.bf16.mxu0 0
    %3487 = vmatmul.mubr.bf16.gmra.mxu0 %v3111
    %v3488 = vpop.f32.mrf.mxu0
    %v3489 = vadd.f32 %v3448, %v3488
    %v3490 = vpop.f32.mrf.mxu0
    %v3491 = vadd.f32 %v3450, %v3490
    %v3492 = vpop.f32.mrf.mxu0
    %v3493 = vpop.f32.mrf.mxu0
    %3494 = vdwg.mxu0
    %v3495 = vmax.f32 %v3489, 0.0
    %v3496 = vmax.f32 %v3491, 0.0
    %v3497 = vpack.c.bf16 %v3495, %v3495
    %v3498 = vpack.c.bf16 %v3496, %v3496
    %v3499 = vld [vmem:[#allocation5 + $0xc0] sm:$0xf]
    %v3500 = vld [vmem:[#allocation5 + $0xc4] sm:$0xf]
    %v3501 = vld [vmem:[#allocation5 + $0xc8] sm:$0xf]
    %v3502 = vld [vmem:[#allocation5 + $0xcc] sm:$0xf]
    %v3503 = vld [vmem:[#allocation5 + $0xd0] sm:$0xf]
    %v3504 = vld [vmem:[#allocation5 + $0xd4] sm:$0xf]
    %v3505 = vld [vmem:[#allocation5 + $0xd8] sm:$0xf]
    %v3506 = vld [vmem:[#allocation5 + $0xdc] sm:$0xf]
    %v3507 = vld [vmem:[#allocation5 + $0xe0] sm:$0xf]
    %v3508 = vld [vmem:[#allocation5 + $0xe4] sm:$0xf]
    %v3509 = vld [vmem:[#allocation5 + $0xe8] sm:$0xf]
    %v3510 = vld [vmem:[#allocation5 + $0xec] sm:$0xf]
    %v3511 = vld [vmem:[#allocation5 + $0xf0] sm:$0xf]
    %v3512 = vld [vmem:[#allocation5 + $0xf4] sm:$0xf]
    %v3513 = vld [vmem:[#allocation5 + $0xf8] sm:$0xf]
    %v3514 = vld [vmem:[#allocation5 + $0xfc] sm:$0xf]
    %v3515 = vld [vmem:[#allocation5 + $0x100] sm:$0xf]
    %v3516 = vld [vmem:[#allocation5 + $0x104] sm:$0xf]
    %v3517 = vld [vmem:[#allocation5 + $0x108] sm:$0xf]
    %v3518 = vld [vmem:[#allocation5 + $0x10c] sm:$0xf]
    %v3519 = vld [vmem:[#allocation5 + $0x110] sm:$0xf]
    %v3520 = vld [vmem:[#allocation5 + $0x114] sm:$0xf]
    %v3521 = vld [vmem:[#allocation5 + $0x118] sm:$0xf]
    %v3522 = vld [vmem:[#allocation5 + $0x11c] sm:$0xf]
    %v3523 = vld [vmem:[#allocation5 + $0x120] sm:$0xf]
    %v3524 = vld [vmem:[#allocation5 + $0x124] sm:$0xf]
    %v3525 = vld [vmem:[#allocation5 + $0x128] sm:$0xf]
    %v3526 = vld [vmem:[#allocation5 + $0x12c] sm:$0xf]
    %v3527 = vld [vmem:[#allocation5 + $0x130] sm:$0xf]
    %v3528 = vld [vmem:[#allocation5 + $0x134] sm:$0xf]
    %v3529 = vld [vmem:[#allocation5 + $0x138] sm:$0xf]
    %v3530 = vld [vmem:[#allocation5 + $0x13c] sm:$0xf]
    %v3531 = vld [vmem:[#allocation10 + $0x28] ss:$0 sm:$0xff]
    %v3564 = vunpack.c.l.b16 %v3499
    %v3565 = vunpack.c.l.b16 %v3500
    %v3566 = vunpack.c.l.b16 %v3501
    %v3567 = vunpack.c.l.b16 %v3502
    %v3568 = vunpack.c.l.b16 %v3503
    %v3569 = vunpack.c.l.b16 %v3504
    %v3570 = vunpack.c.l.b16 %v3505
    %v3571 = vunpack.c.l.b16 %v3506
    %v3572 = vunpack.c.l.b16 %v3507
    %v3573 = vunpack.c.l.b16 %v3508
    %v3574 = vunpack.c.l.b16 %v3509
    %v3575 = vunpack.c.l.b16 %v3510
    %v3576 = vunpack.c.l.b16 %v3511
    %v3577 = vunpack.c.l.b16 %v3512
    %v3578 = vunpack.c.l.b16 %v3513
    %v3579 = vunpack.c.l.b16 %v3514
    %v3580 = vunpack.c.l.b16 %v3515
    %v3581 = vunpack.c.l.b16 %v3516
    %v3582 = vunpack.c.l.b16 %v3517
    %v3583 = vunpack.c.l.b16 %v3518
    %v3584 = vunpack.c.l.b16 %v3519
    %v3585 = vunpack.c.l.b16 %v3520
    %v3586 = vunpack.c.l.b16 %v3521
    %v3587 = vunpack.c.l.b16 %v3522
    %v3588 = vunpack.c.l.b16 %v3523
    %v3589 = vunpack.c.l.b16 %v3524
    %v3590 = vunpack.c.l.b16 %v3525
    %v3591 = vunpack.c.l.b16 %v3526
    %v3592 = vunpack.c.l.b16 %v3527
    %v3593 = vunpack.c.l.b16 %v3528
    %v3594 = vunpack.c.l.b16 %v3529
    %v3595 = vunpack.c.l.b16 %v3530
    %v3596 = vpack.c.b16 %v3565, %v3564
    %v3597 = vpack.c.b16 %v3567, %v3566
    %v3598 = vpack.c.b16 %v3569, %v3568
    %v3599 = vpack.c.b16 %v3571, %v3570
    %v3600 = vpack.c.b16 %v3573, %v3572
    %v3601 = vpack.c.b16 %v3575, %v3574
    %v3602 = vpack.c.b16 %v3577, %v3576
    %v3603 = vpack.c.b16 %v3579, %v3578
    %v3604 = vpack.c.b16 %v3581, %v3580
    %v3605 = vpack.c.b16 %v3583, %v3582
    %v3606 = vpack.c.b16 %v3585, %v3584
    %v3607 = vpack.c.b16 %v3587, %v3586
    %v3608 = vpack.c.b16 %v3589, %v3588
    %v3609 = vpack.c.b16 %v3591, %v3590
    %v3610 = vpack.c.b16 %v3593, %v3592
    %v3611 = vpack.c.b16 %v3595, %v3594
    %3628 = vmatprep.subr.bf16.mxu0 0
    %3629 = vmatpush1.bf16.msra.mxu0 %v3603
    %3630 = vmatprep.subr.bf16.mxu0 0
    %3631 = vmatpush1.bf16.msra.mxu0 %v3602
    %3632 = vmatprep.subr.bf16.mxu0 0
    %3633 = vmatpush1.bf16.msra.mxu0 %v3601
    %3634 = vmatprep.subr.bf16.mxu0 0
    %3635 = vmatpush1.bf16.msra.mxu0 %v3600
    %3636 = vmatprep.subr.bf16.mxu0 0
    %3637 = vmatpush1.bf16.msra.mxu0 %v3599
    %3638 = vmatprep.subr.bf16.mxu0 0
    %3639 = vmatpush1.bf16.msra.mxu0 %v3598
    %3640 = vmatprep.subr.bf16.mxu0 0
    %3641 = vmatpush1.bf16.msra.mxu0 %v3597
    %3642 = vmatprep.subr.bf16.mxu0 0
    %3643 = vmatpush1.bf16.msra.mxu0 %v3596
    %3644 = vmatprep.subr.bf16.mxu0 0
    %3645 = vmatpush2.bf16.msra.mxu0 %v3611
    %3646 = vmatprep.subr.bf16.mxu0 0
    %3647 = vmatpush2.bf16.msra.mxu0 %v3610
    %3648 = vmatprep.subr.bf16.mxu0 0
    %3649 = vmatpush2.bf16.msra.mxu0 %v3609
    %3650 = vmatprep.subr.bf16.mxu0 0
    %3651 = vmatpush2.bf16.msra.mxu0 %v3608
    %3652 = vmatprep.subr.bf16.mxu0 0
    %3653 = vmatpush2.bf16.msra.mxu0 %v3607
    %3654 = vmatprep.subr.bf16.mxu0 0
    %3655 = vmatpush2.bf16.msra.mxu0 %v3606
    %3656 = vmatprep.subr.bf16.mxu0 0
    %3657 = vmatpush2.bf16.msra.mxu0 %v3605
    %3658 = vmatprep.subr.bf16.mxu0 0
    %3659 = vmatpush2.bf16.msra.mxu0 %v3604
    %3660 = vmatprep.mubr.bf16.mxu0 %v3498
    %3661 = vmatmul.mubr.bf16.gmra.mxu0 %v3497
    %v3662 = vpop.f32.mrf.mxu0
    %v3663 = vadd.f32 %v3531, %v3662
    %v3664 = vpop.f32.mrf.mxu0
    %v3665 = vpop.f32.mrf.mxu0
    %v3666 = vpop.f32.mrf.mxu0
    %3667 = vdwg.mxu0
    %v3668 = vmax.f32 %v3663, 0.0
    %v3669 = vpack.c.bf16 %v3668, %v3668
    %v3670 = vld [vmem:[#allocation5 + $0x140] sm:$0xf]
    %v3671 = vld [vmem:[#allocation5 + $0x144] sm:$0xf]
    %v3672 = vld [vmem:[#allocation5 + $0x148] sm:$0xf]
    %v3673 = vld [vmem:[#allocation5 + $0x14c] sm:$0xf]
    %v3674 = vld [vmem:[#allocation5 + $0x150] sm:$0xf]
    %v3675 = vld [vmem:[#allocation5 + $0x154] sm:$0xf]
    %v3676 = vld [vmem:[#allocation5 + $0x158] sm:$0xf]
    %v3677 = vld [vmem:[#allocation5 + $0x15c] sm:$0xf]
    %v3678 = vld [vmem:[#allocation5 + $0x160] sm:$0xf]
    %v3679 = vld [vmem:[#allocation5 + $0x164] sm:$0xf]
    %v3680 = vld [vmem:[#allocation5 + $0x168] sm:$0xf]
    %v3681 = vld [vmem:[#allocation5 + $0x16c] sm:$0xf]
    %v3682 = vld [vmem:[#allocation5 + $0x170] sm:$0xf]
    %v3683 = vld [vmem:[#allocation5 + $0x174] sm:$0xf]
    %v3684 = vld [vmem:[#allocation5 + $0x178] sm:$0xf]
    %v3685 = vld [vmem:[#allocation5 + $0x17c] sm:$0xf]
    %v3686 = vld [vmem:[#allocation10 + $0x29] ss:$0 sm:$0xff]
    %v3703 = vunpack.c.l.b16 %v3670
    %v3704 = vunpack.c.l.b16 %v3671
    %v3705 = vunpack.c.l.b16 %v3672
    %v3706 = vunpack.c.l.b16 %v3673
    %v3707 = vunpack.c.l.b16 %v3674
    %v3708 = vunpack.c.l.b16 %v3675
    %v3709 = vunpack.c.l.b16 %v3676
    %v3710 = vunpack.c.l.b16 %v3677
    %v3711 = vunpack.c.l.b16 %v3678
    %v3712 = vunpack.c.l.b16 %v3679
    %v3713 = vunpack.c.l.b16 %v3680
    %v3714 = vunpack.c.l.b16 %v3681
    %v3715 = vunpack.c.l.b16 %v3682
    %v3716 = vunpack.c.l.b16 %v3683
    %v3717 = vunpack.c.l.b16 %v3684
    %v3718 = vunpack.c.l.b16 %v3685
    %v3719 = vpack.c.b16 %v3704, %v3703
    %v3720 = vpack.c.b16 %v3706, %v3705
    %v3721 = vpack.c.b16 %v3708, %v3707
    %v3722 = vpack.c.b16 %v3710, %v3709
    %v3723 = vpack.c.b16 %v3712, %v3711
    %v3724 = vpack.c.b16 %v3714, %v3713
    %v3725 = vpack.c.b16 %v3716, %v3715
    %v3726 = vpack.c.b16 %v3718, %v3717
    %3735 = vmatprep.subr.bf16.mxu0 0
    %3736 = vmatpush1.bf16.msra.mxu0 %v3726
    %3737 = vmatprep.subr.bf16.mxu0 0
    %3738 = vmatpush1.bf16.msra.mxu0 %v3725
    %3739 = vmatprep.subr.bf16.mxu0 0
    %3740 = vmatpush1.bf16.msra.mxu0 %v3724
    %3741 = vmatprep.subr.bf16.mxu0 0
    %3742 = vmatpush1.bf16.msra.mxu0 %v3723
    %3743 = vmatprep.subr.bf16.mxu0 0
    %3744 = vmatpush1.bf16.msra.mxu0 %v3722
    %3745 = vmatprep.subr.bf16.mxu0 0
    %3746 = vmatpush1.bf16.msra.mxu0 %v3721
    %3747 = vmatprep.subr.bf16.mxu0 0
    %3748 = vmatpush1.bf16.msra.mxu0 %v3720
    %3749 = vmatprep.subr.bf16.mxu0 0
    %3750 = vmatpush1.bf16.msra.mxu0 %v3719
    %3751 = vmatprep.subr.bf16.mxu0 0
    %3752 = vmatpush2.bf16.msra.mxu0 0
    %3753 = vmatprep.subr.bf16.mxu0 0
    %3754 = vmatpush2.bf16.msra.mxu0 0
    %3755 = vmatprep.subr.bf16.mxu0 0
    %3756 = vmatpush2.bf16.msra.mxu0 0
    %3757 = vmatprep.subr.bf16.mxu0 0
    %3758 = vmatpush2.bf16.msra.mxu0 0
    %3759 = vmatprep.subr.bf16.mxu0 0
    %3760 = vmatpush2.bf16.msra.mxu0 0
    %3761 = vmatprep.subr.bf16.mxu0 0
    %3762 = vmatpush2.bf16.msra.mxu0 0
    %3763 = vmatprep.subr.bf16.mxu0 0
    %3764 = vmatpush2.bf16.msra.mxu0 0
    %3765 = vmatprep.subr.bf16.mxu0 0
    %3766 = vmatpush2.bf16.msra.mxu0 0
    %3767 = vmatprep.mubr.bf16.mxu0 0
    %3768 = vmatmul.mubr.bf16.gmra.mxu0 %v3669
    %v3769 = vpop.f32.mrf.mxu0
    %v3770 = vadd.f32 %v3686, %v3769
    %v3771 = vpop.f32.mrf.mxu0
    %v3772 = vpop.f32.mrf.mxu0
    %v3773 = vpop.f32.mrf.mxu0
    %3774 = vdwg.mxu0
    %v3775 = vmax.f32 %v3770, 0.0
    %v3776 = vpack.c.bf16 %v3775, %v3775
    %v3777 = vld [vmem:[#allocation5 + $0x180] sm:$0xf]
    %v3778 = vld [vmem:[#allocation5 + $0x184] sm:$0xf]
    %v3779 = vld [vmem:[#allocation5 + $0x188] sm:$0xf]
    %v3780 = vld [vmem:[#allocation5 + $0x18c] sm:$0xf]
    %v3781 = vld [vmem:[#allocation5 + $0x190] sm:$0xf]
    %v3782 = vld [vmem:[#allocation5 + $0x194] sm:$0xf]
    %v3783 = vld [vmem:[#allocation5 + $0x198] sm:$0xf]
    %v3784 = vld [vmem:[#allocation5 + $0x19c] sm:$0xf]
    %v3785 = vld [vmem:[#allocation5 + $0x1a0] sm:$0xf]
    %v3786 = vld [vmem:[#allocation5 + $0x1a4] sm:$0xf]
    %v3787 = vld [vmem:[#allocation5 + $0x1a8] sm:$0xf]
    %v3788 = vld [vmem:[#allocation5 + $0x1ac] sm:$0xf]
    %v3789 = vld [vmem:[#allocation5 + $0x1b0] sm:$0xf]
    %v3790 = vld [vmem:[#allocation5 + $0x1b4] sm:$0xf]
    %v3791 = vld [vmem:[#allocation5 + $0x1b8] sm:$0xf]
    %v3792 = vld [vmem:[#allocation5 + $0x1bc] sm:$0xf]
    %v3793 = vld [vmem:[#allocation10 + $0x2a] ss:$0 sm:$0xff]
    %v3810 = vunpack.c.l.b16 %v3777
    %v3811 = vunpack.c.l.b16 %v3778
    %v3812 = vunpack.c.l.b16 %v3779
    %v3813 = vunpack.c.l.b16 %v3780
    %v3814 = vunpack.c.l.b16 %v3781
    %v3815 = vunpack.c.l.b16 %v3782
    %v3816 = vunpack.c.l.b16 %v3783
    %v3817 = vunpack.c.l.b16 %v3784
    %v3818 = vunpack.c.l.b16 %v3785
    %v3819 = vunpack.c.l.b16 %v3786
    %v3820 = vunpack.c.l.b16 %v3787
    %v3821 = vunpack.c.l.b16 %v3788
    %v3822 = vunpack.c.l.b16 %v3789
    %v3823 = vunpack.c.l.b16 %v3790
    %v3824 = vunpack.c.l.b16 %v3791
    %v3825 = vunpack.c.l.b16 %v3792
    %v3826 = vpack.c.b16 %v3811, %v3810
    %v3827 = vpack.c.b16 %v3813, %v3812
    %v3828 = vpack.c.b16 %v3815, %v3814
    %v3829 = vpack.c.b16 %v3817, %v3816
    %v3830 = vpack.c.b16 %v3819, %v3818
    %v3831 = vpack.c.b16 %v3821, %v3820
    %v3832 = vpack.c.b16 %v3823, %v3822
    %v3833 = vpack.c.b16 %v3825, %v3824
    %3842 = vmatprep.subr.bf16.mxu0 0
    %3843 = vmatpush1.bf16.msra.mxu0 %v3833
    %3844 = vmatprep.subr.bf16.mxu0 0
    %3845 = vmatpush1.bf16.msra.mxu0 %v3832
    %3846 = vmatprep.subr.bf16.mxu0 0
    %3847 = vmatpush1.bf16.msra.mxu0 %v3831
    %3848 = vmatprep.subr.bf16.mxu0 0
    %3849 = vmatpush1.bf16.msra.mxu0 %v3830
    %3850 = vmatprep.subr.bf16.mxu0 0
    %3851 = vmatpush1.bf16.msra.mxu0 %v3829
    %3852 = vmatprep.subr.bf16.mxu0 0
    %3853 = vmatpush1.bf16.msra.mxu0 %v3828
    %3854 = vmatprep.subr.bf16.mxu0 0
    %3855 = vmatpush1.bf16.msra.mxu0 %v3827
    %3856 = vmatprep.subr.bf16.mxu0 0
    %3857 = vmatpush1.bf16.msra.mxu0 %v3826
    %3858 = vmatprep.subr.bf16.mxu0 0
    %3859 = vmatpush2.bf16.msra.mxu0 0
    %3860 = vmatprep.subr.bf16.mxu0 0
    %3861 = vmatpush2.bf16.msra.mxu0 0
    %3862 = vmatprep.subr.bf16.mxu0 0
    %3863 = vmatpush2.bf16.msra.mxu0 0
    %3864 = vmatprep.subr.bf16.mxu0 0
    %3865 = vmatpush2.bf16.msra.mxu0 0
    %3866 = vmatprep.subr.bf16.mxu0 0
    %3867 = vmatpush2.bf16.msra.mxu0 0
    %3868 = vmatprep.subr.bf16.mxu0 0
    %3869 = vmatpush2.bf16.msra.mxu0 0
    %3870 = vmatprep.subr.bf16.mxu0 0
    %3871 = vmatpush2.bf16.msra.mxu0 0
    %3872 = vmatprep.subr.bf16.mxu0 0
    %3873 = vmatpush2.bf16.msra.mxu0 0
    %3874 = vmatprep.mubr.bf16.mxu0 0
    %3875 = vmatmul.mubr.bf16.gmra.mxu0 %v3776
    %v3876 = vpop.f32.mrf.mxu0
    %v3877 = vadd.f32 %v3793, %v3876
    %v3878 = vpop.f32.mrf.mxu0
    %v3879 = vpop.f32.mrf.mxu0
    %v3880 = vpop.f32.mrf.mxu0
    %3881 = vdwg.mxu0
    %v3882 = vmax.f32 %v3877, 0.0
    %v3883 = vpack.c.bf16 %v3882, %v3882
    %v3884 = vld [vmem:[#allocation5 + $0x1c0] sm:$0xf]
    %v3885 = vld [vmem:[#allocation5 + $0x1c4] sm:$0xf]
    %v3886 = vld [vmem:[#allocation5 + $0x1c8] sm:$0xf]
    %v3887 = vld [vmem:[#allocation5 + $0x1cc] sm:$0xf]
    %v3888 = vld [vmem:[#allocation5 + $0x1d0] sm:$0xf]
    %v3889 = vld [vmem:[#allocation5 + $0x1d4] sm:$0xf]
    %v3890 = vld [vmem:[#allocation5 + $0x1d8] sm:$0xf]
    %v3891 = vld [vmem:[#allocation5 + $0x1dc] sm:$0xf]
    %v3892 = vld [vmem:[#allocation5 + $0x1e0] sm:$0xf]
    %v3893 = vld [vmem:[#allocation5 + $0x1e4] sm:$0xf]
    %v3894 = vld [vmem:[#allocation5 + $0x1e8] sm:$0xf]
    %v3895 = vld [vmem:[#allocation5 + $0x1ec] sm:$0xf]
    %v3896 = vld [vmem:[#allocation5 + $0x1f0] sm:$0xf]
    %v3897 = vld [vmem:[#allocation5 + $0x1f4] sm:$0xf]
    %v3898 = vld [vmem:[#allocation5 + $0x1f8] sm:$0xf]
    %v3899 = vld [vmem:[#allocation5 + $0x1fc] sm:$0xf]
    %v3900 = vld [vmem:[#allocation10 + $0x2b] ss:$0 sm:$0xff]
    %v3917 = vunpack.c.l.b16 %v3884
    %v3918 = vunpack.c.l.b16 %v3885
    %v3919 = vunpack.c.l.b16 %v3886
    %v3920 = vunpack.c.l.b16 %v3887
    %v3921 = vunpack.c.l.b16 %v3888
    %v3922 = vunpack.c.l.b16 %v3889
    %v3923 = vunpack.c.l.b16 %v3890
    %v3924 = vunpack.c.l.b16 %v3891
    %v3925 = vunpack.c.l.b16 %v3892
    %v3926 = vunpack.c.l.b16 %v3893
    %v3927 = vunpack.c.l.b16 %v3894
    %v3928 = vunpack.c.l.b16 %v3895
    %v3929 = vunpack.c.l.b16 %v3896
    %v3930 = vunpack.c.l.b16 %v3897
    %v3931 = vunpack.c.l.b16 %v3898
    %v3932 = vunpack.c.l.b16 %v3899
    %v3933 = vpack.c.b16 %v3918, %v3917
    %v3934 = vpack.c.b16 %v3920, %v3919
    %v3935 = vpack.c.b16 %v3922, %v3921
    %v3936 = vpack.c.b16 %v3924, %v3923
    %v3937 = vpack.c.b16 %v3926, %v3925
    %v3938 = vpack.c.b16 %v3928, %v3927
    %v3939 = vpack.c.b16 %v3930, %v3929
    %v3940 = vpack.c.b16 %v3932, %v3931
    %3949 = vmatprep.subr.bf16.mxu0 0
    %3950 = vmatpush1.bf16.msra.mxu0 %v3940
    %3951 = vmatprep.subr.bf16.mxu0 0
    %3952 = vmatpush1.bf16.msra.mxu0 %v3939
    %3953 = vmatprep.subr.bf16.mxu0 0
    %3954 = vmatpush1.bf16.msra.mxu0 %v3938
    %3955 = vmatprep.subr.bf16.mxu0 0
    %3956 = vmatpush1.bf16.msra.mxu0 %v3937
    %3957 = vmatprep.subr.bf16.mxu0 0
    %3958 = vmatpush1.bf16.msra.mxu0 %v3936
    %3959 = vmatprep.subr.bf16.mxu0 0
    %3960 = vmatpush1.bf16.msra.mxu0 %v3935
    %3961 = vmatprep.subr.bf16.mxu0 0
    %3962 = vmatpush1.bf16.msra.mxu0 %v3934
    %3963 = vmatprep.subr.bf16.mxu0 0
    %3964 = vmatpush1.bf16.msra.mxu0 %v3933
    %3965 = vmatprep.subr.bf16.mxu0 0
    %3966 = vmatpush2.bf16.msra.mxu0 0
    %3967 = vmatprep.subr.bf16.mxu0 0
    %3968 = vmatpush2.bf16.msra.mxu0 0
    %3969 = vmatprep.subr.bf16.mxu0 0
    %3970 = vmatpush2.bf16.msra.mxu0 0
    %3971 = vmatprep.subr.bf16.mxu0 0
    %3972 = vmatpush2.bf16.msra.mxu0 0
    %3973 = vmatprep.subr.bf16.mxu0 0
    %3974 = vmatpush2.bf16.msra.mxu0 0
    %3975 = vmatprep.subr.bf16.mxu0 0
    %3976 = vmatpush2.bf16.msra.mxu0 0
    %3977 = vmatprep.subr.bf16.mxu0 0
    %3978 = vmatpush2.bf16.msra.mxu0 0
    %3979 = vmatprep.subr.bf16.mxu0 0
    %3980 = vmatpush2.bf16.msra.mxu0 0
    %3981 = vmatprep.mubr.bf16.mxu0 0
    %3982 = vmatmul.mubr.bf16.gmra.mxu0 %v3883
    %v3983 = vpop.f32.mrf.mxu0
    %v3984 = vadd.f32 %v3900, %v3983
    %v3985 = vpop.f32.mrf.mxu0
    %v3986 = vpop.f32.mrf.mxu0
    %v3987 = vpop.f32.mrf.mxu0
    %3988 = vdwg.mxu0
    %v3989 = vmax.f32 %v3984, 0.0
    %v3990 = vpack.c.bf16 %v3989, %v3989
    %v3991 = vld [vmem:[#allocation5 + $0x200] sm:$0xf]
    %v3992 = vld [vmem:[#allocation5 + $0x204] sm:$0xf]
    %v3993 = vld [vmem:[#allocation5 + $0x208] sm:$0xf]
    %v3994 = vld [vmem:[#allocation5 + $0x20c] sm:$0xf]
    %v3995 = vld [vmem:[#allocation5 + $0x210] sm:$0xf]
    %v3996 = vld [vmem:[#allocation5 + $0x214] sm:$0xf]
    %v3997 = vld [vmem:[#allocation5 + $0x218] sm:$0xf]
    %v3998 = vld [vmem:[#allocation5 + $0x21c] sm:$0xf]
    %v3999 = vld [vmem:[#allocation5 + $0x220] sm:$0xf]
    %v4000 = vld [vmem:[#allocation5 + $0x224] sm:$0xf]
    %v4001 = vld [vmem:[#allocation5 + $0x228] sm:$0xf]
    %v4002 = vld [vmem:[#allocation5 + $0x22c] sm:$0xf]
    %v4003 = vld [vmem:[#allocation5 + $0x230] sm:$0xf]
    %v4004 = vld [vmem:[#allocation5 + $0x234] sm:$0xf]
    %v4005 = vld [vmem:[#allocation5 + $0x238] sm:$0xf]
    %v4006 = vld [vmem:[#allocation5 + $0x23c] sm:$0xf]
    %v4007 = vld [vmem:[#allocation10 + $0x2c] ss:$0 sm:$0xff]
    %v4024 = vunpack.c.l.b16 %v3991
    %v4025 = vunpack.c.l.b16 %v3992
    %v4026 = vunpack.c.l.b16 %v3993
    %v4027 = vunpack.c.l.b16 %v3994
    %v4028 = vunpack.c.l.b16 %v3995
    %v4029 = vunpack.c.l.b16 %v3996
    %v4030 = vunpack.c.l.b16 %v3997
    %v4031 = vunpack.c.l.b16 %v3998
    %v4032 = vunpack.c.l.b16 %v3999
    %v4033 = vunpack.c.l.b16 %v4000
    %v4034 = vunpack.c.l.b16 %v4001
    %v4035 = vunpack.c.l.b16 %v4002
    %v4036 = vunpack.c.l.b16 %v4003
    %v4037 = vunpack.c.l.b16 %v4004
    %v4038 = vunpack.c.l.b16 %v4005
    %v4039 = vunpack.c.l.b16 %v4006
    %v4040 = vpack.c.b16 %v4025, %v4024
    %v4041 = vpack.c.b16 %v4027, %v4026
    %v4042 = vpack.c.b16 %v4029, %v4028
    %v4043 = vpack.c.b16 %v4031, %v4030
    %v4044 = vpack.c.b16 %v4033, %v4032
    %v4045 = vpack.c.b16 %v4035, %v4034
    %v4046 = vpack.c.b16 %v4037, %v4036
    %v4047 = vpack.c.b16 %v4039, %v4038
    %4056 = vmatprep.subr.bf16.mxu0 0
    %4057 = vmatpush1.bf16.msra.mxu0 %v4047
    %4058 = vmatprep.subr.bf16.mxu0 0
    %4059 = vmatpush1.bf16.msra.mxu0 %v4046
    %4060 = vmatprep.subr.bf16.mxu0 0
    %4061 = vmatpush1.bf16.msra.mxu0 %v4045
    %4062 = vmatprep.subr.bf16.mxu0 0
    %4063 = vmatpush1.bf16.msra.mxu0 %v4044
    %4064 = vmatprep.subr.bf16.mxu0 0
    %4065 = vmatpush1.bf16.msra.mxu0 %v4043
    %4066 = vmatprep.subr.bf16.mxu0 0
    %4067 = vmatpush1.bf16.msra.mxu0 %v4042
    %4068 = vmatprep.subr.bf16.mxu0 0
    %4069 = vmatpush1.bf16.msra.mxu0 %v4041
    %4070 = vmatprep.subr.bf16.mxu0 0
    %4071 = vmatpush1.bf16.msra.mxu0 %v4040
    %4072 = vmatprep.subr.bf16.mxu0 0
    %4073 = vmatpush2.bf16.msra.mxu0 0
    %4074 = vmatprep.subr.bf16.mxu0 0
    %4075 = vmatpush2.bf16.msra.mxu0 0
    %4076 = vmatprep.subr.bf16.mxu0 0
    %4077 = vmatpush2.bf16.msra.mxu0 0
    %4078 = vmatprep.subr.bf16.mxu0 0
    %4079 = vmatpush2.bf16.msra.mxu0 0
    %4080 = vmatprep.subr.bf16.mxu0 0
    %4081 = vmatpush2.bf16.msra.mxu0 0
    %4082 = vmatprep.subr.bf16.mxu0 0
    %4083 = vmatpush2.bf16.msra.mxu0 0
    %4084 = vmatprep.subr.bf16.mxu0 0
    %4085 = vmatpush2.bf16.msra.mxu0 0
    %4086 = vmatprep.subr.bf16.mxu0 0
    %4087 = vmatpush2.bf16.msra.mxu0 0
    %4088 = vmatprep.mubr.bf16.mxu0 0
    %4089 = vmatmul.mubr.bf16.gmra.mxu0 %v3990
    %v4090 = vpop.f32.mrf.mxu0
    %v4091 = vadd.f32 %v4007, %v4090
    %v4092 = vpop.f32.mrf.mxu0
    %v4093 = vpop.f32.mrf.mxu0
    %v4094 = vpop.f32.mrf.mxu0
    %4095 = vdwg.mxu0
    %v4096 = vmax.f32 %v4091, 0.0
    %v4097 = vpack.c.bf16 %v4096, %v4096
    %v4098 = vld [vmem:[#allocation5 + $0x240] sm:$0xf]
    %v4099 = vld [vmem:[#allocation5 + $0x244] sm:$0xf]
    %v4100 = vld [vmem:[#allocation5 + $0x248] sm:$0xf]
    %v4101 = vld [vmem:[#allocation5 + $0x24c] sm:$0xf]
    %v4102 = vld [vmem:[#allocation5 + $0x250] sm:$0xf]
    %v4103 = vld [vmem:[#allocation5 + $0x254] sm:$0xf]
    %v4104 = vld [vmem:[#allocation5 + $0x258] sm:$0xf]
    %v4105 = vld [vmem:[#allocation5 + $0x25c] sm:$0xf]
    %v4106 = vld [vmem:[#allocation5 + $0x260] sm:$0xf]
    %v4107 = vld [vmem:[#allocation5 + $0x264] sm:$0xf]
    %v4108 = vld [vmem:[#allocation5 + $0x268] sm:$0xf]
    %v4109 = vld [vmem:[#allocation5 + $0x26c] sm:$0xf]
    %v4110 = vld [vmem:[#allocation5 + $0x270] sm:$0xf]
    %v4111 = vld [vmem:[#allocation5 + $0x274] sm:$0xf]
    %v4112 = vld [vmem:[#allocation5 + $0x278] sm:$0xf]
    %v4113 = vld [vmem:[#allocation5 + $0x27c] sm:$0xf]
    %v4114 = vld [vmem:[#allocation10 + $0x2d] ss:$0 sm:$0xff]
    %v4131 = vunpack.c.l.b16 %v4098
    %v4132 = vunpack.c.l.b16 %v4099
    %v4133 = vunpack.c.l.b16 %v4100
    %v4134 = vunpack.c.l.b16 %v4101
    %v4135 = vunpack.c.l.b16 %v4102
    %v4136 = vunpack.c.l.b16 %v4103
    %v4137 = vunpack.c.l.b16 %v4104
    %v4138 = vunpack.c.l.b16 %v4105
    %v4139 = vunpack.c.l.b16 %v4106
    %v4140 = vunpack.c.l.b16 %v4107
    %v4141 = vunpack.c.l.b16 %v4108
    %v4142 = vunpack.c.l.b16 %v4109
    %v4143 = vunpack.c.l.b16 %v4110
    %v4144 = vunpack.c.l.b16 %v4111
    %v4145 = vunpack.c.l.b16 %v4112
    %v4146 = vunpack.c.l.b16 %v4113
    %v4147 = vpack.c.b16 %v4132, %v4131
    %v4148 = vpack.c.b16 %v4134, %v4133
    %v4149 = vpack.c.b16 %v4136, %v4135
    %v4150 = vpack.c.b16 %v4138, %v4137
    %v4151 = vpack.c.b16 %v4140, %v4139
    %v4152 = vpack.c.b16 %v4142, %v4141
    %v4153 = vpack.c.b16 %v4144, %v4143
    %v4154 = vpack.c.b16 %v4146, %v4145
    %4163 = vmatprep.subr.bf16.mxu0 0
    %4164 = vmatpush1.bf16.msra.mxu0 %v4154
    %4165 = vmatprep.subr.bf16.mxu0 0
    %4166 = vmatpush1.bf16.msra.mxu0 %v4153
    %4167 = vmatprep.subr.bf16.mxu0 0
    %4168 = vmatpush1.bf16.msra.mxu0 %v4152
    %4169 = vmatprep.subr.bf16.mxu0 0
    %4170 = vmatpush1.bf16.msra.mxu0 %v4151
    %4171 = vmatprep.subr.bf16.mxu0 0
    %4172 = vmatpush1.bf16.msra.mxu0 %v4150
    %4173 = vmatprep.subr.bf16.mxu0 0
    %4174 = vmatpush1.bf16.msra.mxu0 %v4149
    %4175 = vmatprep.subr.bf16.mxu0 0
    %4176 = vmatpush1.bf16.msra.mxu0 %v4148
    %4177 = vmatprep.subr.bf16.mxu0 0
    %4178 = vmatpush1.bf16.msra.mxu0 %v4147
    %4179 = vmatprep.subr.bf16.mxu0 0
    %4180 = vmatpush2.bf16.msra.mxu0 0
    %4181 = vmatprep.subr.bf16.mxu0 0
    %4182 = vmatpush2.bf16.msra.mxu0 0
    %4183 = vmatprep.subr.bf16.mxu0 0
    %4184 = vmatpush2.bf16.msra.mxu0 0
    %4185 = vmatprep.subr.bf16.mxu0 0
    %4186 = vmatpush2.bf16.msra.mxu0 0
    %4187 = vmatprep.subr.bf16.mxu0 0
    %4188 = vmatpush2.bf16.msra.mxu0 0
    %4189 = vmatprep.subr.bf16.mxu0 0
    %4190 = vmatpush2.bf16.msra.mxu0 0
    %4191 = vmatprep.subr.bf16.mxu0 0
    %4192 = vmatpush2.bf16.msra.mxu0 0
    %4193 = vmatprep.subr.bf16.mxu0 0
    %4194 = vmatpush2.bf16.msra.mxu0 0
    %4195 = vmatprep.mubr.bf16.mxu0 0
    %4196 = vmatmul.mubr.bf16.gmra.mxu0 %v4097
    %v4197 = vpop.f32.mrf.mxu0
    %v4198 = vadd.f32 %v4114, %v4197
    %v4199 = vpop.f32.mrf.mxu0
    %v4200 = vpop.f32.mrf.mxu0
    %v4201 = vpop.f32.mrf.mxu0
    %4202 = vdwg.mxu0
    %vm4203 = vcmask 7168
    %4204 = vst.msk [vmem:[%s5] sm:$0xff] %vm4203, %v4198
    // Predicated region
    $region42: #{tpu_custom_call.1} parent=1 // pred_check
      _
    $region43: #{tpu_custom_call.1} parent=1 // pred_check_branch
      %4206 = sbr.rel (0) target = $region45
    $region44: #{tpu_custom_call.1} parent=1 // pred_region
      _
    $region45: #{tpu_custom_call.1} parent=1 // pred_fallthru
      _
    // Predicated region
    $region46: #{tpu_custom_call.1} parent=1 // pred_check
      _
    $region47: #{tpu_custom_call.1} parent=1 // pred_check_branch
      %4208 = sbr.rel (0) target = $region49
    $region48: #{tpu_custom_call.1} parent=1 // pred_region
      _
    $region49: #{tpu_custom_call.1} parent=1 // pred_fallthru
      _
    %4209 = vsyncpa [#allocation4], 1
    %4210 = vsyncpa [#allocation6], 1
    %4211 = vsyncpa [#allocation9], 1

</llo_original>
